<compile_context>
chip_gen: v7x
topology: tpu7x:2x2x1
jax: 0.10.0
libtpu: 0.0.40
codegen_flags: <defaults>
</compile_context>

<pallas_src>
import jax
import jax.numpy as jnp
from jax.experimental import pallas as pl
from jax.experimental.pallas import tpu as pltpu


# -----------------------------------------------------------------------------
# Fused kernel: extractor stand-ins + full mode==7 classifier head.
#   a/m/v_feat = relu(x @ W + b)                 (B, 256) each (lanes 250: = 0)
#   f_pad      = [a | m | v]                     (B, 768)  [out, lane-dense]
#   h1 = relu(a@W1a + m@W1b + v@W1c + b1)        (B, 512)  [out f1]
#   u  = ue_pad @ Wu_pad                         (B, 512)  (bias folded into b2)
#   h2 = relu(h1 @ W2[:512] + u @ W2[512:] + b2) (B, 64)
#   p  = sigmoid(sum(h2 * w3_row, -1) + b3)      (B, 1)    [out]
# -----------------------------------------------------------------------------
def fused_kernel(audio_ref, meta_ref, video_ref, ue_ref,
                 w_ext_ref, b_ext_ref,
                 w1_ref, b1_ref,
                 wfu_hbm_ref,
                 w2_ref, b2_ref,
                 w3_ref, b3_ref,
                 prob_ref, f_ref, f1_ref,
                 wfu_vmem, wfu_sem):
    # Prefetch the single biggest operand (fc_user weight, ~1.25 MB bf16) so its
    # HBM->VMEM transfer overlaps the extractor / fc1 / f-store compute below.
    wfu_copy = pltpu.make_async_copy(wfu_hbm_ref, wfu_vmem, wfu_sem)
    wfu_copy.start()

    # ---- extractor stand-ins (each 256 lanes wide; pad lanes are exactly 0) ----
    a_feat = jnp.maximum(
        jnp.dot(audio_ref[...], w_ext_ref[0:32, :],
                preferred_element_type=jnp.float32) + b_ext_ref[:, 0:256], 0.0)
    m_feat = jnp.maximum(
        jnp.dot(meta_ref[...], w_ext_ref[32:48, :],
                preferred_element_type=jnp.float32) + b_ext_ref[:, 256:512], 0.0)
    v_feat = jnp.maximum(
        jnp.dot(video_ref[...], w_ext_ref[48:72, :],
                preferred_element_type=jnp.float32) + b_ext_ref[:, 512:768], 0.0)

    # f (lane-dense, 256-aligned segment bases -> unmasked full-width stores).
    f_ref[:, 0:256] = a_feat
    f_ref[:, 256:512] = m_feat
    f_ref[:, 512:768] = v_feat

    # ---- fc1 + relu; the (B,750) concat is folded into a row-split padded
    # weight, so no lane rotations / repacks are needed. bf16 MXU operands,
    # f32 accumulation and elementwise. ----
    h1 = (jnp.dot(a_feat.astype(jnp.bfloat16), w1_ref[0:256, :],
                  preferred_element_type=jnp.float32)
          + jnp.dot(m_feat.astype(jnp.bfloat16), w1_ref[256:512, :],
                    preferred_element_type=jnp.float32)
          + jnp.dot(v_feat.astype(jnp.bfloat16), w1_ref[512:768, :],
                    preferred_element_type=jnp.float32)
          + b1_ref[...])
    h1 = jnp.maximum(h1, 0.0)
    f1_ref[...] = h1

    # ---- fc_user (bias folded into b_fc2 on the host; no activation) ----
    wfu_copy.wait()
    u = jnp.dot(ue_ref[...], wfu_vmem[...], preferred_element_type=jnp.float32)

    # ---- fc2 over concat([h1, u]) folded as h1 @ W2[:512] + u @ W2[512:] ----
    h2 = (jnp.dot(h1.astype(jnp.bfloat16), w2_ref[0:512, :],
                  preferred_element_type=jnp.float32)
          + jnp.dot(u.astype(jnp.bfloat16), w2_ref[512:1024, :],
                    preferred_element_type=jnp.float32)
          + b2_ref[...])
    h2 = jnp.maximum(h2, 0.0)

    # ---- fc3 + sigmoid: VPU multiply + lane reduce (no N=1 MXU pass) ----
    logit = jnp.sum(h2 * w3_ref[...], axis=-1, keepdims=True) + b3_ref[0, 0]
    prob_ref[...] = jax.nn.sigmoid(logit)


def soundlenet5_forward_mode7(label, user_embedding, audio, meta, video, params):
    """Mirrors SoundLenet5New.forward(..., mode=7). Returns (x, f, f1, f)."""
    del label  # unused in the forward pass
    B = audio.shape[0]
    ue = user_embedding.reshape(user_embedding.shape[0], -1)            # (B, 1220)
    # Pad K to a tile-aligned 1280 and pre-cast to bf16 (halves ue DMA bytes;
    # the pad columns hit zero weight rows so the result is unchanged).
    ue_pad = jnp.pad(ue, ((0, 0), (0, 1280 - ue.shape[1]))).astype(jnp.bfloat16)

    vmem = pl.BlockSpec(memory_space=pltpu.MemorySpace.VMEM)
    smem = pl.BlockSpec(memory_space=pltpu.MemorySpace.SMEM)
    hbm = pl.BlockSpec(memory_space=pl.ANY)      # manual DMA inside the kernel

    ins = (
        audio, meta, video, ue_pad,
        params["w_ext"], params["b_ext"],
        params["w_fc1"], params["b_fc1"],
        params["w_fc_user"],
        params["w_fc2"], params["b_fc2"],
        params["w_fc3_row"], params["b_fc3"],
    )
    in_specs = [vmem, vmem, vmem, vmem,
                vmem, vmem,
                vmem, vmem,
                hbm,
                vmem, vmem,
                vmem, smem]

    prob, f_pad, f1 = pl.pallas_call(
        fused_kernel,
        out_shape=(
            jax.ShapeDtypeStruct((B, 1), jnp.float32),
            jax.ShapeDtypeStruct((B, 768), jnp.float32),    # lane-dense f
            jax.ShapeDtypeStruct((B, 512), jnp.float32),
        ),
        in_specs=in_specs,
        out_specs=(vmem, vmem, vmem),
        scratch_shapes=[
            pltpu.VMEM((1280, 512), jnp.bfloat16),           # fc_user weight buffer
            pltpu.SemaphoreType.DMA(()),
        ],
        compiler_params=pltpu.CompilerParams(vmem_limit_bytes=16 * 1024 * 1024),
    )(*ins)

    # Undo the per-segment lane padding to recover the module's (B, 750) `f`.
    f = jnp.concatenate(
        [f_pad[:, :250], f_pad[:, 256:506], f_pad[:, 512:762]], axis=1)
    return prob, f, f1, f


# -----------------------------------------------------------------------------
# Deterministic parameter init (PyTorch nn.Linear-style uniform bounds), with
# host-side packing / zero-padding so the kernel only sees lane/sublane-aligned
# operands. Large matmul weights stored bf16; biases stay f32.
# -----------------------------------------------------------------------------
def _uniform(key, shape, fan_in):
    bound = 1.0 / jnp.sqrt(float(fan_in))
    return jax.random.uniform(key, shape, jnp.float32, -bound, bound)


def init_params(key):
    keys = jax.random.split(key, 10)
    p = {}

    # ---- extractor stand-ins (glue; (B,250) features zero-padded to 256) ----
    def ext(k, fan_in):
        kw, kb = jax.random.split(k)
        w = jnp.pad(_uniform(kw, (fan_in, 250), fan_in), ((0, 0), (0, 6)))
        b = jnp.pad(_uniform(kb, (1, 250), fan_in), ((0, 0), (0, 6)))
        return w, b
    w_ae, b_ae = ext(keys[0], 32)
    w_me, b_me = ext(keys[1], 16)
    w_ve, b_ve = ext(keys[2], 24)
    p["w_ext"] = jnp.concatenate([w_ae, w_me, w_ve], axis=0)        # (72, 256)
    p["b_ext"] = jnp.concatenate([b_ae, b_me, b_ve], axis=1)        # (1, 768)

    # ---- fc1 (750 -> 512): row-split into 3 x 250 blocks, each padded to 256 ----
    kw1, kb1 = jax.random.split(keys[3])
    w1 = _uniform(kw1, (750, 512), 750)
    p["b_fc1"] = _uniform(kb1, (1, 512), 750)
    w1_blocks = [jnp.pad(w1[i * 250:(i + 1) * 250], ((0, 6), (0, 0)))
                 for i in range(3)]
    p["w_fc1"] = jnp.concatenate(w1_blocks, axis=0).astype(jnp.bfloat16)  # (768,512)

    # ---- fc_user (1220 -> 512): zero-pad rows to 1280; bias folded into b_fc2 ----
    kwu, kbu = jax.random.split(keys[4])
    wu = _uniform(kwu, (1220, 512), 1220)
    bu = _uniform(kbu, (1, 512), 1220)
    p["w_fc_user"] = jnp.pad(wu, ((0, 60), (0, 0))).astype(jnp.bfloat16)  # (1280,512)

    # ---- fc2 (1024 -> 64): rows 0:512 act on relu(fc1), rows 512: on fc_user ----
    kw2, kb2 = jax.random.split(keys[5])
    w2 = _uniform(kw2, (1024, 64), 1024)
    b2 = _uniform(kb2, (1, 64), 1024)
    p["w_fc2"] = w2.astype(jnp.bfloat16)                             # (1024, 64)
    p["b_fc2"] = b2 + bu @ w2[512:]      # fold fc_user bias: (ue@Wu+bu)@W2b

    # ---- fc3 (64 -> 1): row form for VPU multiply + lane reduce ----
    kw3, kb3 = jax.random.split(keys[6])
    p["w_fc3_row"] = _uniform(kw3, (64, 1), 64).reshape(1, 64)
    p["b_fc3"] = _uniform(kb3, (1, 1), 64)                           # SMEM scalar
    return p


if __name__ == "__main__":
    key = jax.random.PRNGKey(0)
    k_p, k_u, k_a, k_m, k_v, k_l = jax.random.split(key, 6)

    B = 8
    params = init_params(k_p)

    label = jax.random.randint(k_l, (B,), 0, 2)                     # unused in fwd
    user_embedding = jax.random.normal(k_u, (B, 1220), jnp.float32)
    audio = jax.random.normal(k_a, (B, 32), jnp.float32)
    meta = jax.random.normal(k_m, (B, 16), jnp.float32)
    video = jax.random.normal(k_v, (B, 24), jnp.float32)

    fwd = jax.jit(soundlenet5_forward_mode7)
    prob, f, f1, f_again = jax.block_until_ready(
        fwd(label, user_embedding, audio, meta, video, params)
    )

    assert prob.shape == (B, 1) and f.shape == (B, 750) and f1.shape == (B, 512)
    assert bool(jnp.all(jnp.isfinite(prob)))
    assert bool(jnp.all((prob >= 0.0) & (prob <= 1.0)))
    assert bool(jnp.all(f >= 0.0)) and bool(jnp.all(f1 >= 0.0))
    print("KERNEL_OK")
</pallas_src>

<mosaic_0001>
module attributes {stable_mosaic.version = 11 : i64} {
  func.func @fused_kernel(%arg0: memref<8x32xf32, #tpu.memory_space<vmem>>, %arg1: memref<8x16xf32, #tpu.memory_space<vmem>>, %arg2: memref<8x24xf32, #tpu.memory_space<vmem>>, %arg3: memref<8x1280xbf16, #tpu.memory_space<vmem>>, %arg4: memref<72x256xf32, #tpu.memory_space<vmem>>, %arg5: memref<1x768xf32, #tpu.memory_space<vmem>>, %arg6: memref<768x512xbf16, #tpu.memory_space<vmem>>, %arg7: memref<1x512xf32, #tpu.memory_space<vmem>>, %arg8: memref<1280x512xbf16, #tpu.memory_space<any>>, %arg9: memref<1024x64xbf16, #tpu.memory_space<vmem>>, %arg10: memref<1x64xf32, #tpu.memory_space<vmem>>, %arg11: memref<1x64xf32, #tpu.memory_space<vmem>>, %arg12: memref<1x1xf32, #tpu.memory_space<smem>>, %arg13: memref<8x1xf32, #tpu.memory_space<vmem>>, %arg14: memref<8x768xf32, #tpu.memory_space<vmem>>, %arg15: memref<8x512xf32, #tpu.memory_space<vmem>>, %arg16: memref<1280x512xbf16, #tpu.memory_space<vmem>>, %arg17: memref<!tpu.dma_semaphore, #tpu.memory_space<semaphore_mem>>) attributes {dimension_semantics = [], scalar_prefetch = 0 : i64, scratch_operands = 2 : i64, tpu.core_type = #tpu.core_type<tc>} {
    tpu.enqueue_dma source(%arg8 : memref<1280x512xbf16, #tpu.memory_space<any>>) target(%arg16 : memref<1280x512xbf16, #tpu.memory_space<vmem>>) target_semaphore(%arg17 : memref<!tpu.dma_semaphore, #tpu.memory_space<semaphore_mem>>)
    %c0 = arith.constant 0 : index
    %c0_0 = arith.constant 0 : index
    %0 = vector.load %arg0[%c0, %c0_0] : memref<8x32xf32, #tpu.memory_space<vmem>>, vector<8x32xf32>
    %c0_1 = arith.constant 0 : index
    %c0_2 = arith.constant 0 : index
    %1 = vector.load %arg4[%c0_1, %c0_2] : memref<72x256xf32, #tpu.memory_space<vmem>>, vector<32x256xf32>
    %cst = arith.constant dense<0.000000e+00> : vector<8x256xf32>
    %2 = tpu.matmul %0, %1, %cst {dimension_numbers = #tpu.dot_dimension_numbers<[1], [0], [0], [1], [0, 0, 1, 1], [], []>} : vector<8x32xf32>, vector<32x256xf32>, vector<8x256xf32> -> vector<8x256xf32>
    %c0_3 = arith.constant 0 : index
    %c0_4 = arith.constant 0 : index
    %3 = vector.load %arg5[%c0_3, %c0_4] : memref<1x768xf32, #tpu.memory_space<vmem>>, vector<1x256xf32>
    %4 = vector.broadcast %3 : vector<1x256xf32> to vector<8x256xf32>
    %5 = arith.addf %2, %4 : vector<8x256xf32>
    %cst_5 = arith.constant 0.000000e+00 : f32
    %6 = vector.broadcast %cst_5 : f32 to vector<8x256xf32>
    %7 = arith.maximumf %5, %6 : vector<8x256xf32>
    %c0_6 = arith.constant 0 : index
    %c0_7 = arith.constant 0 : index
    %8 = vector.load %arg1[%c0_6, %c0_7] : memref<8x16xf32, #tpu.memory_space<vmem>>, vector<8x16xf32>
    %c32 = arith.constant 32 : index
    %c0_8 = arith.constant 0 : index
    %9 = vector.load %arg4[%c32, %c0_8] : memref<72x256xf32, #tpu.memory_space<vmem>>, vector<16x256xf32>
    %cst_9 = arith.constant dense<0.000000e+00> : vector<8x256xf32>
    %10 = tpu.matmul %8, %9, %cst_9 {dimension_numbers = #tpu.dot_dimension_numbers<[1], [0], [0], [1], [0, 0, 1, 1], [], []>} : vector<8x16xf32>, vector<16x256xf32>, vector<8x256xf32> -> vector<8x256xf32>
    %c0_10 = arith.constant 0 : index
    %c256 = arith.constant 256 : index
    %11 = vector.load %arg5[%c0_10, %c256] : memref<1x768xf32, #tpu.memory_space<vmem>>, vector<1x256xf32>
    %12 = vector.broadcast %11 : vector<1x256xf32> to vector<8x256xf32>
    %13 = arith.addf %10, %12 : vector<8x256xf32>
    %cst_11 = arith.constant 0.000000e+00 : f32
    %14 = vector.broadcast %cst_11 : f32 to vector<8x256xf32>
    %15 = arith.maximumf %13, %14 : vector<8x256xf32>
    %c0_12 = arith.constant 0 : index
    %c0_13 = arith.constant 0 : index
    %16 = vector.load %arg2[%c0_12, %c0_13] : memref<8x24xf32, #tpu.memory_space<vmem>>, vector<8x24xf32>
    %c48 = arith.constant 48 : index
    %c0_14 = arith.constant 0 : index
    %17 = vector.load %arg4[%c48, %c0_14] : memref<72x256xf32, #tpu.memory_space<vmem>>, vector<24x256xf32>
    %cst_15 = arith.constant dense<0.000000e+00> : vector<8x256xf32>
    %18 = tpu.matmul %16, %17, %cst_15 {dimension_numbers = #tpu.dot_dimension_numbers<[1], [0], [0], [1], [0, 0, 1, 1], [], []>} : vector<8x24xf32>, vector<24x256xf32>, vector<8x256xf32> -> vector<8x256xf32>
    %c0_16 = arith.constant 0 : index
    %c512 = arith.constant 512 : index
    %19 = vector.load %arg5[%c0_16, %c512] : memref<1x768xf32, #tpu.memory_space<vmem>>, vector<1x256xf32>
    %20 = vector.broadcast %19 : vector<1x256xf32> to vector<8x256xf32>
    %21 = arith.addf %18, %20 : vector<8x256xf32>
    %cst_17 = arith.constant 0.000000e+00 : f32
    %22 = vector.broadcast %cst_17 : f32 to vector<8x256xf32>
    %23 = arith.maximumf %21, %22 : vector<8x256xf32>
    %c0_18 = arith.constant 0 : index
    %c0_19 = arith.constant 0 : index
    %24 = vector.load %arg14[%c0_18, %c0_19] : memref<8x768xf32, #tpu.memory_space<vmem>>, vector<8x256xf32>
    tpu.vector_store %arg14[%c0_18, %c0_19], %7 {strides = array<i32>} : memref<8x768xf32, #tpu.memory_space<vmem>>, vector<8x256xf32>,
    %c0_20 = arith.constant 0 : index
    %c256_21 = arith.constant 256 : index
    %25 = vector.load %arg14[%c0_20, %c256_21] : memref<8x768xf32, #tpu.memory_space<vmem>>, vector<8x256xf32>
    tpu.vector_store %arg14[%c0_20, %c256_21], %15 {strides = array<i32>} : memref<8x768xf32, #tpu.memory_space<vmem>>, vector<8x256xf32>,
    %c0_22 = arith.constant 0 : index
    %c512_23 = arith.constant 512 : index
    %26 = vector.load %arg14[%c0_22, %c512_23] : memref<8x768xf32, #tpu.memory_space<vmem>>, vector<8x256xf32>
    tpu.vector_store %arg14[%c0_22, %c512_23], %23 {strides = array<i32>} : memref<8x768xf32, #tpu.memory_space<vmem>>, vector<8x256xf32>,
    %27 = arith.truncf %7 : vector<8x256xf32> to vector<8x256xbf16>
    %c0_24 = arith.constant 0 : index
    %c0_25 = arith.constant 0 : index
    %28 = vector.load %arg6[%c0_24, %c0_25] : memref<768x512xbf16, #tpu.memory_space<vmem>>, vector<256x512xbf16>
    %cst_26 = arith.constant dense<0.000000e+00> : vector<8x512xf32>
    %29 = tpu.matmul %27, %28, %cst_26 {dimension_numbers = #tpu.dot_dimension_numbers<[1], [0], [0], [1], [0, 0, 1, 1], [], []>} : vector<8x256xbf16>, vector<256x512xbf16>, vector<8x512xf32> -> vector<8x512xf32>
    %30 = arith.truncf %15 : vector<8x256xf32> to vector<8x256xbf16>
    %c256_27 = arith.constant 256 : index
    %c0_28 = arith.constant 0 : index
    %31 = vector.load %arg6[%c256_27, %c0_28] : memref<768x512xbf16, #tpu.memory_space<vmem>>, vector<256x512xbf16>
    %cst_29 = arith.constant dense<0.000000e+00> : vector<8x512xf32>
    %32 = tpu.matmul %30, %31, %cst_29 {dimension_numbers = #tpu.dot_dimension_numbers<[1], [0], [0], [1], [0, 0, 1, 1], [], []>} : vector<8x256xbf16>, vector<256x512xbf16>, vector<8x512xf32> -> vector<8x512xf32>
    %33 = arith.addf %29, %32 : vector<8x512xf32>
    %34 = arith.truncf %23 : vector<8x256xf32> to vector<8x256xbf16>
    %c512_30 = arith.constant 512 : index
    %c0_31 = arith.constant 0 : index
    %35 = vector.load %arg6[%c512_30, %c0_31] : memref<768x512xbf16, #tpu.memory_space<vmem>>, vector<256x512xbf16>
    %cst_32 = arith.constant dense<0.000000e+00> : vector<8x512xf32>
    %36 = tpu.matmul %34, %35, %cst_32 {dimension_numbers = #tpu.dot_dimension_numbers<[1], [0], [0], [1], [0, 0, 1, 1], [], []>} : vector<8x256xbf16>, vector<256x512xbf16>, vector<8x512xf32> -> vector<8x512xf32>
    %37 = arith.addf %33, %36 : vector<8x512xf32>
    %c0_33 = arith.constant 0 : index
    %c0_34 = arith.constant 0 : index
    %38 = vector.load %arg7[%c0_33, %c0_34] : memref<1x512xf32, #tpu.memory_space<vmem>>, vector<1x512xf32>
    %39 = vector.broadcast %38 : vector<1x512xf32> to vector<8x512xf32>
    %40 = arith.addf %37, %39 : vector<8x512xf32>
    %cst_35 = arith.constant 0.000000e+00 : f32
    %41 = vector.broadcast %cst_35 : f32 to vector<8x512xf32>
    %42 = arith.maximumf %40, %41 : vector<8x512xf32>
    %c0_36 = arith.constant 0 : index
    %c0_37 = arith.constant 0 : index
    %43 = vector.load %arg15[%c0_36, %c0_37] : memref<8x512xf32, #tpu.memory_space<vmem>>, vector<8x512xf32>
    tpu.vector_store %arg15[%c0_36, %c0_37], %42 {strides = array<i32>} : memref<8x512xf32, #tpu.memory_space<vmem>>, vector<8x512xf32>,
    tpu.wait_dma2 semaphore(%arg17 : memref<!tpu.dma_semaphore, #tpu.memory_space<semaphore_mem>>) src(%arg8 : memref<1280x512xbf16, #tpu.memory_space<any>>) dst(%arg16 : memref<1280x512xbf16, #tpu.memory_space<vmem>>)
    %c0_38 = arith.constant 0 : index
    %c0_39 = arith.constant 0 : index
    %44 = vector.load %arg3[%c0_38, %c0_39] : memref<8x1280xbf16, #tpu.memory_space<vmem>>, vector<8x1280xbf16>
    %c0_40 = arith.constant 0 : index
    %c0_41 = arith.constant 0 : index
    %45 = vector.load %arg16[%c0_40, %c0_41] : memref<1280x512xbf16, #tpu.memory_space<vmem>>, vector<1280x512xbf16>
    %cst_42 = arith.constant dense<0.000000e+00> : vector<8x512xf32>
    %46 = tpu.matmul %44, %45, %cst_42 {dimension_numbers = #tpu.dot_dimension_numbers<[1], [0], [0], [1], [0, 0, 1, 1], [], []>} : vector<8x1280xbf16>, vector<1280x512xbf16>, vector<8x512xf32> -> vector<8x512xf32>
    %47 = arith.truncf %42 : vector<8x512xf32> to vector<8x512xbf16>
    %c0_43 = arith.constant 0 : index
    %c0_44 = arith.constant 0 : index
    %48 = vector.load %arg9[%c0_43, %c0_44] : memref<1024x64xbf16, #tpu.memory_space<vmem>>, vector<512x64xbf16>
    %cst_45 = arith.constant dense<0.000000e+00> : vector<8x64xf32>
    %49 = tpu.matmul %47, %48, %cst_45 {dimension_numbers = #tpu.dot_dimension_numbers<[1], [0], [0], [1], [0, 0, 1, 1], [], []>} : vector<8x512xbf16>, vector<512x64xbf16>, vector<8x64xf32> -> vector<8x64xf32>
    %50 = arith.truncf %46 : vector<8x512xf32> to vector<8x512xbf16>
    %c512_46 = arith.constant 512 : index
    %c0_47 = arith.constant 0 : index
    %51 = vector.load %arg9[%c512_46, %c0_47] : memref<1024x64xbf16, #tpu.memory_space<vmem>>, vector<512x64xbf16>
    %cst_48 = arith.constant dense<0.000000e+00> : vector<8x64xf32>
    %52 = tpu.matmul %50, %51, %cst_48 {dimension_numbers = #tpu.dot_dimension_numbers<[1], [0], [0], [1], [0, 0, 1, 1], [], []>} : vector<8x512xbf16>, vector<512x64xbf16>, vector<8x64xf32> -> vector<8x64xf32>
    %53 = arith.addf %49, %52 : vector<8x64xf32>
    %c0_49 = arith.constant 0 : index
    %c0_50 = arith.constant 0 : index
    %54 = vector.load %arg10[%c0_49, %c0_50] : memref<1x64xf32, #tpu.memory_space<vmem>>, vector<1x64xf32>
    %55 = vector.broadcast %54 : vector<1x64xf32> to vector<8x64xf32>
    %56 = arith.addf %53, %55 : vector<8x64xf32>
    %cst_51 = arith.constant 0.000000e+00 : f32
    %57 = vector.broadcast %cst_51 : f32 to vector<8x64xf32>
    %58 = arith.maximumf %56, %57 : vector<8x64xf32>
    %c0_52 = arith.constant 0 : index
    %c0_53 = arith.constant 0 : index
    %59 = vector.load %arg11[%c0_52, %c0_53] : memref<1x64xf32, #tpu.memory_space<vmem>>, vector<1x64xf32>
    %60 = vector.broadcast %59 : vector<1x64xf32> to vector<8x64xf32>
    %61 = arith.mulf %58, %60 : vector<8x64xf32>
    %cst_54 = arith.constant dense<0.000000e+00> : vector<8xf32>
    %62 = vector.multi_reduction <add>, %61, %cst_54 [1] : vector<8x64xf32> to vector<8xf32>
    %63 = vector.shape_cast %62 : vector<8xf32> to vector<8x1xf32>
    %c0_55 = arith.constant 0 : index
    %c0_56 = arith.constant 0 : index
    %64 = memref.load %arg12[%c0_55, %c0_56] : memref<1x1xf32, #tpu.memory_space<smem>>
    %65 = vector.broadcast %64 : f32 to vector<8x1xf32>
    %66 = arith.addf %63, %65 : vector<8x1xf32>
    %67 = arith.negf %66 : vector<8x1xf32>
    %68 = math.exp %67 : vector<8x1xf32>
    %cst_57 = arith.constant 1.000000e+00 : f32
    %69 = vector.broadcast %cst_57 : f32 to vector<8x1xf32>
    %70 = arith.addf %69, %68 : vector<8x1xf32>
    %71 = arith.divf %69, %70 : vector<8x1xf32>
    %c0_58 = arith.constant 0 : index
    %c0_59 = arith.constant 0 : index
    %72 = vector.load %arg13[%c0_58, %c0_59] : memref<8x1xf32, #tpu.memory_space<vmem>>, vector<8x1xf32>
    tpu.vector_store %arg13[%c0_58, %c0_59], %71 {strides = array<i32>} : memref<8x1xf32, #tpu.memory_space<vmem>>, vector<8x1xf32>,
    return
  }
}

</mosaic_0001>

<llo_original>
// kernel: soundlenet5_forward_mode7.1
$region0: #{soundlenet5_forward_mode7.1}
  #allocation0 [shape = 'u32[]', space=smem, size = 0x4, offset = 0x4, fixed_abs, tag = 'smem constant byte address 0x4 - core index']
  #allocation1 [shape = 'u32[144,128]{1,0:T(1,128)}', space=vmem, size = 0x12000, scoped, tag = 'internal scratch']
  #allocation2 [shape = 'bf16[1280,512]{1,0:T(16,128)(2,1)}', space=vmem, size = 0x140000, scoped, tag = 'scratch operand']
  #allocation3 [shape = 's32[1]{0}', space=sflag, size = 0x4, scoped, tag = 'scratch operand']
  #allocation4 [shape = 'f32[1,1]{1,0:T(1,128)S(6)}', space=smem, size = 0x200, scoped, tag = 'scoped memory for soundlenet5_forward_mode7.1']
  #allocation21 [shape = 's32[]', space=sflag, size = 0x4, offset = 0, fixed_abs, tag = 'sflag constant byte address 0x0 - dummy sync flag']
  %s0 = inlined_call_operand.hbm [shape: f32[8,32], index: 0, kind: input, shape index: {}]
  %s1 = inlined_call_operand.hbm [shape: f32[8,16], index: 1, kind: input, shape index: {}]
  %s2 = inlined_call_operand.hbm [shape: f32[8,24], index: 2, kind: input, shape index: {}]
  %s3 = inlined_call_operand.vmem [shape: bf16[8,1280], index: 3, kind: input, shape index: {}]
  %s4 = inlined_call_operand.hbm [shape: f32[72,256], index: 4, kind: input, shape index: {}]
  %s5 = inlined_call_operand.hbm [shape: f32[1,768], index: 5, kind: input, shape index: {}]
  %s6 = inlined_call_operand.hbm [shape: bf16[768,512], index: 6, kind: input, shape index: {}]
  %s7 = inlined_call_operand.hbm [shape: f32[1,512], index: 7, kind: input, shape index: {}]
  %s8 = inlined_call_operand.hbm [shape: bf16[1280,512], index: 8, kind: input, shape index: {}]
  %s9 = inlined_call_operand.vmem [shape: bf16[1024,64], index: 9, kind: input, shape index: {}]
  %s10 = inlined_call_operand.hbm [shape: f32[1,64], index: 10, kind: input, shape index: {}]
  %s11 = inlined_call_operand.hbm [shape: f32[1,64], index: 11, kind: input, shape index: {}]
  %s12 = inlined_call_operand.<no memory space> [shape: f32[1,1], index: 12, kind: input, shape index: {}]
  %s13 = inlined_call_operand.vmem [shape: f32[8,1], index: 13, kind: output, shape index: {0}]
  %s14 = inlined_call_operand.vmem [shape: f32[8,768], index: 14, kind: output, shape index: {1}]
  %s15 = inlined_call_operand.hbm [shape: f32[8,512], index: 15, kind: output, shape index: {2}]
  %16 = xla_tuple %s13, %s14, %s15
  %s17 = sld [smem:[#allocation0]]
  $region110: #{soundlenet5_forward_mode7.1} parent=0
    _
  %s19 = ssub.s32 1, %s17
  %s20 = scalar_select 0, %s19, %s17
  %21 = sst [smem:[#allocation4]] %s12
  $region1: #{soundlenet5_forward_mode7.1} parent=0
    #allocation5 [shape = 'u8[4096]{0}', space=vmem, size = 0x1000, scoped, tag = 'input window, operand 0, single buffered']
    #allocation6 [shape = 's32[1]{0}', space=sflag, size = 0x4, scoped, tag = 'scoped memory for soundlenet5_forward_mode7.1']
    #allocation7 [shape = 's32[1]{0}', space=sflag, size = 0x4, scoped, tag = 'scoped memory for soundlenet5_forward_mode7.1']
    #allocation8 [shape = 'u8[4096]{0}', space=vmem, size = 0x1000, scoped, tag = 'input window, operand 1, single buffered']
    #allocation9 [shape = 's32[1]{0}', space=sflag, size = 0x4, scoped, tag = 'scoped memory for soundlenet5_forward_mode7.1']
    #allocation10 [shape = 'u8[4096]{0}', space=vmem, size = 0x1000, scoped, tag = 'input window, operand 2, single buffered']
    #allocation11 [shape = 'u8[73728]{0}', space=vmem, size = 0x12000, scoped, tag = 'input window, operand 4, single buffered']
    #allocation12 [shape = 's32[1]{0}', space=sflag, size = 0x4, scoped, tag = 'scoped memory for soundlenet5_forward_mode7.1']
    #allocation13 [shape = 'u8[3072]{0}', space=vmem, size = 0xc00, scoped, tag = 'input window, operand 5, single buffered']
    #allocation14 [shape = 'u8[786432]{0}', space=vmem, size = 0xc0000, scoped, tag = 'input window, operand 6, single buffered']
    #allocation15 [shape = 's32[1]{0}', space=sflag, size = 0x4, scoped, tag = 'scoped memory for soundlenet5_forward_mode7.1']
    #allocation16 [shape = 'u8[2048]{0}', space=vmem, size = 0x800, scoped, tag = 'input window, operand 7, single buffered']
    #allocation17 [shape = 'u8[512]{0}', space=vmem, size = 0x400, scoped, tag = 'input window, operand 10, single buffered']
    #allocation18 [shape = 's32[1]{0}', space=sflag, size = 0x4, scoped, tag = 'scoped memory for soundlenet5_forward_mode7.1']
    #allocation19 [shape = 'u8[512]{0}', space=vmem, size = 0x400, scoped, tag = 'input window, operand 11, single buffered']
    #allocation20 [shape = 'u8[16384]{0}', space=vmem, size = 0x4000, scoped, tag = 'output window, operand 2, single buffered']
    #allocation22 [shape = 'u32[9]{0}', space=smem, size = 0x24, scoped, tag = 'DMA stride descriptor']
    %22 = vsyncpa [#allocation6], 0
    %23 = vsyncpa [#allocation9], 0
    %24 = vsyncpa [#allocation12], 0
    %25 = vsyncpa [#allocation15], 0
    %26 = vsyncpa [#allocation18], 0
    %27 = vsyncpa [#allocation7], 0
    // Predicated region
    $region2: #{soundlenet5_forward_mode7.1} parent=1 // pred_check
      _
    $region3: #{soundlenet5_forward_mode7.1} parent=1 // pred_check_branch
      %29 = sbr.rel (0) target = $region5
    $region4: #{soundlenet5_forward_mode7.1} parent=1 // pred_region
      %s31 = ssub.s32 128, 128
      %32 = vsyncadd [#allocation6], %s31
      %s34 = sshll.u32 [#allocation5], 4
      %s35 = int_to_ptr.vmem [resolvable:$true] %s34
      %37 = dma.hbm_to_vmem [thread:$0]  %s0, 128, %s35, [#allocation6]
    $region5: #{soundlenet5_forward_mode7.1} parent=1 // pred_fallthru
      _
    // Predicated region
    $region6: #{soundlenet5_forward_mode7.1} parent=1 // pred_check
      _
    $region7: #{soundlenet5_forward_mode7.1} parent=1 // pred_check_branch
      %39 = sbr.rel (0) target = $region9
    $region8: #{soundlenet5_forward_mode7.1} parent=1 // pred_region
      %s41 = ssub.s32 128, 128
      %42 = vsyncadd [#allocation9], %s41
      %s44 = sshll.u32 [#allocation8], 4
      %s45 = int_to_ptr.vmem [resolvable:$true] %s44
      %47 = dma.hbm_to_vmem [thread:$0]  %s1, 128, %s45, [#allocation9]
    $region9: #{soundlenet5_forward_mode7.1} parent=1 // pred_fallthru
      _
    // Predicated region
    $region10: #{soundlenet5_forward_mode7.1} parent=1 // pred_check
      _
    $region11: #{soundlenet5_forward_mode7.1} parent=1 // pred_check_branch
      %49 = sbr.rel (0) target = $region13
    $region12: #{soundlenet5_forward_mode7.1} parent=1 // pred_region
      %s51 = ssub.s32 128, 128
      %52 = vsyncadd [#allocation9], %s51
      %s54 = sshll.u32 [#allocation10], 4
      %s55 = int_to_ptr.vmem [resolvable:$true] %s54
      %57 = dma.hbm_to_vmem [thread:$0]  %s2, 128, %s55, [#allocation9]
    $region13: #{soundlenet5_forward_mode7.1} parent=1 // pred_fallthru
      _
    // Predicated region
    $region14: #{soundlenet5_forward_mode7.1} parent=1 // pred_check
      _
    $region15: #{soundlenet5_forward_mode7.1} parent=1 // pred_check_branch
      %59 = sbr.rel (0) target = $region17
    $region16: #{soundlenet5_forward_mode7.1} parent=1 // pred_region
      _
    $region17: #{soundlenet5_forward_mode7.1} parent=1 // pred_fallthru
      _
    // Predicated region
    $region18: #{soundlenet5_forward_mode7.1} parent=1 // pred_check
      _
    $region19: #{soundlenet5_forward_mode7.1} parent=1 // pred_check_branch
      %61 = sbr.rel (0) target = $region21
    $region20: #{soundlenet5_forward_mode7.1} parent=1 // pred_region
      %s63 = ssub.s32 2304, 2304
      %64 = vsyncadd [#allocation12], %s63
      %s65 = sshll.u32 [#allocation11], 4
      %s66 = int_to_ptr.vmem [resolvable:$true] %s65
      %71 = dma.hbm_to_vmem [thread:$0]  %s4, 2304, %s66, [#allocation12], 256, 256, 16
    $region21: #{soundlenet5_forward_mode7.1} parent=1 // pred_fallthru
      _
    // Predicated region
    $region22: #{soundlenet5_forward_mode7.1} parent=1 // pred_check
      _
    $region23: #{soundlenet5_forward_mode7.1} parent=1 // pred_check_branch
      %73 = sbr.rel (0) target = $region25
    $region24: #{soundlenet5_forward_mode7.1} parent=1 // pred_region
      %s75 = ssub.s32 96, 96
      %76 = vsyncadd [#allocation12], %s75
      %s78 = sshll.u32 [#allocation13], 4
      %s79 = int_to_ptr.vmem [resolvable:$true] %s78
      %81 = dma.hbm_to_vmem [thread:$0]  %s5, 96, %s79, [#allocation12]
    $region25: #{soundlenet5_forward_mode7.1} parent=1 // pred_fallthru
      _
    // Predicated region
    $region26: #{soundlenet5_forward_mode7.1} parent=1 // pred_check
      _
    $region27: #{soundlenet5_forward_mode7.1} parent=1 // pred_check_branch
      %83 = sbr.rel (0) target = $region29
    $region28: #{soundlenet5_forward_mode7.1} parent=1 // pred_region
      %s85 = ssub.s32 24576, 24576
      %86 = vsyncadd [#allocation15], %s85
      %s87 = sshll.u32 [#allocation14], 4
      %s88 = int_to_ptr.vmem [resolvable:$true] %s87
      %93 = dma.hbm_to_vmem [thread:$0]  %s6, 24576, %s88, [#allocation15], 256, 256, 16
    $region29: #{soundlenet5_forward_mode7.1} parent=1 // pred_fallthru
      _
    // Predicated region
    $region30: #{soundlenet5_forward_mode7.1} parent=1 // pred_check
      _
    $region31: #{soundlenet5_forward_mode7.1} parent=1 // pred_check_branch
      %95 = sbr.rel (0) target = $region33
    $region32: #{soundlenet5_forward_mode7.1} parent=1 // pred_region
      %s97 = ssub.s32 64, 64
      %98 = vsyncadd [#allocation15], %s97
      %s100 = sshll.u32 [#allocation16], 4
      %s101 = int_to_ptr.vmem [resolvable:$true] %s100
      %103 = dma.hbm_to_vmem [thread:$0]  %s7, 64, %s101, [#allocation15]
    $region33: #{soundlenet5_forward_mode7.1} parent=1 // pred_fallthru
      _
    // Predicated region
    $region34: #{soundlenet5_forward_mode7.1} parent=1 // pred_check
      _
    $region35: #{soundlenet5_forward_mode7.1} parent=1 // pred_check_branch
      %105 = sbr.rel (0) target = $region37
    $region36: #{soundlenet5_forward_mode7.1} parent=1 // pred_region
      _
    $region37: #{soundlenet5_forward_mode7.1} parent=1 // pred_fallthru
      _
    // Predicated region
    $region38: #{soundlenet5_forward_mode7.1} parent=1 // pred_check
      _
    $region39: #{soundlenet5_forward_mode7.1} parent=1 // pred_check_branch
      %107 = sbr.rel (0) target = $region41
    $region40: #{soundlenet5_forward_mode7.1} parent=1 // pred_region
      %s109 = ssub.s32 16, 16
      %110 = vsyncadd [#allocation18], %s109
      %s112 = sshll.u32 [#allocation17], 4
      %s113 = int_to_ptr.vmem [resolvable:$true] %s112
      %115 = dma.hbm_to_vmem [thread:$0]  %s10, 16, %s113, [#allocation18]
    $region41: #{soundlenet5_forward_mode7.1} parent=1 // pred_fallthru
      _
    // Predicated region
    $region42: #{soundlenet5_forward_mode7.1} parent=1 // pred_check
      _
    $region43: #{soundlenet5_forward_mode7.1} parent=1 // pred_check_branch
      %117 = sbr.rel (0) target = $region45
    $region44: #{soundlenet5_forward_mode7.1} parent=1 // pred_region
      %s119 = ssub.s32 16, 16
      %120 = vsyncadd [#allocation18], %s119
      %s122 = sshll.u32 [#allocation19], 4
      %s123 = int_to_ptr.vmem [resolvable:$true] %s122
      %125 = dma.hbm_to_vmem [thread:$0]  %s11, 16, %s123, [#allocation18]
    $region45: #{soundlenet5_forward_mode7.1} parent=1 // pred_fallthru
      _
    // Predicated region
    $region46: #{soundlenet5_forward_mode7.1} parent=1 // pred_check
      _
    $region47: #{soundlenet5_forward_mode7.1} parent=1 // pred_check_branch
      %127 = sbr.rel (0) target = $region49
    $region48: #{soundlenet5_forward_mode7.1} parent=1 // pred_region
      _
    $region49: #{soundlenet5_forward_mode7.1} parent=1 // pred_fallthru
      _
    // Predicated region
    $region50: #{soundlenet5_forward_mode7.1} parent=1 // pred_check
      _
    $region51: #{soundlenet5_forward_mode7.1} parent=1 // pred_check_branch
      %129 = sbr.rel (0) target = $region53
    $region52: #{soundlenet5_forward_mode7.1} parent=1 // pred_region
      %130 = dma.done [#allocation6], 128
    $region53: #{soundlenet5_forward_mode7.1} parent=1 // pred_fallthru
      _
    // Predicated region
    $region54: #{soundlenet5_forward_mode7.1} parent=1 // pred_check
      _
    $region55: #{soundlenet5_forward_mode7.1} parent=1 // pred_check_branch
      %132 = sbr.rel (0) target = $region57
    $region56: #{soundlenet5_forward_mode7.1} parent=1 // pred_region
      %133 = dma.done [#allocation9], 128
    $region57: #{soundlenet5_forward_mode7.1} parent=1 // pred_fallthru
      _
    // Predicated region
    $region58: #{soundlenet5_forward_mode7.1} parent=1 // pred_check
      _
    $region59: #{soundlenet5_forward_mode7.1} parent=1 // pred_check_branch
      %135 = sbr.rel (0) target = $region61
    $region60: #{soundlenet5_forward_mode7.1} parent=1 // pred_region
      %136 = dma.done [#allocation9], 128
    $region61: #{soundlenet5_forward_mode7.1} parent=1 // pred_fallthru
      _
    // Predicated region
    $region62: #{soundlenet5_forward_mode7.1} parent=1 // pred_check
      _
    $region63: #{soundlenet5_forward_mode7.1} parent=1 // pred_check_branch
      %138 = sbr.rel (0) target = $region65
    $region64: #{soundlenet5_forward_mode7.1} parent=1 // pred_region
      %139 = dma.done [#allocation12], 2304
    $region65: #{soundlenet5_forward_mode7.1} parent=1 // pred_fallthru
      _
    // Predicated region
    $region66: #{soundlenet5_forward_mode7.1} parent=1 // pred_check
      _
    $region67: #{soundlenet5_forward_mode7.1} parent=1 // pred_check_branch
      %141 = sbr.rel (0) target = $region69
    $region68: #{soundlenet5_forward_mode7.1} parent=1 // pred_region
      %142 = dma.done [#allocation12], 96
    $region69: #{soundlenet5_forward_mode7.1} parent=1 // pred_fallthru
      _
    // Predicated region
    $region70: #{soundlenet5_forward_mode7.1} parent=1 // pred_check
      _
    $region71: #{soundlenet5_forward_mode7.1} parent=1 // pred_check_branch
      %144 = sbr.rel (0) target = $region73
    $region72: #{soundlenet5_forward_mode7.1} parent=1 // pred_region
      %145 = dma.done [#allocation15], 24576
    $region73: #{soundlenet5_forward_mode7.1} parent=1 // pred_fallthru
      _
    // Predicated region
    $region74: #{soundlenet5_forward_mode7.1} parent=1 // pred_check
      _
    $region75: #{soundlenet5_forward_mode7.1} parent=1 // pred_check_branch
      %147 = sbr.rel (0) target = $region77
    $region76: #{soundlenet5_forward_mode7.1} parent=1 // pred_region
      %148 = dma.done [#allocation15], 64
    $region77: #{soundlenet5_forward_mode7.1} parent=1 // pred_fallthru
      _
    // Predicated region
    $region78: #{soundlenet5_forward_mode7.1} parent=1 // pred_check
      _
    $region79: #{soundlenet5_forward_mode7.1} parent=1 // pred_check_branch
      %150 = sbr.rel (0) target = $region81
    $region80: #{soundlenet5_forward_mode7.1} parent=1 // pred_region
      %151 = dma.done [#allocation18], 16
    $region81: #{soundlenet5_forward_mode7.1} parent=1 // pred_fallthru
      _
    // Predicated region
    $region82: #{soundlenet5_forward_mode7.1} parent=1 // pred_check
      _
    $region83: #{soundlenet5_forward_mode7.1} parent=1 // pred_check_branch
      %153 = sbr.rel (0) target = $region85
    $region84: #{soundlenet5_forward_mode7.1} parent=1 // pred_region
      %154 = dma.done [#allocation18], 16
    $region85: #{soundlenet5_forward_mode7.1} parent=1 // pred_fallthru
      _
    %s157 = sshll.u32 1, 14
    %s158 = sxor.u32 4294967295, %s157
    %s160 = sld [smem:[#allocation0]]
    %s161 = sadd.s32 2, %s160
    %s163 = sshll.u32 7, 26
    %s164 = sxor.u32 4294967295, %s163
    %s165 = sand.u32 0, %s164
    %s166 = sshll.u32 %s161, 26
    %s167 = sor.u32 %s165, %s166
    %s168 = sshll.u32 [#allocation2], 4
    %s169 = int_to_ptr.vmem [resolvable:$true] %s168
    %172 = sst [smem:[#allocation22]] 512
    %s173 = scalar_lea.smem [#allocation22], 1
    %174 = sst [smem:[%s173]] 512
    %s175 = scalar_lea.smem [#allocation22], 2
    %176 = sst [smem:[%s175]] 4
    %s177 = scalar_lea.smem [#allocation22], 3
    %178 = sst [smem:[%s177]] 64
    %s179 = scalar_lea.smem [#allocation22], 4
    %180 = sst [smem:[%s179]] 128
    %s181 = scalar_lea.smem [#allocation22], 5
    %182 = sst [smem:[%s181]] 2
    %s183 = scalar_lea.smem [#allocation22], 6
    %184 = sst [smem:[%s183]] 256
    %s185 = scalar_lea.smem [#allocation22], 7
    %186 = sst [smem:[%s185]] 64
    %s187 = scalar_lea.smem [#allocation22], 8
    %188 = sst [smem:[%s187]] 4
    %190 = dma.general %s8, 40960, %s169, [#allocation3], [#allocation21], [#allocation22], %s167, 0
    %v191 = vld [vmem:[#allocation5] sm:$0xff]
    %v192 = vld [vmem:[#allocation11] sm:$0xff]
    %v193 = vld [vmem:[#allocation11 + $0x8] sm:$0xff]
    %v194 = vld [vmem:[#allocation11 + $0x10] sm:$0xff]
    %v195 = vld [vmem:[#allocation11 + $0x18] sm:$0xff]
    %v196 = vld [vmem:[#allocation11 + $0x20] sm:$0xff]
    %v197 = vld [vmem:[#allocation11 + $0x28] sm:$0xff]
    %v198 = vld [vmem:[#allocation11 + $0x30] sm:$0xff]
    %v199 = vld [vmem:[#allocation11 + $0x38] sm:$0xff]
    %v200 = vld [vmem:[#allocation13] sm:$0x3]
    %v202 = vlaneseq
    %v203 = vshrl.u32 %v202, 7
    %v204 = vsub.s32 0, %v203
    %v205 = vrot.slane %v200, %v204
    %v206 = vlaneseq
    %v207 = vshrl.u32 %v206, 7
    %v208 = vsub.s32 1, %v207
    %v209 = vrot.slane %v200, %v208
    %vm212 = vcmask 261120
    %v214 = vsel %vm212, %v191, 0
    %216 = vmatprep.subr.mxu0 %v193
    %217 = vmatpush1.msra.mxu0 %v192
    %218 = vmatprep.subr.mxu0 %v195
    %219 = vmatpush1.msra.mxu0 %v194
    %220 = vmatprep.subr.mxu0 %v197
    %221 = vmatpush1.msra.mxu0 %v196
    %222 = vmatprep.subr.mxu0 %v199
    %223 = vmatpush1.msra.mxu0 %v198
    %224 = vmatprep.subr.mxu0 0.0
    %225 = vmatpush1.msra.mxu0 0.0
    %226 = vmatprep.subr.mxu0 0.0
    %227 = vmatpush1.msra.mxu0 0.0
    %228 = vmatprep.subr.mxu0 0.0
    %229 = vmatpush1.msra.mxu0 0.0
    %230 = vmatprep.subr.mxu0 0.0
    %231 = vmatpush1.msra.mxu0 0.0
    %232 = vmatprep.subr.mxu0 0.0
    %233 = vmatpush1.msra.mxu0 0.0
    %234 = vmatprep.subr.mxu0 0.0
    %235 = vmatpush1.msra.mxu0 0.0
    %236 = vmatprep.subr.mxu0 0.0
    %237 = vmatpush1.msra.mxu0 0.0
    %238 = vmatprep.subr.mxu0 0.0
    %239 = vmatpush1.msra.mxu0 0.0
    %240 = vmatprep.subr.mxu0 0.0
    %241 = vmatpush1.msra.mxu0 0.0
    %242 = vmatprep.subr.mxu0 0.0
    %243 = vmatpush1.msra.mxu0 0.0
    %244 = vmatprep.subr.mxu0 0.0
    %245 = vmatpush1.msra.mxu0 0.0
    %246 = vmatprep.subr.mxu0 0.0
    %247 = vmatpush1.msra.mxu0 0.0
    %248 = vmatprep.subr.mxu0 0.0
    %249 = vmatpush1.msra.mxu0 0.0
    %250 = vmatprep.subr.mxu0 0.0
    %251 = vmatpush1.msra.mxu0 0.0
    %252 = vmatprep.subr.mxu0 0.0
    %253 = vmatpush1.msra.mxu0 0.0
    %254 = vmatprep.subr.mxu0 0.0
    %255 = vmatpush1.msra.mxu0 0.0
    %256 = vmatprep.subr.mxu0 0.0
    %257 = vmatpush1.msra.mxu0 0.0
    %258 = vmatprep.subr.mxu0 0.0
    %259 = vmatpush1.msra.mxu0 0.0
    %260 = vmatprep.subr.mxu0 0.0
    %261 = vmatpush1.msra.mxu0 0.0
    %262 = vmatprep.subr.mxu0 0.0
    %263 = vmatpush1.msra.mxu0 0.0
    %264 = vmatprep.subr.mxu0 0.0
    %265 = vmatpush1.msra.mxu0 0.0
    %266 = vmatprep.subr.mxu0 0.0
    %267 = vmatpush1.msra.mxu0 0.0
    %268 = vmatprep.subr.mxu0 0.0
    %269 = vmatpush1.msra.mxu0 0.0
    %270 = vmatprep.subr.mxu0 0.0
    %271 = vmatpush1.msra.mxu0 0.0
    %272 = vmatprep.subr.mxu0 0.0
    %273 = vmatpush1.msra.mxu0 0.0
    %274 = vmatprep.subr.mxu0 0.0
    %275 = vmatpush1.msra.mxu0 0.0
    %276 = vmatprep.subr.mxu0 0.0
    %277 = vmatpush1.msra.mxu0 0.0
    %278 = vmatprep.subr.mxu0 0.0
    %279 = vmatpush1.msra.mxu0 0.0
    %280 = vmatprep.mubr.f32.mxu0 0.0
    %281 = vmatmul.mubr.f32.gmra.mrb[0].mxu0 %v214
    %v282 = vpop.f32.mrb[0].mxu0
    %v283 = vadd.f32 %v205, %v282
    %v284 = vpop.f32.mrb[0].mxu0
    %v285 = vadd.f32 %v209, %v284
    %286 = vdwg.mxu0
    %v287 = vmax.f32 %v283, 0.0
    %v288 = vmax.f32 %v285, 0.0
    %v289 = vld [vmem:[#allocation8] sm:$0xff]
    %v290 = vld [vmem:[#allocation11 + $0x40] sm:$0xff]
    %v291 = vld [vmem:[#allocation11 + $0x48] sm:$0xff]
    %v292 = vld [vmem:[#allocation11 + $0x50] sm:$0xff]
    %v293 = vld [vmem:[#allocation11 + $0x58] sm:$0xff]
    %v294 = vld [vmem:[#allocation13 + $0x2] sm:$0x3]
    %v296 = vlaneseq
    %v297 = vshrl.u32 %v296, 7
    %v298 = vsub.s32 0, %v297
    %v299 = vrot.slane %v294, %v298
    %v300 = vlaneseq
    %v301 = vshrl.u32 %v300, 7
    %v302 = vsub.s32 1, %v301
    %v303 = vrot.slane %v294, %v302
    %vm306 = vcmask 130048
    %v308 = vsel %vm306, %v289, 0
    %310 = vmatprep.subr.mxu0 %v291
    %311 = vmatpush1.msra.mxu0 %v290
    %312 = vmatprep.subr.mxu0 %v293
    %313 = vmatpush1.msra.mxu0 %v292
    %314 = vmatprep.subr.mxu0 0.0
    %315 = vmatpush1.msra.mxu0 0.0
    %316 = vmatprep.subr.mxu0 0.0
    %317 = vmatpush1.msra.mxu0 0.0
    %318 = vmatprep.subr.mxu0 0.0
    %319 = vmatpush1.msra.mxu0 0.0
    %320 = vmatprep.subr.mxu0 0.0
    %321 = vmatpush1.msra.mxu0 0.0
    %322 = vmatprep.subr.mxu0 0.0
    %323 = vmatpush1.msra.mxu0 0.0
    %324 = vmatprep.subr.mxu0 0.0
    %325 = vmatpush1.msra.mxu0 0.0
    %326 = vmatprep.subr.mxu0 0.0
    %327 = vmatpush1.msra.mxu0 0.0
    %328 = vmatprep.subr.mxu0 0.0
    %329 = vmatpush1.msra.mxu0 0.0
    %330 = vmatprep.subr.mxu0 0.0
    %331 = vmatpush1.msra.mxu0 0.0
    %332 = vmatprep.subr.mxu0 0.0
    %333 = vmatpush1.msra.mxu0 0.0
    %334 = vmatprep.subr.mxu0 0.0
    %335 = vmatpush1.msra.mxu0 0.0
    %336 = vmatprep.subr.mxu0 0.0
    %337 = vmatpush1.msra.mxu0 0.0
    %338 = vmatprep.subr.mxu0 0.0
    %339 = vmatpush1.msra.mxu0 0.0
    %340 = vmatprep.subr.mxu0 0.0
    %341 = vmatpush1.msra.mxu0 0.0
    %342 = vmatprep.subr.mxu0 0.0
    %343 = vmatpush1.msra.mxu0 0.0
    %344 = vmatprep.subr.mxu0 0.0
    %345 = vmatpush1.msra.mxu0 0.0
    %346 = vmatprep.subr.mxu0 0.0
    %347 = vmatpush1.msra.mxu0 0.0
    %348 = vmatprep.subr.mxu0 0.0
    %349 = vmatpush1.msra.mxu0 0.0
    %350 = vmatprep.subr.mxu0 0.0
    %351 = vmatpush1.msra.mxu0 0.0
    %352 = vmatprep.subr.mxu0 0.0
    %353 = vmatpush1.msra.mxu0 0.0
    %354 = vmatprep.subr.mxu0 0.0
    %355 = vmatpush1.msra.mxu0 0.0
    %356 = vmatprep.subr.mxu0 0.0
    %357 = vmatpush1.msra.mxu0 0.0
    %358 = vmatprep.subr.mxu0 0.0
    %359 = vmatpush1.msra.mxu0 0.0
    %360 = vmatprep.subr.mxu0 0.0
    %361 = vmatpush1.msra.mxu0 0.0
    %362 = vmatprep.subr.mxu0 0.0
    %363 = vmatpush1.msra.mxu0 0.0
    %364 = vmatprep.subr.mxu0 0.0
    %365 = vmatpush1.msra.mxu0 0.0
    %366 = vmatprep.subr.mxu0 0.0
    %367 = vmatpush1.msra.mxu0 0.0
    %368 = vmatprep.subr.mxu0 0.0
    %369 = vmatpush1.msra.mxu0 0.0
    %370 = vmatprep.subr.mxu0 0.0
    %371 = vmatpush1.msra.mxu0 0.0
    %372 = vmatprep.subr.mxu0 0.0
    %373 = vmatpush1.msra.mxu0 0.0
    %374 = vmatprep.mubr.f32.mxu0 0.0
    %375 = vmatmul.mubr.f32.gmra.mrb[0].mxu0 %v308
    %v376 = vpop.f32.mrb[0].mxu0
    %v377 = vadd.f32 %v299, %v376
    %v378 = vpop.f32.mrb[0].mxu0
    %v379 = vadd.f32 %v303, %v378
    %380 = vdwg.mxu0
    %v381 = vmax.f32 %v377, 0.0
    %v382 = vmax.f32 %v379, 0.0
    %v383 = vld [vmem:[#allocation10] sm:$0xff]
    %v384 = vld [vmem:[#allocation11 + $0x60] sm:$0xff]
    %v385 = vld [vmem:[#allocation11 + $0x68] sm:$0xff]
    %v386 = vld [vmem:[#allocation11 + $0x70] sm:$0xff]
    %v387 = vld [vmem:[#allocation11 + $0x78] sm:$0xff]
    %v388 = vld [vmem:[#allocation11 + $0x80] sm:$0xff]
    %v389 = vld [vmem:[#allocation11 + $0x88] sm:$0xff]
    %v390 = vld [vmem:[#allocation13 + $0x4] sm:$0x3]
    %v392 = vlaneseq
    %v393 = vshrl.u32 %v392, 7
    %v394 = vsub.s32 0, %v393
    %v395 = vrot.slane %v390, %v394
    %v396 = vlaneseq
    %v397 = vshrl.u32 %v396, 7
    %v398 = vsub.s32 1, %v397
    %v399 = vrot.slane %v390, %v398
    %vm402 = vcmask 195584
    %v404 = vsel %vm402, %v383, 0
    %406 = vmatprep.subr.mxu0 %v385
    %407 = vmatpush1.msra.mxu0 %v384
    %408 = vmatprep.subr.mxu0 %v387
    %409 = vmatpush1.msra.mxu0 %v386
    %410 = vmatprep.subr.mxu0 %v389
    %411 = vmatpush1.msra.mxu0 %v388
    %412 = vmatprep.subr.mxu0 0.0
    %413 = vmatpush1.msra.mxu0 0.0
    %414 = vmatprep.subr.mxu0 0.0
    %415 = vmatpush1.msra.mxu0 0.0
    %416 = vmatprep.subr.mxu0 0.0
    %417 = vmatpush1.msra.mxu0 0.0
    %418 = vmatprep.subr.mxu0 0.0
    %419 = vmatpush1.msra.mxu0 0.0
    %420 = vmatprep.subr.mxu0 0.0
    %421 = vmatpush1.msra.mxu0 0.0
    %422 = vmatprep.subr.mxu0 0.0
    %423 = vmatpush1.msra.mxu0 0.0
    %424 = vmatprep.subr.mxu0 0.0
    %425 = vmatpush1.msra.mxu0 0.0
    %426 = vmatprep.subr.mxu0 0.0
    %427 = vmatpush1.msra.mxu0 0.0
    %428 = vmatprep.subr.mxu0 0.0
    %429 = vmatpush1.msra.mxu0 0.0
    %430 = vmatprep.subr.mxu0 0.0
    %431 = vmatpush1.msra.mxu0 0.0
    %432 = vmatprep.subr.mxu0 0.0
    %433 = vmatpush1.msra.mxu0 0.0
    %434 = vmatprep.subr.mxu0 0.0
    %435 = vmatpush1.msra.mxu0 0.0
    %436 = vmatprep.subr.mxu0 0.0
    %437 = vmatpush1.msra.mxu0 0.0
    %438 = vmatprep.subr.mxu0 0.0
    %439 = vmatpush1.msra.mxu0 0.0
    %440 = vmatprep.subr.mxu0 0.0
    %441 = vmatpush1.msra.mxu0 0.0
    %442 = vmatprep.subr.mxu0 0.0
    %443 = vmatpush1.msra.mxu0 0.0
    %444 = vmatprep.subr.mxu0 0.0
    %445 = vmatpush1.msra.mxu0 0.0
    %446 = vmatprep.subr.mxu0 0.0
    %447 = vmatpush1.msra.mxu0 0.0
    %448 = vmatprep.subr.mxu0 0.0
    %449 = vmatpush1.msra.mxu0 0.0
    %450 = vmatprep.subr.mxu0 0.0
    %451 = vmatpush1.msra.mxu0 0.0
    %452 = vmatprep.subr.mxu0 0.0
    %453 = vmatpush1.msra.mxu0 0.0
    %454 = vmatprep.subr.mxu0 0.0
    %455 = vmatpush1.msra.mxu0 0.0
    %456 = vmatprep.subr.mxu0 0.0
    %457 = vmatpush1.msra.mxu0 0.0
    %458 = vmatprep.subr.mxu0 0.0
    %459 = vmatpush1.msra.mxu0 0.0
    %460 = vmatprep.subr.mxu0 0.0
    %461 = vmatpush1.msra.mxu0 0.0
    %462 = vmatprep.subr.mxu0 0.0
    %463 = vmatpush1.msra.mxu0 0.0
    %464 = vmatprep.subr.mxu0 0.0
    %465 = vmatpush1.msra.mxu0 0.0
    %466 = vmatprep.subr.mxu0 0.0
    %467 = vmatpush1.msra.mxu0 0.0
    %468 = vmatprep.subr.mxu0 0.0
    %469 = vmatpush1.msra.mxu0 0.0
    %470 = vmatprep.mubr.f32.mxu0 0.0
    %471 = vmatmul.mubr.f32.gmra.mrb[0].mxu0 %v404
    %v472 = vpop.f32.mrb[0].mxu0
    %v473 = vadd.f32 %v395, %v472
    %v474 = vpop.f32.mrb[0].mxu0
    %v475 = vadd.f32 %v399, %v474
    %476 = vdwg.mxu0
    %v477 = vmax.f32 %v473, 0.0
    %v478 = vmax.f32 %v475, 0.0
    %479 = vst [vmem:[%s14] sm:$0xff] %v287
    %480 = vst [vmem:[%s14 + $0x8] sm:$0xff] %v288
    %481 = vst [vmem:[%s14 + $0x10] sm:$0xff] %v381
    %482 = vst [vmem:[%s14 + $0x18] sm:$0xff] %v382
    %483 = vst [vmem:[%s14 + $0x20] sm:$0xff] %v477
    %484 = vst [vmem:[%s14 + $0x28] sm:$0xff] %v478
    %v485 = vpack.c.bf16 %v287, %v287
    %v486 = vpack.c.bf16 %v288, %v288
    %v487 = vld [vmem:[#allocation14] sm:$0xff]
    %v488 = vld [vmem:[#allocation14 + $0x8] sm:$0xff]
    %v489 = vld [vmem:[#allocation14 + $0x10] sm:$0xff]
    %v490 = vld [vmem:[#allocation14 + $0x18] sm:$0xff]
    %v491 = vld [vmem:[#allocation14 + $0x20] sm:$0xff]
    %v492 = vld [vmem:[#allocation14 + $0x28] sm:$0xff]
    %v493 = vld [vmem:[#allocation14 + $0x30] sm:$0xff]
    %v494 = vld [vmem:[#allocation14 + $0x38] sm:$0xff]
    %v495 = vld [vmem:[#allocation14 + $0x40] sm:$0xff]
    %v496 = vld [vmem:[#allocation14 + $0x48] sm:$0xff]
    %v497 = vld [vmem:[#allocation14 + $0x50] sm:$0xff]
    %v498 = vld [vmem:[#allocation14 + $0x58] sm:$0xff]
    %v499 = vld [vmem:[#allocation14 + $0x60] sm:$0xff]
    %v500 = vld [vmem:[#allocation14 + $0x68] sm:$0xff]
    %v501 = vld [vmem:[#allocation14 + $0x70] sm:$0xff]
    %v502 = vld [vmem:[#allocation14 + $0x78] sm:$0xff]
    %v503 = vld [vmem:[#allocation14 + $0x80] sm:$0xff]
    %v504 = vld [vmem:[#allocation14 + $0x88] sm:$0xff]
    %v505 = vld [vmem:[#allocation14 + $0x90] sm:$0xff]
    %v506 = vld [vmem:[#allocation14 + $0x98] sm:$0xff]
    %v507 = vld [vmem:[#allocation14 + $0xa0] sm:$0xff]
    %v508 = vld [vmem:[#allocation14 + $0xa8] sm:$0xff]
    %v509 = vld [vmem:[#allocation14 + $0xb0] sm:$0xff]
    %v510 = vld [vmem:[#allocation14 + $0xb8] sm:$0xff]
    %v511 = vld [vmem:[#allocation14 + $0xc0] sm:$0xff]
    %v512 = vld [vmem:[#allocation14 + $0xc8] sm:$0xff]
    %v513 = vld [vmem:[#allocation14 + $0xd0] sm:$0xff]
    %v514 = vld [vmem:[#allocation14 + $0xd8] sm:$0xff]
    %v515 = vld [vmem:[#allocation14 + $0xe0] sm:$0xff]
    %v516 = vld [vmem:[#allocation14 + $0xe8] sm:$0xff]
    %v517 = vld [vmem:[#allocation14 + $0xf0] sm:$0xff]
    %v518 = vld [vmem:[#allocation14 + $0xf8] sm:$0xff]
    %v519 = vld [vmem:[#allocation14 + $0x100] sm:$0xff]
    %v520 = vld [vmem:[#allocation14 + $0x108] sm:$0xff]
    %v521 = vld [vmem:[#allocation14 + $0x110] sm:$0xff]
    %v522 = vld [vmem:[#allocation14 + $0x118] sm:$0xff]
    %v523 = vld [vmem:[#allocation14 + $0x120] sm:$0xff]
    %v524 = vld [vmem:[#allocation14 + $0x128] sm:$0xff]
    %v525 = vld [vmem:[#allocation14 + $0x130] sm:$0xff]
    %v526 = vld [vmem:[#allocation14 + $0x138] sm:$0xff]
    %v527 = vld [vmem:[#allocation14 + $0x140] sm:$0xff]
    %v528 = vld [vmem:[#allocation14 + $0x148] sm:$0xff]
    %v529 = vld [vmem:[#allocation14 + $0x150] sm:$0xff]
    %v530 = vld [vmem:[#allocation14 + $0x158] sm:$0xff]
    %v531 = vld [vmem:[#allocation14 + $0x160] sm:$0xff]
    %v532 = vld [vmem:[#allocation14 + $0x168] sm:$0xff]
    %v533 = vld [vmem:[#allocation14 + $0x170] sm:$0xff]
    %v534 = vld [vmem:[#allocation14 + $0x178] sm:$0xff]
    %v535 = vld [vmem:[#allocation14 + $0x180] sm:$0xff]
    %v536 = vld [vmem:[#allocation14 + $0x188] sm:$0xff]
    %v537 = vld [vmem:[#allocation14 + $0x190] sm:$0xff]
    %v538 = vld [vmem:[#allocation14 + $0x198] sm:$0xff]
    %v539 = vld [vmem:[#allocation14 + $0x1a0] sm:$0xff]
    %v540 = vld [vmem:[#allocation14 + $0x1a8] sm:$0xff]
    %v541 = vld [vmem:[#allocation14 + $0x1b0] sm:$0xff]
    %v542 = vld [vmem:[#allocation14 + $0x1b8] sm:$0xff]
    %v543 = vld [vmem:[#allocation14 + $0x1c0] sm:$0xff]
    %v544 = vld [vmem:[#allocation14 + $0x1c8] sm:$0xff]
    %v545 = vld [vmem:[#allocation14 + $0x1d0] sm:$0xff]
    %v546 = vld [vmem:[#allocation14 + $0x1d8] sm:$0xff]
    %v547 = vld [vmem:[#allocation14 + $0x1e0] sm:$0xff]
    %v548 = vld [vmem:[#allocation14 + $0x1e8] sm:$0xff]
    %v549 = vld [vmem:[#allocation14 + $0x1f0] sm:$0xff]
    %v550 = vld [vmem:[#allocation14 + $0x1f8] sm:$0xff]
    %v551 = vpack.c.bf16 %v381, %v381
    %v552 = vpack.c.bf16 %v382, %v382
    %v553 = vld [vmem:[#allocation14 + $0x200] sm:$0xff]
    %v554 = vld [vmem:[#allocation14 + $0x208] sm:$0xff]
    %v555 = vld [vmem:[#allocation14 + $0x210] sm:$0xff]
    %v556 = vld [vmem:[#allocation14 + $0x218] sm:$0xff]
    %v557 = vld [vmem:[#allocation14 + $0x220] sm:$0xff]
    %v558 = vld [vmem:[#allocation14 + $0x228] sm:$0xff]
    %v559 = vld [vmem:[#allocation14 + $0x230] sm:$0xff]
    %v560 = vld [vmem:[#allocation14 + $0x238] sm:$0xff]
    %v561 = vld [vmem:[#allocation14 + $0x240] sm:$0xff]
    %v562 = vld [vmem:[#allocation14 + $0x248] sm:$0xff]
    %v563 = vld [vmem:[#allocation14 + $0x250] sm:$0xff]
    %v564 = vld [vmem:[#allocation14 + $0x258] sm:$0xff]
    %v565 = vld [vmem:[#allocation14 + $0x260] sm:$0xff]
    %v566 = vld [vmem:[#allocation14 + $0x268] sm:$0xff]
    %v567 = vld [vmem:[#allocation14 + $0x270] sm:$0xff]
    %v568 = vld [vmem:[#allocation14 + $0x278] sm:$0xff]
    %v569 = vld [vmem:[#allocation14 + $0x280] sm:$0xff]
    %v570 = vld [vmem:[#allocation14 + $0x288] sm:$0xff]
    %v571 = vld [vmem:[#allocation14 + $0x290] sm:$0xff]
    %v572 = vld [vmem:[#allocation14 + $0x298] sm:$0xff]
    %v573 = vld [vmem:[#allocation14 + $0x2a0] sm:$0xff]
    %v574 = vld [vmem:[#allocation14 + $0x2a8] sm:$0xff]
    %v575 = vld [vmem:[#allocation14 + $0x2b0] sm:$0xff]
    %v576 = vld [vmem:[#allocation14 + $0x2b8] sm:$0xff]
    %v577 = vld [vmem:[#allocation14 + $0x2c0] sm:$0xff]
    %v578 = vld [vmem:[#allocation14 + $0x2c8] sm:$0xff]
    %v579 = vld [vmem:[#allocation14 + $0x2d0] sm:$0xff]
    %v580 = vld [vmem:[#allocation14 + $0x2d8] sm:$0xff]
    %v581 = vld [vmem:[#allocation14 + $0x2e0] sm:$0xff]
    %v582 = vld [vmem:[#allocation14 + $0x2e8] sm:$0xff]
    %v583 = vld [vmem:[#allocation14 + $0x2f0] sm:$0xff]
    %v584 = vld [vmem:[#allocation14 + $0x2f8] sm:$0xff]
    %v585 = vld [vmem:[#allocation14 + $0x300] sm:$0xff]
    %v586 = vld [vmem:[#allocation14 + $0x308] sm:$0xff]
    %v587 = vld [vmem:[#allocation14 + $0x310] sm:$0xff]
    %v588 = vld [vmem:[#allocation14 + $0x318] sm:$0xff]
    %v589 = vld [vmem:[#allocation14 + $0x320] sm:$0xff]
    %v590 = vld [vmem:[#allocation14 + $0x328] sm:$0xff]
    %v591 = vld [vmem:[#allocation14 + $0x330] sm:$0xff]
    %v592 = vld [vmem:[#allocation14 + $0x338] sm:$0xff]
    %v593 = vld [vmem:[#allocation14 + $0x340] sm:$0xff]
    %v594 = vld [vmem:[#allocation14 + $0x348] sm:$0xff]
    %v595 = vld [vmem:[#allocation14 + $0x350] sm:$0xff]
    %v596 = vld [vmem:[#allocation14 + $0x358] sm:$0xff]
    %v597 = vld [vmem:[#allocation14 + $0x360] sm:$0xff]
    %v598 = vld [vmem:[#allocation14 + $0x368] sm:$0xff]
    %v599 = vld [vmem:[#allocation14 + $0x370] sm:$0xff]
    %v600 = vld [vmem:[#allocation14 + $0x378] sm:$0xff]
    %v601 = vld [vmem:[#allocation14 + $0x380] sm:$0xff]
    %v602 = vld [vmem:[#allocation14 + $0x388] sm:$0xff]
    %v603 = vld [vmem:[#allocation14 + $0x390] sm:$0xff]
    %v604 = vld [vmem:[#allocation14 + $0x398] sm:$0xff]
    %v605 = vld [vmem:[#allocation14 + $0x3a0] sm:$0xff]
    %v606 = vld [vmem:[#allocation14 + $0x3a8] sm:$0xff]
    %v607 = vld [vmem:[#allocation14 + $0x3b0] sm:$0xff]
    %v608 = vld [vmem:[#allocation14 + $0x3b8] sm:$0xff]
    %v609 = vld [vmem:[#allocation14 + $0x3c0] sm:$0xff]
    %v610 = vld [vmem:[#allocation14 + $0x3c8] sm:$0xff]
    %v611 = vld [vmem:[#allocation14 + $0x3d0] sm:$0xff]
    %v612 = vld [vmem:[#allocation14 + $0x3d8] sm:$0xff]
    %v613 = vld [vmem:[#allocation14 + $0x3e0] sm:$0xff]
    %v614 = vld [vmem:[#allocation14 + $0x3e8] sm:$0xff]
    %v615 = vld [vmem:[#allocation14 + $0x3f0] sm:$0xff]
    %v616 = vld [vmem:[#allocation14 + $0x3f8] sm:$0xff]
    %v681 = vunpack.c.l.b16 %v553
    %v682 = vunpack.c.h.b16 %v553
    %v683 = vunpack.c.l.b16 %v554
    %v684 = vunpack.c.h.b16 %v554
    %v685 = vunpack.c.l.b16 %v555
    %v686 = vunpack.c.h.b16 %v555
    %v687 = vunpack.c.l.b16 %v556
    %v688 = vunpack.c.h.b16 %v556
    %v689 = vunpack.c.l.b16 %v557
    %v690 = vunpack.c.h.b16 %v557
    %v691 = vunpack.c.l.b16 %v558
    %v692 = vunpack.c.h.b16 %v558
    %v693 = vunpack.c.l.b16 %v559
    %v694 = vunpack.c.h.b16 %v559
    %v695 = vunpack.c.l.b16 %v560
    %v696 = vunpack.c.h.b16 %v560
    %v697 = vunpack.c.l.b16 %v561
    %v698 = vunpack.c.h.b16 %v561
    %v699 = vunpack.c.l.b16 %v562
    %v700 = vunpack.c.h.b16 %v562
    %v701 = vunpack.c.l.b16 %v563
    %v702 = vunpack.c.h.b16 %v563
    %v703 = vunpack.c.l.b16 %v564
    %v704 = vunpack.c.h.b16 %v564
    %v705 = vunpack.c.l.b16 %v565
    %v706 = vunpack.c.h.b16 %v565
    %v707 = vunpack.c.l.b16 %v566
    %v708 = vunpack.c.h.b16 %v566
    %v709 = vunpack.c.l.b16 %v567
    %v710 = vunpack.c.h.b16 %v567
    %v711 = vunpack.c.l.b16 %v568
    %v712 = vunpack.c.h.b16 %v568
    %v713 = vunpack.c.l.b16 %v569
    %v714 = vunpack.c.h.b16 %v569
    %v715 = vunpack.c.l.b16 %v570
    %v716 = vunpack.c.h.b16 %v570
    %v717 = vunpack.c.l.b16 %v571
    %v718 = vunpack.c.h.b16 %v571
    %v719 = vunpack.c.l.b16 %v572
    %v720 = vunpack.c.h.b16 %v572
    %v721 = vunpack.c.l.b16 %v573
    %v722 = vunpack.c.h.b16 %v573
    %v723 = vunpack.c.l.b16 %v574
    %v724 = vunpack.c.h.b16 %v574
    %v725 = vunpack.c.l.b16 %v575
    %v726 = vunpack.c.h.b16 %v575
    %v727 = vunpack.c.l.b16 %v576
    %v728 = vunpack.c.h.b16 %v576
    %v729 = vunpack.c.l.b16 %v577
    %v730 = vunpack.c.h.b16 %v577
    %v731 = vunpack.c.l.b16 %v578
    %v732 = vunpack.c.h.b16 %v578
    %v733 = vunpack.c.l.b16 %v579
    %v734 = vunpack.c.h.b16 %v579
    %v735 = vunpack.c.l.b16 %v580
    %v736 = vunpack.c.h.b16 %v580
    %v737 = vunpack.c.l.b16 %v581
    %v738 = vunpack.c.h.b16 %v581
    %v739 = vunpack.c.l.b16 %v582
    %v740 = vunpack.c.h.b16 %v582
    %v741 = vunpack.c.l.b16 %v583
    %v742 = vunpack.c.h.b16 %v583
    %v743 = vunpack.c.l.b16 %v584
    %v744 = vunpack.c.h.b16 %v584
    %v745 = vunpack.c.l.b16 %v585
    %v746 = vunpack.c.h.b16 %v585
    %v747 = vunpack.c.l.b16 %v586
    %v748 = vunpack.c.h.b16 %v586
    %v749 = vunpack.c.l.b16 %v587
    %v750 = vunpack.c.h.b16 %v587
    %v751 = vunpack.c.l.b16 %v588
    %v752 = vunpack.c.h.b16 %v588
    %v753 = vunpack.c.l.b16 %v589
    %v754 = vunpack.c.h.b16 %v589
    %v755 = vunpack.c.l.b16 %v590
    %v756 = vunpack.c.h.b16 %v590
    %v757 = vunpack.c.l.b16 %v591
    %v758 = vunpack.c.h.b16 %v591
    %v759 = vunpack.c.l.b16 %v592
    %v760 = vunpack.c.h.b16 %v592
    %v761 = vunpack.c.l.b16 %v593
    %v762 = vunpack.c.h.b16 %v593
    %v763 = vunpack.c.l.b16 %v594
    %v764 = vunpack.c.h.b16 %v594
    %v765 = vunpack.c.l.b16 %v595
    %v766 = vunpack.c.h.b16 %v595
    %v767 = vunpack.c.l.b16 %v596
    %v768 = vunpack.c.h.b16 %v596
    %v769 = vunpack.c.l.b16 %v597
    %v770 = vunpack.c.h.b16 %v597
    %v771 = vunpack.c.l.b16 %v598
    %v772 = vunpack.c.h.b16 %v598
    %v773 = vunpack.c.l.b16 %v599
    %v774 = vunpack.c.h.b16 %v599
    %v775 = vunpack.c.l.b16 %v600
    %v776 = vunpack.c.h.b16 %v600
    %v777 = vunpack.c.l.b16 %v601
    %v778 = vunpack.c.h.b16 %v601
    %v779 = vunpack.c.l.b16 %v602
    %v780 = vunpack.c.h.b16 %v602
    %v781 = vunpack.c.l.b16 %v603
    %v782 = vunpack.c.h.b16 %v603
    %v783 = vunpack.c.l.b16 %v604
    %v784 = vunpack.c.h.b16 %v604
    %v785 = vunpack.c.l.b16 %v605
    %v786 = vunpack.c.h.b16 %v605
    %v787 = vunpack.c.l.b16 %v606
    %v788 = vunpack.c.h.b16 %v606
    %v789 = vunpack.c.l.b16 %v607
    %v790 = vunpack.c.h.b16 %v607
    %v791 = vunpack.c.l.b16 %v608
    %v792 = vunpack.c.h.b16 %v608
    %v793 = vunpack.c.l.b16 %v609
    %v794 = vunpack.c.h.b16 %v609
    %v795 = vunpack.c.l.b16 %v610
    %v796 = vunpack.c.h.b16 %v610
    %v797 = vunpack.c.l.b16 %v611
    %v798 = vunpack.c.h.b16 %v611
    %v799 = vunpack.c.l.b16 %v612
    %v800 = vunpack.c.h.b16 %v612
    %v801 = vunpack.c.l.b16 %v613
    %v802 = vunpack.c.h.b16 %v613
    %v803 = vunpack.c.l.b16 %v614
    %v804 = vunpack.c.h.b16 %v614
    %v805 = vunpack.c.l.b16 %v615
    %v806 = vunpack.c.h.b16 %v615
    %v807 = vunpack.c.l.b16 %v616
    %v808 = vunpack.c.h.b16 %v616
    %v809 = vpack.c.b16 %v685, %v681
    %v810 = vpack.c.b16 %v686, %v682
    %v811 = vpack.c.b16 %v687, %v683
    %v812 = vpack.c.b16 %v688, %v684
    %v813 = vpack.c.b16 %v693, %v689
    %v814 = vpack.c.b16 %v694, %v690
    %v815 = vpack.c.b16 %v695, %v691
    %v816 = vpack.c.b16 %v696, %v692
    %v817 = vpack.c.b16 %v701, %v697
    %v818 = vpack.c.b16 %v702, %v698
    %v819 = vpack.c.b16 %v703, %v699
    %v820 = vpack.c.b16 %v704, %v700
    %v821 = vpack.c.b16 %v709, %v705
    %v822 = vpack.c.b16 %v710, %v706
    %v823 = vpack.c.b16 %v711, %v707
    %v824 = vpack.c.b16 %v712, %v708
    %v825 = vpack.c.b16 %v717, %v713
    %v826 = vpack.c.b16 %v718, %v714
    %v827 = vpack.c.b16 %v719, %v715
    %v828 = vpack.c.b16 %v720, %v716
    %v829 = vpack.c.b16 %v725, %v721
    %v830 = vpack.c.b16 %v726, %v722
    %v831 = vpack.c.b16 %v727, %v723
    %v832 = vpack.c.b16 %v728, %v724
    %v833 = vpack.c.b16 %v733, %v729
    %v834 = vpack.c.b16 %v734, %v730
    %v835 = vpack.c.b16 %v735, %v731
    %v836 = vpack.c.b16 %v736, %v732
    %v837 = vpack.c.b16 %v741, %v737
    %v838 = vpack.c.b16 %v742, %v738
    %v839 = vpack.c.b16 %v743, %v739
    %v840 = vpack.c.b16 %v744, %v740
    %v841 = vpack.c.b16 %v749, %v745
    %v842 = vpack.c.b16 %v750, %v746
    %v843 = vpack.c.b16 %v751, %v747
    %v844 = vpack.c.b16 %v752, %v748
    %v845 = vpack.c.b16 %v757, %v753
    %v846 = vpack.c.b16 %v758, %v754
    %v847 = vpack.c.b16 %v759, %v755
    %v848 = vpack.c.b16 %v760, %v756
    %v849 = vpack.c.b16 %v765, %v761
    %v850 = vpack.c.b16 %v766, %v762
    %v851 = vpack.c.b16 %v767, %v763
    %v852 = vpack.c.b16 %v768, %v764
    %v853 = vpack.c.b16 %v773, %v769
    %v854 = vpack.c.b16 %v774, %v770
    %v855 = vpack.c.b16 %v775, %v771
    %v856 = vpack.c.b16 %v776, %v772
    %v857 = vpack.c.b16 %v781, %v777
    %v858 = vpack.c.b16 %v782, %v778
    %v859 = vpack.c.b16 %v783, %v779
    %v860 = vpack.c.b16 %v784, %v780
    %v861 = vpack.c.b16 %v789, %v785
    %v862 = vpack.c.b16 %v790, %v786
    %v863 = vpack.c.b16 %v791, %v787
    %v864 = vpack.c.b16 %v792, %v788
    %v865 = vpack.c.b16 %v797, %v793
    %v866 = vpack.c.b16 %v798, %v794
    %v867 = vpack.c.b16 %v799, %v795
    %v868 = vpack.c.b16 %v800, %v796
    %v869 = vpack.c.b16 %v805, %v801
    %v870 = vpack.c.b16 %v806, %v802
    %v871 = vpack.c.b16 %v807, %v803
    %v872 = vpack.c.b16 %v808, %v804
    %937 = vmatprep.subr.bf16.mxu0 %v810
    %938 = vmatpush1.bf16.msra.mxu0 %v809
    %939 = vmatprep.subr.bf16.mxu0 %v814
    %940 = vmatpush1.bf16.msra.mxu0 %v813
    %941 = vmatprep.subr.bf16.mxu0 %v818
    %942 = vmatpush1.bf16.msra.mxu0 %v817
    %943 = vmatprep.subr.bf16.mxu0 %v822
    %944 = vmatpush1.bf16.msra.mxu0 %v821
    %945 = vmatprep.subr.bf16.mxu0 %v826
    %946 = vmatpush1.bf16.msra.mxu0 %v825
    %947 = vmatprep.subr.bf16.mxu0 %v830
    %948 = vmatpush1.bf16.msra.mxu0 %v829
    %949 = vmatprep.subr.bf16.mxu0 %v834
    %950 = vmatpush1.bf16.msra.mxu0 %v833
    %951 = vmatprep.subr.bf16.mxu0 %v838
    %952 = vmatpush1.bf16.msra.mxu0 %v837
    %953 = vmatprep.subr.bf16.mxu0 %v842
    %954 = vmatpush1.bf16.msra.mxu0 %v841
    %955 = vmatprep.subr.bf16.mxu0 %v846
    %956 = vmatpush1.bf16.msra.mxu0 %v845
    %957 = vmatprep.subr.bf16.mxu0 %v850
    %958 = vmatpush1.bf16.msra.mxu0 %v849
    %959 = vmatprep.subr.bf16.mxu0 %v854
    %960 = vmatpush1.bf16.msra.mxu0 %v853
    %961 = vmatprep.subr.bf16.mxu0 %v858
    %962 = vmatpush1.bf16.msra.mxu0 %v857
    %963 = vmatprep.subr.bf16.mxu0 %v862
    %964 = vmatpush1.bf16.msra.mxu0 %v861
    %965 = vmatprep.subr.bf16.mxu0 %v866
    %966 = vmatpush1.bf16.msra.mxu0 %v865
    %967 = vmatprep.subr.bf16.mxu0 %v870
    %968 = vmatpush1.bf16.msra.mxu0 %v869
    %969 = vmatprep.mubr.bf16.mxu0 %v552
    %970 = vmatmul.mubr.bf16.gmra.mrb[0].mxu0 %v551
    %v971 = vpop.f32.mrb[0].mxu0
    %v972 = vadd.f32 0.0, %v971
    %v973 = vpop.f32.mrb[0].mxu0
    %v974 = vadd.f32 0.0, %v973
    %v975 = vpop.f32.mrb[0].mxu0
    %v976 = vpop.f32.mrb[0].mxu0
    %977 = vdwg.mxu0
    %978 = vmatprep.subr.bf16.mxu0 %v812
    %979 = vmatpush1.bf16.msra.mxu0 %v811
    %980 = vmatprep.subr.bf16.mxu0 %v816
    %981 = vmatpush1.bf16.msra.mxu0 %v815
    %982 = vmatprep.subr.bf16.mxu0 %v820
    %983 = vmatpush1.bf16.msra.mxu0 %v819
    %984 = vmatprep.subr.bf16.mxu0 %v824
    %985 = vmatpush1.bf16.msra.mxu0 %v823
    %986 = vmatprep.subr.bf16.mxu0 %v828
    %987 = vmatpush1.bf16.msra.mxu0 %v827
    %988 = vmatprep.subr.bf16.mxu0 %v832
    %989 = vmatpush1.bf16.msra.mxu0 %v831
    %990 = vmatprep.subr.bf16.mxu0 %v836
    %991 = vmatpush1.bf16.msra.mxu0 %v835
    %992 = vmatprep.subr.bf16.mxu0 %v840
    %993 = vmatpush1.bf16.msra.mxu0 %v839
    %994 = vmatprep.subr.bf16.mxu0 %v844
    %995 = vmatpush1.bf16.msra.mxu0 %v843
    %996 = vmatprep.subr.bf16.mxu0 %v848
    %997 = vmatpush1.bf16.msra.mxu0 %v847
    %998 = vmatprep.subr.bf16.mxu0 %v852
    %999 = vmatpush1.bf16.msra.mxu0 %v851
    %1000 = vmatprep.subr.bf16.mxu0 %v856
    %1001 = vmatpush1.bf16.msra.mxu0 %v855
    %1002 = vmatprep.subr.bf16.mxu0 %v860
    %1003 = vmatpush1.bf16.msra.mxu0 %v859
    %1004 = vmatprep.subr.bf16.mxu0 %v864
    %1005 = vmatpush1.bf16.msra.mxu0 %v863
    %1006 = vmatprep.subr.bf16.mxu0 %v868
    %1007 = vmatpush1.bf16.msra.mxu0 %v867
    %1008 = vmatprep.subr.bf16.mxu0 %v872
    %1009 = vmatpush1.bf16.msra.mxu0 %v871
    %1010 = vmatprep.mubr.bf16.mxu0 %v552
    %1011 = vmatmul.mubr.bf16.gmra.mrb[0].mxu0 %v551
    %v1012 = vpop.f32.mrb[0].mxu0
    %v1013 = vadd.f32 0.0, %v1012
    %v1014 = vpop.f32.mrb[0].mxu0
    %v1015 = vadd.f32 0.0, %v1014
    %v1016 = vpop.f32.mrb[0].mxu0
    %v1017 = vpop.f32.mrb[0].mxu0
    %1018 = vdwg.mxu0
    %v1083 = vunpack.c.l.b16 %v487
    %v1084 = vunpack.c.h.b16 %v487
    %v1085 = vunpack.c.l.b16 %v488
    %v1086 = vunpack.c.h.b16 %v488
    %v1087 = vunpack.c.l.b16 %v489
    %v1088 = vunpack.c.h.b16 %v489
    %v1089 = vunpack.c.l.b16 %v490
    %v1090 = vunpack.c.h.b16 %v490
    %v1091 = vunpack.c.l.b16 %v491
    %v1092 = vunpack.c.h.b16 %v491
    %v1093 = vunpack.c.l.b16 %v492
    %v1094 = vunpack.c.h.b16 %v492
    %v1095 = vunpack.c.l.b16 %v493
    %v1096 = vunpack.c.h.b16 %v493
    %v1097 = vunpack.c.l.b16 %v494
    %v1098 = vunpack.c.h.b16 %v494
    %v1099 = vunpack.c.l.b16 %v495
    %v1100 = vunpack.c.h.b16 %v495
    %v1101 = vunpack.c.l.b16 %v496
    %v1102 = vunpack.c.h.b16 %v496
    %v1103 = vunpack.c.l.b16 %v497
    %v1104 = vunpack.c.h.b16 %v497
    %v1105 = vunpack.c.l.b16 %v498
    %v1106 = vunpack.c.h.b16 %v498
    %v1107 = vunpack.c.l.b16 %v499
    %v1108 = vunpack.c.h.b16 %v499
    %v1109 = vunpack.c.l.b16 %v500
    %v1110 = vunpack.c.h.b16 %v500
    %v1111 = vunpack.c.l.b16 %v501
    %v1112 = vunpack.c.h.b16 %v501
    %v1113 = vunpack.c.l.b16 %v502
    %v1114 = vunpack.c.h.b16 %v502
    %v1115 = vunpack.c.l.b16 %v503
    %v1116 = vunpack.c.h.b16 %v503
    %v1117 = vunpack.c.l.b16 %v504
    %v1118 = vunpack.c.h.b16 %v504
    %v1119 = vunpack.c.l.b16 %v505
    %v1120 = vunpack.c.h.b16 %v505
    %v1121 = vunpack.c.l.b16 %v506
    %v1122 = vunpack.c.h.b16 %v506
    %v1123 = vunpack.c.l.b16 %v507
    %v1124 = vunpack.c.h.b16 %v507
    %v1125 = vunpack.c.l.b16 %v508
    %v1126 = vunpack.c.h.b16 %v508
    %v1127 = vunpack.c.l.b16 %v509
    %v1128 = vunpack.c.h.b16 %v509
    %v1129 = vunpack.c.l.b16 %v510
    %v1130 = vunpack.c.h.b16 %v510
    %v1131 = vunpack.c.l.b16 %v511
    %v1132 = vunpack.c.h.b16 %v511
    %v1133 = vunpack.c.l.b16 %v512
    %v1134 = vunpack.c.h.b16 %v512
    %v1135 = vunpack.c.l.b16 %v513
    %v1136 = vunpack.c.h.b16 %v513
    %v1137 = vunpack.c.l.b16 %v514
    %v1138 = vunpack.c.h.b16 %v514
    %v1139 = vunpack.c.l.b16 %v515
    %v1140 = vunpack.c.h.b16 %v515
    %v1141 = vunpack.c.l.b16 %v516
    %v1142 = vunpack.c.h.b16 %v516
    %v1143 = vunpack.c.l.b16 %v517
    %v1144 = vunpack.c.h.b16 %v517
    %v1145 = vunpack.c.l.b16 %v518
    %v1146 = vunpack.c.h.b16 %v518
    %v1147 = vunpack.c.l.b16 %v519
    %v1148 = vunpack.c.h.b16 %v519
    %v1149 = vunpack.c.l.b16 %v520
    %v1150 = vunpack.c.h.b16 %v520
    %v1151 = vunpack.c.l.b16 %v521
    %v1152 = vunpack.c.h.b16 %v521
    %v1153 = vunpack.c.l.b16 %v522
    %v1154 = vunpack.c.h.b16 %v522
    %v1155 = vunpack.c.l.b16 %v523
    %v1156 = vunpack.c.h.b16 %v523
    %v1157 = vunpack.c.l.b16 %v524
    %v1158 = vunpack.c.h.b16 %v524
    %v1159 = vunpack.c.l.b16 %v525
    %v1160 = vunpack.c.h.b16 %v525
    %v1161 = vunpack.c.l.b16 %v526
    %v1162 = vunpack.c.h.b16 %v526
    %v1163 = vunpack.c.l.b16 %v527
    %v1164 = vunpack.c.h.b16 %v527
    %v1165 = vunpack.c.l.b16 %v528
    %v1166 = vunpack.c.h.b16 %v528
    %v1167 = vunpack.c.l.b16 %v529
    %v1168 = vunpack.c.h.b16 %v529
    %v1169 = vunpack.c.l.b16 %v530
    %v1170 = vunpack.c.h.b16 %v530
    %v1171 = vunpack.c.l.b16 %v531
    %v1172 = vunpack.c.h.b16 %v531
    %v1173 = vunpack.c.l.b16 %v532
    %v1174 = vunpack.c.h.b16 %v532
    %v1175 = vunpack.c.l.b16 %v533
    %v1176 = vunpack.c.h.b16 %v533
    %v1177 = vunpack.c.l.b16 %v534
    %v1178 = vunpack.c.h.b16 %v534
    %v1179 = vunpack.c.l.b16 %v535
    %v1180 = vunpack.c.h.b16 %v535
    %v1181 = vunpack.c.l.b16 %v536
    %v1182 = vunpack.c.h.b16 %v536
    %v1183 = vunpack.c.l.b16 %v537
    %v1184 = vunpack.c.h.b16 %v537
    %v1185 = vunpack.c.l.b16 %v538
    %v1186 = vunpack.c.h.b16 %v538
    %v1187 = vunpack.c.l.b16 %v539
    %v1188 = vunpack.c.h.b16 %v539
    %v1189 = vunpack.c.l.b16 %v540
    %v1190 = vunpack.c.h.b16 %v540
    %v1191 = vunpack.c.l.b16 %v541
    %v1192 = vunpack.c.h.b16 %v541
    %v1193 = vunpack.c.l.b16 %v542
    %v1194 = vunpack.c.h.b16 %v542
    %v1195 = vunpack.c.l.b16 %v543
    %v1196 = vunpack.c.h.b16 %v543
    %v1197 = vunpack.c.l.b16 %v544
    %v1198 = vunpack.c.h.b16 %v544
    %v1199 = vunpack.c.l.b16 %v545
    %v1200 = vunpack.c.h.b16 %v545
    %v1201 = vunpack.c.l.b16 %v546
    %v1202 = vunpack.c.h.b16 %v546
    %v1203 = vunpack.c.l.b16 %v547
    %v1204 = vunpack.c.h.b16 %v547
    %v1205 = vunpack.c.l.b16 %v548
    %v1206 = vunpack.c.h.b16 %v548
    %v1207 = vunpack.c.l.b16 %v549
    %v1208 = vunpack.c.h.b16 %v549
    %v1209 = vunpack.c.l.b16 %v550
    %v1210 = vunpack.c.h.b16 %v550
    %v1211 = vpack.c.b16 %v1087, %v1083
    %v1212 = vpack.c.b16 %v1088, %v1084
    %v1213 = vpack.c.b16 %v1089, %v1085
    %v1214 = vpack.c.b16 %v1090, %v1086
    %v1215 = vpack.c.b16 %v1095, %v1091
    %v1216 = vpack.c.b16 %v1096, %v1092
    %v1217 = vpack.c.b16 %v1097, %v1093
    %v1218 = vpack.c.b16 %v1098, %v1094
    %v1219 = vpack.c.b16 %v1103, %v1099
    %v1220 = vpack.c.b16 %v1104, %v1100
    %v1221 = vpack.c.b16 %v1105, %v1101
    %v1222 = vpack.c.b16 %v1106, %v1102
    %v1223 = vpack.c.b16 %v1111, %v1107
    %v1224 = vpack.c.b16 %v1112, %v1108
    %v1225 = vpack.c.b16 %v1113, %v1109
    %v1226 = vpack.c.b16 %v1114, %v1110
    %v1227 = vpack.c.b16 %v1119, %v1115
    %v1228 = vpack.c.b16 %v1120, %v1116
    %v1229 = vpack.c.b16 %v1121, %v1117
    %v1230 = vpack.c.b16 %v1122, %v1118
    %v1231 = vpack.c.b16 %v1127, %v1123
    %v1232 = vpack.c.b16 %v1128, %v1124
    %v1233 = vpack.c.b16 %v1129, %v1125
    %v1234 = vpack.c.b16 %v1130, %v1126
    %v1235 = vpack.c.b16 %v1135, %v1131
    %v1236 = vpack.c.b16 %v1136, %v1132
    %v1237 = vpack.c.b16 %v1137, %v1133
    %v1238 = vpack.c.b16 %v1138, %v1134
    %v1239 = vpack.c.b16 %v1143, %v1139
    %v1240 = vpack.c.b16 %v1144, %v1140
    %v1241 = vpack.c.b16 %v1145, %v1141
    %v1242 = vpack.c.b16 %v1146, %v1142
    %v1243 = vpack.c.b16 %v1151, %v1147
    %v1244 = vpack.c.b16 %v1152, %v1148
    %v1245 = vpack.c.b16 %v1153, %v1149
    %v1246 = vpack.c.b16 %v1154, %v1150
    %v1247 = vpack.c.b16 %v1159, %v1155
    %v1248 = vpack.c.b16 %v1160, %v1156
    %v1249 = vpack.c.b16 %v1161, %v1157
    %v1250 = vpack.c.b16 %v1162, %v1158
    %v1251 = vpack.c.b16 %v1167, %v1163
    %v1252 = vpack.c.b16 %v1168, %v1164
    %v1253 = vpack.c.b16 %v1169, %v1165
    %v1254 = vpack.c.b16 %v1170, %v1166
    %v1255 = vpack.c.b16 %v1175, %v1171
    %v1256 = vpack.c.b16 %v1176, %v1172
    %v1257 = vpack.c.b16 %v1177, %v1173
    %v1258 = vpack.c.b16 %v1178, %v1174
    %v1259 = vpack.c.b16 %v1183, %v1179
    %v1260 = vpack.c.b16 %v1184, %v1180
    %v1261 = vpack.c.b16 %v1185, %v1181
    %v1262 = vpack.c.b16 %v1186, %v1182
    %v1263 = vpack.c.b16 %v1191, %v1187
    %v1264 = vpack.c.b16 %v1192, %v1188
    %v1265 = vpack.c.b16 %v1193, %v1189
    %v1266 = vpack.c.b16 %v1194, %v1190
    %v1267 = vpack.c.b16 %v1199, %v1195
    %v1268 = vpack.c.b16 %v1200, %v1196
    %v1269 = vpack.c.b16 %v1201, %v1197
    %v1270 = vpack.c.b16 %v1202, %v1198
    %v1271 = vpack.c.b16 %v1207, %v1203
    %v1272 = vpack.c.b16 %v1208, %v1204
    %v1273 = vpack.c.b16 %v1209, %v1205
    %v1274 = vpack.c.b16 %v1210, %v1206
    %1339 = vmatprep.subr.bf16.mxu0 %v1212
    %1340 = vmatpush1.bf16.msra.mxu0 %v1211
    %1341 = vmatprep.subr.bf16.mxu0 %v1216
    %1342 = vmatpush1.bf16.msra.mxu0 %v1215
    %1343 = vmatprep.subr.bf16.mxu0 %v1220
    %1344 = vmatpush1.bf16.msra.mxu0 %v1219
    %1345 = vmatprep.subr.bf16.mxu0 %v1224
    %1346 = vmatpush1.bf16.msra.mxu0 %v1223
    %1347 = vmatprep.subr.bf16.mxu0 %v1228
    %1348 = vmatpush1.bf16.msra.mxu0 %v1227
    %1349 = vmatprep.subr.bf16.mxu0 %v1232
    %1350 = vmatpush1.bf16.msra.mxu0 %v1231
    %1351 = vmatprep.subr.bf16.mxu0 %v1236
    %1352 = vmatpush1.bf16.msra.mxu0 %v1235
    %1353 = vmatprep.subr.bf16.mxu0 %v1240
    %1354 = vmatpush1.bf16.msra.mxu0 %v1239
    %1355 = vmatprep.subr.bf16.mxu0 %v1244
    %1356 = vmatpush1.bf16.msra.mxu0 %v1243
    %1357 = vmatprep.subr.bf16.mxu0 %v1248
    %1358 = vmatpush1.bf16.msra.mxu0 %v1247
    %1359 = vmatprep.subr.bf16.mxu0 %v1252
    %1360 = vmatpush1.bf16.msra.mxu0 %v1251
    %1361 = vmatprep.subr.bf16.mxu0 %v1256
    %1362 = vmatpush1.bf16.msra.mxu0 %v1255
    %1363 = vmatprep.subr.bf16.mxu0 %v1260
    %1364 = vmatpush1.bf16.msra.mxu0 %v1259
    %1365 = vmatprep.subr.bf16.mxu0 %v1264
    %1366 = vmatpush1.bf16.msra.mxu0 %v1263
    %1367 = vmatprep.subr.bf16.mxu0 %v1268
    %1368 = vmatpush1.bf16.msra.mxu0 %v1267
    %1369 = vmatprep.subr.bf16.mxu0 %v1272
    %1370 = vmatpush1.bf16.msra.mxu0 %v1271
    %1371 = vmatprep.mubr.bf16.mxu0 %v486
    %1372 = vmatmul.mubr.bf16.gmra.mrb[0].mxu0 %v485
    %v1373 = vpop.f32.mrb[0].mxu0
    %v1374 = vadd.f32 %v972, %v1373
    %v1375 = vpop.f32.mrb[0].mxu0
    %v1376 = vadd.f32 %v974, %v1375
    %v1377 = vpop.f32.mrb[0].mxu0
    %v1378 = vpop.f32.mrb[0].mxu0
    %1379 = vdwg.mxu0
    %1380 = vmatprep.subr.bf16.mxu0 %v1214
    %1381 = vmatpush1.bf16.msra.mxu0 %v1213
    %1382 = vmatprep.subr.bf16.mxu0 %v1218
    %1383 = vmatpush1.bf16.msra.mxu0 %v1217
    %1384 = vmatprep.subr.bf16.mxu0 %v1222
    %1385 = vmatpush1.bf16.msra.mxu0 %v1221
    %1386 = vmatprep.subr.bf16.mxu0 %v1226
    %1387 = vmatpush1.bf16.msra.mxu0 %v1225
    %1388 = vmatprep.subr.bf16.mxu0 %v1230
    %1389 = vmatpush1.bf16.msra.mxu0 %v1229
    %1390 = vmatprep.subr.bf16.mxu0 %v1234
    %1391 = vmatpush1.bf16.msra.mxu0 %v1233
    %1392 = vmatprep.subr.bf16.mxu0 %v1238
    %1393 = vmatpush1.bf16.msra.mxu0 %v1237
    %1394 = vmatprep.subr.bf16.mxu0 %v1242
    %1395 = vmatpush1.bf16.msra.mxu0 %v1241
    %1396 = vmatprep.subr.bf16.mxu0 %v1246
    %1397 = vmatpush1.bf16.msra.mxu0 %v1245
    %1398 = vmatprep.subr.bf16.mxu0 %v1250
    %1399 = vmatpush1.bf16.msra.mxu0 %v1249
    %1400 = vmatprep.subr.bf16.mxu0 %v1254
    %1401 = vmatpush1.bf16.msra.mxu0 %v1253
    %1402 = vmatprep.subr.bf16.mxu0 %v1258
    %1403 = vmatpush1.bf16.msra.mxu0 %v1257
    %1404 = vmatprep.subr.bf16.mxu0 %v1262
    %1405 = vmatpush1.bf16.msra.mxu0 %v1261
    %1406 = vmatprep.subr.bf16.mxu0 %v1266
    %1407 = vmatpush1.bf16.msra.mxu0 %v1265
    %1408 = vmatprep.subr.bf16.mxu0 %v1270
    %1409 = vmatpush1.bf16.msra.mxu0 %v1269
    %1410 = vmatprep.subr.bf16.mxu0 %v1274
    %1411 = vmatpush1.bf16.msra.mxu0 %v1273
    %1412 = vmatprep.mubr.bf16.mxu0 %v486
    %1413 = vmatmul.mubr.bf16.gmra.mrb[0].mxu0 %v485
    %v1414 = vpop.f32.mrb[0].mxu0
    %v1415 = vadd.f32 %v1013, %v1414
    %v1416 = vpop.f32.mrb[0].mxu0
    %v1417 = vadd.f32 %v1015, %v1416
    %v1418 = vpop.f32.mrb[0].mxu0
    %v1419 = vpop.f32.mrb[0].mxu0
    %1420 = vdwg.mxu0
    %v1421 = vpack.c.bf16 %v477, %v477
    %v1422 = vpack.c.bf16 %v478, %v478
    %v1423 = vld [vmem:[#allocation14 + $0x400] sm:$0xff]
    %v1424 = vld [vmem:[#allocation14 + $0x408] sm:$0xff]
    %v1425 = vld [vmem:[#allocation14 + $0x410] sm:$0xff]
    %v1426 = vld [vmem:[#allocation14 + $0x418] sm:$0xff]
    %v1427 = vld [vmem:[#allocation14 + $0x420] sm:$0xff]
    %v1428 = vld [vmem:[#allocation14 + $0x428] sm:$0xff]
    %v1429 = vld [vmem:[#allocation14 + $0x430] sm:$0xff]
    %v1430 = vld [vmem:[#allocation14 + $0x438] sm:$0xff]
    %v1431 = vld [vmem:[#allocation14 + $0x440] sm:$0xff]
    %v1432 = vld [vmem:[#allocation14 + $0x448] sm:$0xff]
    %v1433 = vld [vmem:[#allocation14 + $0x450] sm:$0xff]
    %v1434 = vld [vmem:[#allocation14 + $0x458] sm:$0xff]
    %v1435 = vld [vmem:[#allocation14 + $0x460] sm:$0xff]
    %v1436 = vld [vmem:[#allocation14 + $0x468] sm:$0xff]
    %v1437 = vld [vmem:[#allocation14 + $0x470] sm:$0xff]
    %v1438 = vld [vmem:[#allocation14 + $0x478] sm:$0xff]
    %v1439 = vld [vmem:[#allocation14 + $0x480] sm:$0xff]
    %v1440 = vld [vmem:[#allocation14 + $0x488] sm:$0xff]
    %v1441 = vld [vmem:[#allocation14 + $0x490] sm:$0xff]
    %v1442 = vld [vmem:[#allocation14 + $0x498] sm:$0xff]
    %v1443 = vld [vmem:[#allocation14 + $0x4a0] sm:$0xff]
    %v1444 = vld [vmem:[#allocation14 + $0x4a8] sm:$0xff]
    %v1445 = vld [vmem:[#allocation14 + $0x4b0] sm:$0xff]
    %v1446 = vld [vmem:[#allocation14 + $0x4b8] sm:$0xff]
    %v1447 = vld [vmem:[#allocation14 + $0x4c0] sm:$0xff]
    %v1448 = vld [vmem:[#allocation14 + $0x4c8] sm:$0xff]
    %v1449 = vld [vmem:[#allocation14 + $0x4d0] sm:$0xff]
    %v1450 = vld [vmem:[#allocation14 + $0x4d8] sm:$0xff]
    %v1451 = vld [vmem:[#allocation14 + $0x4e0] sm:$0xff]
    %v1452 = vld [vmem:[#allocation14 + $0x4e8] sm:$0xff]
    %v1453 = vld [vmem:[#allocation14 + $0x4f0] sm:$0xff]
    %v1454 = vld [vmem:[#allocation14 + $0x4f8] sm:$0xff]
    %v1455 = vld [vmem:[#allocation14 + $0x500] sm:$0xff]
    %v1456 = vld [vmem:[#allocation14 + $0x508] sm:$0xff]
    %v1457 = vld [vmem:[#allocation14 + $0x510] sm:$0xff]
    %v1458 = vld [vmem:[#allocation14 + $0x518] sm:$0xff]
    %v1459 = vld [vmem:[#allocation14 + $0x520] sm:$0xff]
    %v1460 = vld [vmem:[#allocation14 + $0x528] sm:$0xff]
    %v1461 = vld [vmem:[#allocation14 + $0x530] sm:$0xff]
    %v1462 = vld [vmem:[#allocation14 + $0x538] sm:$0xff]
    %v1463 = vld [vmem:[#allocation14 + $0x540] sm:$0xff]
    %v1464 = vld [vmem:[#allocation14 + $0x548] sm:$0xff]
    %v1465 = vld [vmem:[#allocation14 + $0x550] sm:$0xff]
    %v1466 = vld [vmem:[#allocation14 + $0x558] sm:$0xff]
    %v1467 = vld [vmem:[#allocation14 + $0x560] sm:$0xff]
    %v1468 = vld [vmem:[#allocation14 + $0x568] sm:$0xff]
    %v1469 = vld [vmem:[#allocation14 + $0x570] sm:$0xff]
    %v1470 = vld [vmem:[#allocation14 + $0x578] sm:$0xff]
    %v1471 = vld [vmem:[#allocation14 + $0x580] sm:$0xff]
    %v1472 = vld [vmem:[#allocation14 + $0x588] sm:$0xff]
    %v1473 = vld [vmem:[#allocation14 + $0x590] sm:$0xff]
    %v1474 = vld [vmem:[#allocation14 + $0x598] sm:$0xff]
    %v1475 = vld [vmem:[#allocation14 + $0x5a0] sm:$0xff]
    %v1476 = vld [vmem:[#allocation14 + $0x5a8] sm:$0xff]
    %v1477 = vld [vmem:[#allocation14 + $0x5b0] sm:$0xff]
    %v1478 = vld [vmem:[#allocation14 + $0x5b8] sm:$0xff]
    %v1479 = vld [vmem:[#allocation14 + $0x5c0] sm:$0xff]
    %v1480 = vld [vmem:[#allocation14 + $0x5c8] sm:$0xff]
    %v1481 = vld [vmem:[#allocation14 + $0x5d0] sm:$0xff]
    %v1482 = vld [vmem:[#allocation14 + $0x5d8] sm:$0xff]
    %v1483 = vld [vmem:[#allocation14 + $0x5e0] sm:$0xff]
    %v1484 = vld [vmem:[#allocation14 + $0x5e8] sm:$0xff]
    %v1485 = vld [vmem:[#allocation14 + $0x5f0] sm:$0xff]
    %v1486 = vld [vmem:[#allocation14 + $0x5f8] sm:$0xff]
    %v1551 = vunpack.c.l.b16 %v1423
    %v1552 = vunpack.c.h.b16 %v1423
    %v1553 = vunpack.c.l.b16 %v1424
    %v1554 = vunpack.c.h.b16 %v1424
    %v1555 = vunpack.c.l.b16 %v1425
    %v1556 = vunpack.c.h.b16 %v1425
    %v1557 = vunpack.c.l.b16 %v1426
    %v1558 = vunpack.c.h.b16 %v1426
    %v1559 = vunpack.c.l.b16 %v1427
    %v1560 = vunpack.c.h.b16 %v1427
    %v1561 = vunpack.c.l.b16 %v1428
    %v1562 = vunpack.c.h.b16 %v1428
    %v1563 = vunpack.c.l.b16 %v1429
    %v1564 = vunpack.c.h.b16 %v1429
    %v1565 = vunpack.c.l.b16 %v1430
    %v1566 = vunpack.c.h.b16 %v1430
    %v1567 = vunpack.c.l.b16 %v1431
    %v1568 = vunpack.c.h.b16 %v1431
    %v1569 = vunpack.c.l.b16 %v1432
    %v1570 = vunpack.c.h.b16 %v1432
    %v1571 = vunpack.c.l.b16 %v1433
    %v1572 = vunpack.c.h.b16 %v1433
    %v1573 = vunpack.c.l.b16 %v1434
    %v1574 = vunpack.c.h.b16 %v1434
    %v1575 = vunpack.c.l.b16 %v1435
    %v1576 = vunpack.c.h.b16 %v1435
    %v1577 = vunpack.c.l.b16 %v1436
    %v1578 = vunpack.c.h.b16 %v1436
    %v1579 = vunpack.c.l.b16 %v1437
    %v1580 = vunpack.c.h.b16 %v1437
    %v1581 = vunpack.c.l.b16 %v1438
    %v1582 = vunpack.c.h.b16 %v1438
    %v1583 = vunpack.c.l.b16 %v1439
    %v1584 = vunpack.c.h.b16 %v1439
    %v1585 = vunpack.c.l.b16 %v1440
    %v1586 = vunpack.c.h.b16 %v1440
    %v1587 = vunpack.c.l.b16 %v1441
    %v1588 = vunpack.c.h.b16 %v1441
    %v1589 = vunpack.c.l.b16 %v1442
    %v1590 = vunpack.c.h.b16 %v1442
    %v1591 = vunpack.c.l.b16 %v1443
    %v1592 = vunpack.c.h.b16 %v1443
    %v1593 = vunpack.c.l.b16 %v1444
    %v1594 = vunpack.c.h.b16 %v1444
    %v1595 = vunpack.c.l.b16 %v1445
    %v1596 = vunpack.c.h.b16 %v1445
    %v1597 = vunpack.c.l.b16 %v1446
    %v1598 = vunpack.c.h.b16 %v1446
    %v1599 = vunpack.c.l.b16 %v1447
    %v1600 = vunpack.c.h.b16 %v1447
    %v1601 = vunpack.c.l.b16 %v1448
    %v1602 = vunpack.c.h.b16 %v1448
    %v1603 = vunpack.c.l.b16 %v1449
    %v1604 = vunpack.c.h.b16 %v1449
    %v1605 = vunpack.c.l.b16 %v1450
    %v1606 = vunpack.c.h.b16 %v1450
    %v1607 = vunpack.c.l.b16 %v1451
    %v1608 = vunpack.c.h.b16 %v1451
    %v1609 = vunpack.c.l.b16 %v1452
    %v1610 = vunpack.c.h.b16 %v1452
    %v1611 = vunpack.c.l.b16 %v1453
    %v1612 = vunpack.c.h.b16 %v1453
    %v1613 = vunpack.c.l.b16 %v1454
    %v1614 = vunpack.c.h.b16 %v1454
    %v1615 = vunpack.c.l.b16 %v1455
    %v1616 = vunpack.c.h.b16 %v1455
    %v1617 = vunpack.c.l.b16 %v1456
    %v1618 = vunpack.c.h.b16 %v1456
    %v1619 = vunpack.c.l.b16 %v1457
    %v1620 = vunpack.c.h.b16 %v1457
    %v1621 = vunpack.c.l.b16 %v1458
    %v1622 = vunpack.c.h.b16 %v1458
    %v1623 = vunpack.c.l.b16 %v1459
    %v1624 = vunpack.c.h.b16 %v1459
    %v1625 = vunpack.c.l.b16 %v1460
    %v1626 = vunpack.c.h.b16 %v1460
    %v1627 = vunpack.c.l.b16 %v1461
    %v1628 = vunpack.c.h.b16 %v1461
    %v1629 = vunpack.c.l.b16 %v1462
    %v1630 = vunpack.c.h.b16 %v1462
    %v1631 = vunpack.c.l.b16 %v1463
    %v1632 = vunpack.c.h.b16 %v1463
    %v1633 = vunpack.c.l.b16 %v1464
    %v1634 = vunpack.c.h.b16 %v1464
    %v1635 = vunpack.c.l.b16 %v1465
    %v1636 = vunpack.c.h.b16 %v1465
    %v1637 = vunpack.c.l.b16 %v1466
    %v1638 = vunpack.c.h.b16 %v1466
    %v1639 = vunpack.c.l.b16 %v1467
    %v1640 = vunpack.c.h.b16 %v1467
    %v1641 = vunpack.c.l.b16 %v1468
    %v1642 = vunpack.c.h.b16 %v1468
    %v1643 = vunpack.c.l.b16 %v1469
    %v1644 = vunpack.c.h.b16 %v1469
    %v1645 = vunpack.c.l.b16 %v1470
    %v1646 = vunpack.c.h.b16 %v1470
    %v1647 = vunpack.c.l.b16 %v1471
    %v1648 = vunpack.c.h.b16 %v1471
    %v1649 = vunpack.c.l.b16 %v1472
    %v1650 = vunpack.c.h.b16 %v1472
    %v1651 = vunpack.c.l.b16 %v1473
    %v1652 = vunpack.c.h.b16 %v1473
    %v1653 = vunpack.c.l.b16 %v1474
    %v1654 = vunpack.c.h.b16 %v1474
    %v1655 = vunpack.c.l.b16 %v1475
    %v1656 = vunpack.c.h.b16 %v1475
    %v1657 = vunpack.c.l.b16 %v1476
    %v1658 = vunpack.c.h.b16 %v1476
    %v1659 = vunpack.c.l.b16 %v1477
    %v1660 = vunpack.c.h.b16 %v1477
    %v1661 = vunpack.c.l.b16 %v1478
    %v1662 = vunpack.c.h.b16 %v1478
    %v1663 = vunpack.c.l.b16 %v1479
    %v1664 = vunpack.c.h.b16 %v1479
    %v1665 = vunpack.c.l.b16 %v1480
    %v1666 = vunpack.c.h.b16 %v1480
    %v1667 = vunpack.c.l.b16 %v1481
    %v1668 = vunpack.c.h.b16 %v1481
    %v1669 = vunpack.c.l.b16 %v1482
    %v1670 = vunpack.c.h.b16 %v1482
    %v1671 = vunpack.c.l.b16 %v1483
    %v1672 = vunpack.c.h.b16 %v1483
    %v1673 = vunpack.c.l.b16 %v1484
    %v1674 = vunpack.c.h.b16 %v1484
    %v1675 = vunpack.c.l.b16 %v1485
    %v1676 = vunpack.c.h.b16 %v1485
    %v1677 = vunpack.c.l.b16 %v1486
    %v1678 = vunpack.c.h.b16 %v1486
    %v1679 = vpack.c.b16 %v1555, %v1551
    %v1680 = vpack.c.b16 %v1556, %v1552
    %v1681 = vpack.c.b16 %v1557, %v1553
    %v1682 = vpack.c.b16 %v1558, %v1554
    %v1683 = vpack.c.b16 %v1563, %v1559
    %v1684 = vpack.c.b16 %v1564, %v1560
    %v1685 = vpack.c.b16 %v1565, %v1561
    %v1686 = vpack.c.b16 %v1566, %v1562
    %v1687 = vpack.c.b16 %v1571, %v1567
    %v1688 = vpack.c.b16 %v1572, %v1568
    %v1689 = vpack.c.b16 %v1573, %v1569
    %v1690 = vpack.c.b16 %v1574, %v1570
    %v1691 = vpack.c.b16 %v1579, %v1575
    %v1692 = vpack.c.b16 %v1580, %v1576
    %v1693 = vpack.c.b16 %v1581, %v1577
    %v1694 = vpack.c.b16 %v1582, %v1578
    %v1695 = vpack.c.b16 %v1587, %v1583
    %v1696 = vpack.c.b16 %v1588, %v1584
    %v1697 = vpack.c.b16 %v1589, %v1585
    %v1698 = vpack.c.b16 %v1590, %v1586
    %v1699 = vpack.c.b16 %v1595, %v1591
    %v1700 = vpack.c.b16 %v1596, %v1592
    %v1701 = vpack.c.b16 %v1597, %v1593
    %v1702 = vpack.c.b16 %v1598, %v1594
    %v1703 = vpack.c.b16 %v1603, %v1599
    %v1704 = vpack.c.b16 %v1604, %v1600
    %v1705 = vpack.c.b16 %v1605, %v1601
    %v1706 = vpack.c.b16 %v1606, %v1602
    %v1707 = vpack.c.b16 %v1611, %v1607
    %v1708 = vpack.c.b16 %v1612, %v1608
    %v1709 = vpack.c.b16 %v1613, %v1609
    %v1710 = vpack.c.b16 %v1614, %v1610
    %v1711 = vpack.c.b16 %v1619, %v1615
    %v1712 = vpack.c.b16 %v1620, %v1616
    %v1713 = vpack.c.b16 %v1621, %v1617
    %v1714 = vpack.c.b16 %v1622, %v1618
    %v1715 = vpack.c.b16 %v1627, %v1623
    %v1716 = vpack.c.b16 %v1628, %v1624
    %v1717 = vpack.c.b16 %v1629, %v1625
    %v1718 = vpack.c.b16 %v1630, %v1626
    %v1719 = vpack.c.b16 %v1635, %v1631
    %v1720 = vpack.c.b16 %v1636, %v1632
    %v1721 = vpack.c.b16 %v1637, %v1633
    %v1722 = vpack.c.b16 %v1638, %v1634
    %v1723 = vpack.c.b16 %v1643, %v1639
    %v1724 = vpack.c.b16 %v1644, %v1640
    %v1725 = vpack.c.b16 %v1645, %v1641
    %v1726 = vpack.c.b16 %v1646, %v1642
    %v1727 = vpack.c.b16 %v1651, %v1647
    %v1728 = vpack.c.b16 %v1652, %v1648
    %v1729 = vpack.c.b16 %v1653, %v1649
    %v1730 = vpack.c.b16 %v1654, %v1650
    %v1731 = vpack.c.b16 %v1659, %v1655
    %v1732 = vpack.c.b16 %v1660, %v1656
    %v1733 = vpack.c.b16 %v1661, %v1657
    %v1734 = vpack.c.b16 %v1662, %v1658
    %v1735 = vpack.c.b16 %v1667, %v1663
    %v1736 = vpack.c.b16 %v1668, %v1664
    %v1737 = vpack.c.b16 %v1669, %v1665
    %v1738 = vpack.c.b16 %v1670, %v1666
    %v1739 = vpack.c.b16 %v1675, %v1671
    %v1740 = vpack.c.b16 %v1676, %v1672
    %v1741 = vpack.c.b16 %v1677, %v1673
    %v1742 = vpack.c.b16 %v1678, %v1674
    %1807 = vmatprep.subr.bf16.mxu0 %v1680
    %1808 = vmatpush1.bf16.msra.mxu0 %v1679
    %1809 = vmatprep.subr.bf16.mxu0 %v1684
    %1810 = vmatpush1.bf16.msra.mxu0 %v1683
    %1811 = vmatprep.subr.bf16.mxu0 %v1688
    %1812 = vmatpush1.bf16.msra.mxu0 %v1687
    %1813 = vmatprep.subr.bf16.mxu0 %v1692
    %1814 = vmatpush1.bf16.msra.mxu0 %v1691
    %1815 = vmatprep.subr.bf16.mxu0 %v1696
    %1816 = vmatpush1.bf16.msra.mxu0 %v1695
    %1817 = vmatprep.subr.bf16.mxu0 %v1700
    %1818 = vmatpush1.bf16.msra.mxu0 %v1699
    %1819 = vmatprep.subr.bf16.mxu0 %v1704
    %1820 = vmatpush1.bf16.msra.mxu0 %v1703
    %1821 = vmatprep.subr.bf16.mxu0 %v1708
    %1822 = vmatpush1.bf16.msra.mxu0 %v1707
    %1823 = vmatprep.subr.bf16.mxu0 %v1712
    %1824 = vmatpush1.bf16.msra.mxu0 %v1711
    %1825 = vmatprep.subr.bf16.mxu0 %v1716
    %1826 = vmatpush1.bf16.msra.mxu0 %v1715
    %1827 = vmatprep.subr.bf16.mxu0 %v1720
    %1828 = vmatpush1.bf16.msra.mxu0 %v1719
    %1829 = vmatprep.subr.bf16.mxu0 %v1724
    %1830 = vmatpush1.bf16.msra.mxu0 %v1723
    %1831 = vmatprep.subr.bf16.mxu0 %v1728
    %1832 = vmatpush1.bf16.msra.mxu0 %v1727
    %1833 = vmatprep.subr.bf16.mxu0 %v1732
    %1834 = vmatpush1.bf16.msra.mxu0 %v1731
    %1835 = vmatprep.subr.bf16.mxu0 %v1736
    %1836 = vmatpush1.bf16.msra.mxu0 %v1735
    %1837 = vmatprep.subr.bf16.mxu0 %v1740
    %1838 = vmatpush1.bf16.msra.mxu0 %v1739
    %1839 = vmatprep.mubr.bf16.mxu0 %v1422
    %1840 = vmatmul.mubr.bf16.gmra.mrb[0].mxu0 %v1421
    %v1841 = vpop.f32.mrb[0].mxu0
    %v1842 = vadd.f32 0.0, %v1841
    %v1843 = vpop.f32.mrb[0].mxu0
    %v1844 = vadd.f32 0.0, %v1843
    %v1845 = vpop.f32.mrb[0].mxu0
    %v1846 = vpop.f32.mrb[0].mxu0
    %1847 = vdwg.mxu0
    %1848 = vmatprep.subr.bf16.mxu0 %v1682
    %1849 = vmatpush1.bf16.msra.mxu0 %v1681
    %1850 = vmatprep.subr.bf16.mxu0 %v1686
    %1851 = vmatpush1.bf16.msra.mxu0 %v1685
    %1852 = vmatprep.subr.bf16.mxu0 %v1690
    %1853 = vmatpush1.bf16.msra.mxu0 %v1689
    %1854 = vmatprep.subr.bf16.mxu0 %v1694
    %1855 = vmatpush1.bf16.msra.mxu0 %v1693
    %1856 = vmatprep.subr.bf16.mxu0 %v1698
    %1857 = vmatpush1.bf16.msra.mxu0 %v1697
    %1858 = vmatprep.subr.bf16.mxu0 %v1702
    %1859 = vmatpush1.bf16.msra.mxu0 %v1701
    %1860 = vmatprep.subr.bf16.mxu0 %v1706
    %1861 = vmatpush1.bf16.msra.mxu0 %v1705
    %1862 = vmatprep.subr.bf16.mxu0 %v1710
    %1863 = vmatpush1.bf16.msra.mxu0 %v1709
    %1864 = vmatprep.subr.bf16.mxu0 %v1714
    %1865 = vmatpush1.bf16.msra.mxu0 %v1713
    %1866 = vmatprep.subr.bf16.mxu0 %v1718
    %1867 = vmatpush1.bf16.msra.mxu0 %v1717
    %1868 = vmatprep.subr.bf16.mxu0 %v1722
    %1869 = vmatpush1.bf16.msra.mxu0 %v1721
    %1870 = vmatprep.subr.bf16.mxu0 %v1726
    %1871 = vmatpush1.bf16.msra.mxu0 %v1725
    %1872 = vmatprep.subr.bf16.mxu0 %v1730
    %1873 = vmatpush1.bf16.msra.mxu0 %v1729
    %1874 = vmatprep.subr.bf16.mxu0 %v1734
    %1875 = vmatpush1.bf16.msra.mxu0 %v1733
    %1876 = vmatprep.subr.bf16.mxu0 %v1738
    %1877 = vmatpush1.bf16.msra.mxu0 %v1737
    %1878 = vmatprep.subr.bf16.mxu0 %v1742
    %1879 = vmatpush1.bf16.msra.mxu0 %v1741
    %1880 = vmatprep.mubr.bf16.mxu0 %v1422
    %1881 = vmatmul.mubr.bf16.gmra.mrb[0].mxu0 %v1421
    %v1882 = vpop.f32.mrb[0].mxu0
    %v1883 = vadd.f32 0.0, %v1882
    %v1884 = vpop.f32.mrb[0].mxu0
    %v1885 = vadd.f32 0.0, %v1884
    %v1886 = vpop.f32.mrb[0].mxu0
    %v1887 = vpop.f32.mrb[0].mxu0
    %1888 = vdwg.mxu0
    %v1889 = vadd.f32 %v1374, %v1842
    %v1890 = vadd.f32 %v1376, %v1844
    %v1891 = vadd.f32 %v1415, %v1883
    %v1892 = vadd.f32 %v1417, %v1885
    %v1893 = vld [vmem:[#allocation16] sm:$0xf]
    %v1895 = vlaneseq
    %v1896 = vshrl.u32 %v1895, 7
    %v1897 = vsub.s32 0, %v1896
    %v1898 = vrot.slane %v1893, %v1897
    %v1899 = vlaneseq
    %v1900 = vshrl.u32 %v1899, 7
    %v1901 = vsub.s32 1, %v1900
    %v1902 = vrot.slane %v1893, %v1901
    %v1903 = vlaneseq
    %v1904 = vshrl.u32 %v1903, 7
    %v1905 = vsub.s32 2, %v1904
    %v1906 = vrot.slane %v1893, %v1905
    %v1907 = vlaneseq
    %v1908 = vshrl.u32 %v1907, 7
    %v1909 = vsub.s32 3, %v1908
    %v1910 = vrot.slane %v1893, %v1909
    %v1915 = vadd.f32 %v1889, %v1898
    %v1916 = vadd.f32 %v1890, %v1902
    %v1917 = vadd.f32 %v1891, %v1906
    %v1918 = vadd.f32 %v1892, %v1910
    %v1919 = vmax.f32 %v1915, 0.0
    %v1920 = vmax.f32 %v1916, 0.0
    %v1921 = vmax.f32 %v1917, 0.0
    %v1922 = vmax.f32 %v1918, 0.0
    %1923 = vst [vmem:[#allocation20] sm:$0xff] %v1919
    %1924 = vst [vmem:[#allocation20 + $0x8] sm:$0xff] %v1920
    %1925 = vst [vmem:[#allocation20 + $0x10] sm:$0xff] %v1921
    %1926 = vst [vmem:[#allocation20 + $0x18] sm:$0xff] %v1922
    %s1927 = smul.u32 4, 160
    %s1928 = smul.u32 %s1927, 4
    %s1929 = sshll.u32 %s1928, 4
    %1930 = dma.done [#allocation3], %s1929
    %v1931 = vld [vmem:[%s3] sm:$0xff]
    %v1932 = vld [vmem:[%s3 + $0x8] sm:$0xff]
    %v1933 = vld [vmem:[%s3 + $0x10] sm:$0xff]
    %v1934 = vld [vmem:[%s3 + $0x18] sm:$0xff]
    %v1935 = vld [vmem:[%s3 + $0x20] sm:$0xff]
    %v1936 = vld [vmem:[#allocation2] sm:$0xff]
    %v1937 = vld [vmem:[#allocation2 + $0x8] sm:$0xff]
    %v1938 = vld [vmem:[#allocation2 + $0x10] sm:$0xff]
    %v1939 = vld [vmem:[#allocation2 + $0x18] sm:$0xff]
    %v1940 = vld [vmem:[#allocation2 + $0x20] sm:$0xff]
    %v1941 = vld [vmem:[#allocation2 + $0x28] sm:$0xff]
    %v1942 = vld [vmem:[#allocation2 + $0x30] sm:$0xff]
    %v1943 = vld [vmem:[#allocation2 + $0x38] sm:$0xff]
    %v1944 = vld [vmem:[#allocation2 + $0x40] sm:$0xff]
    %v1945 = vld [vmem:[#allocation2 + $0x48] sm:$0xff]
    %v1946 = vld [vmem:[#allocation2 + $0x50] sm:$0xff]
    %v1947 = vld [vmem:[#allocation2 + $0x58] sm:$0xff]
    %v1948 = vld [vmem:[#allocation2 + $0x60] sm:$0xff]
    %v1949 = vld [vmem:[#allocation2 + $0x68] sm:$0xff]
    %v1950 = vld [vmem:[#allocation2 + $0x70] sm:$0xff]
    %v1951 = vld [vmem:[#allocation2 + $0x78] sm:$0xff]
    %v1952 = vld [vmem:[#allocation2 + $0x80] sm:$0xff]
    %v1953 = vld [vmem:[#allocation2 + $0x88] sm:$0xff]
    %v1954 = vld [vmem:[#allocation2 + $0x90] sm:$0xff]
    %v1955 = vld [vmem:[#allocation2 + $0x98] sm:$0xff]
    %v1956 = vld [vmem:[#allocation2 + $0xa0] sm:$0xff]
    %v1957 = vld [vmem:[#allocation2 + $0xa8] sm:$0xff]
    %v1958 = vld [vmem:[#allocation2 + $0xb0] sm:$0xff]
    %v1959 = vld [vmem:[#allocation2 + $0xb8] sm:$0xff]
    %v1960 = vld [vmem:[#allocation2 + $0xc0] sm:$0xff]
    %v1961 = vld [vmem:[#allocation2 + $0xc8] sm:$0xff]
    %v1962 = vld [vmem:[#allocation2 + $0xd0] sm:$0xff]
    %v1963 = vld [vmem:[#allocation2 + $0xd8] sm:$0xff]
    %v1964 = vld [vmem:[#allocation2 + $0xe0] sm:$0xff]
    %v1965 = vld [vmem:[#allocation2 + $0xe8] sm:$0xff]
    %v1966 = vld [vmem:[#allocation2 + $0xf0] sm:$0xff]
    %v1967 = vld [vmem:[#allocation2 + $0xf8] sm:$0xff]
    %v1968 = vld [vmem:[#allocation2 + $0x100] sm:$0xff]
    %v1969 = vld [vmem:[#allocation2 + $0x108] sm:$0xff]
    %v1970 = vld [vmem:[#allocation2 + $0x110] sm:$0xff]
    %v1971 = vld [vmem:[#allocation2 + $0x118] sm:$0xff]
    %v1972 = vld [vmem:[#allocation2 + $0x120] sm:$0xff]
    %v1973 = vld [vmem:[#allocation2 + $0x128] sm:$0xff]
    %v1974 = vld [vmem:[#allocation2 + $0x130] sm:$0xff]
    %v1975 = vld [vmem:[#allocation2 + $0x138] sm:$0xff]
    %v1976 = vld [vmem:[#allocation2 + $0x140] sm:$0xff]
    %v1977 = vld [vmem:[#allocation2 + $0x148] sm:$0xff]
    %v1978 = vld [vmem:[#allocation2 + $0x150] sm:$0xff]
    %v1979 = vld [vmem:[#allocation2 + $0x158] sm:$0xff]
    %v1980 = vld [vmem:[#allocation2 + $0x160] sm:$0xff]
    %v1981 = vld [vmem:[#allocation2 + $0x168] sm:$0xff]
    %v1982 = vld [vmem:[#allocation2 + $0x170] sm:$0xff]
    %v1983 = vld [vmem:[#allocation2 + $0x178] sm:$0xff]
    %v1984 = vld [vmem:[#allocation2 + $0x180] sm:$0xff]
    %v1985 = vld [vmem:[#allocation2 + $0x188] sm:$0xff]
    %v1986 = vld [vmem:[#allocation2 + $0x190] sm:$0xff]
    %v1987 = vld [vmem:[#allocation2 + $0x198] sm:$0xff]
    %v1988 = vld [vmem:[#allocation2 + $0x1a0] sm:$0xff]
    %v1989 = vld [vmem:[#allocation2 + $0x1a8] sm:$0xff]
    %v1990 = vld [vmem:[#allocation2 + $0x1b0] sm:$0xff]
    %v1991 = vld [vmem:[#allocation2 + $0x1b8] sm:$0xff]
    %v1992 = vld [vmem:[#allocation2 + $0x1c0] sm:$0xff]
    %v1993 = vld [vmem:[#allocation2 + $0x1c8] sm:$0xff]
    %v1994 = vld [vmem:[#allocation2 + $0x1d0] sm:$0xff]
    %v1995 = vld [vmem:[#allocation2 + $0x1d8] sm:$0xff]
    %v1996 = vld [vmem:[#allocation2 + $0x1e0] sm:$0xff]
    %v1997 = vld [vmem:[#allocation2 + $0x1e8] sm:$0xff]
    %v1998 = vld [vmem:[#allocation2 + $0x1f0] sm:$0xff]
    %v1999 = vld [vmem:[#allocation2 + $0x1f8] sm:$0xff]
    %v2000 = vld [vmem:[#allocation2 + $0x200] sm:$0xff]
    %v2001 = vld [vmem:[#allocation2 + $0x208] sm:$0xff]
    %v2002 = vld [vmem:[#allocation2 + $0x210] sm:$0xff]
    %v2003 = vld [vmem:[#allocation2 + $0x218] sm:$0xff]
    %v2004 = vld [vmem:[#allocation2 + $0x220] sm:$0xff]
    %v2005 = vld [vmem:[#allocation2 + $0x228] sm:$0xff]
    %v2006 = vld [vmem:[#allocation2 + $0x230] sm:$0xff]
    %v2007 = vld [vmem:[#allocation2 + $0x238] sm:$0xff]
    %v2008 = vld [vmem:[#allocation2 + $0x240] sm:$0xff]
    %v2009 = vld [vmem:[#allocation2 + $0x248] sm:$0xff]
    %v2010 = vld [vmem:[#allocation2 + $0x250] sm:$0xff]
    %v2011 = vld [vmem:[#allocation2 + $0x258] sm:$0xff]
    %v2012 = vld [vmem:[#allocation2 + $0x260] sm:$0xff]
    %v2013 = vld [vmem:[#allocation2 + $0x268] sm:$0xff]
    %v2014 = vld [vmem:[#allocation2 + $0x270] sm:$0xff]
    %v2015 = vld [vmem:[#allocation2 + $0x278] sm:$0xff]
    %v2016 = vld [vmem:[#allocation2 + $0x280] sm:$0xff]
    %v2017 = vld [vmem:[#allocation2 + $0x288] sm:$0xff]
    %v2018 = vld [vmem:[#allocation2 + $0x290] sm:$0xff]
    %v2019 = vld [vmem:[#allocation2 + $0x298] sm:$0xff]
    %v2020 = vld [vmem:[#allocation2 + $0x2a0] sm:$0xff]
    %v2021 = vld [vmem:[#allocation2 + $0x2a8] sm:$0xff]
    %v2022 = vld [vmem:[#allocation2 + $0x2b0] sm:$0xff]
    %v2023 = vld [vmem:[#allocation2 + $0x2b8] sm:$0xff]
    %v2024 = vld [vmem:[#allocation2 + $0x2c0] sm:$0xff]
    %v2025 = vld [vmem:[#allocation2 + $0x2c8] sm:$0xff]
    %v2026 = vld [vmem:[#allocation2 + $0x2d0] sm:$0xff]
    %v2027 = vld [vmem:[#allocation2 + $0x2d8] sm:$0xff]
    %v2028 = vld [vmem:[#allocation2 + $0x2e0] sm:$0xff]
    %v2029 = vld [vmem:[#allocation2 + $0x2e8] sm:$0xff]
    %v2030 = vld [vmem:[#allocation2 + $0x2f0] sm:$0xff]
    %v2031 = vld [vmem:[#allocation2 + $0x2f8] sm:$0xff]
    %v2032 = vld [vmem:[#allocation2 + $0x300] sm:$0xff]
    %v2033 = vld [vmem:[#allocation2 + $0x308] sm:$0xff]
    %v2034 = vld [vmem:[#allocation2 + $0x310] sm:$0xff]
    %v2035 = vld [vmem:[#allocation2 + $0x318] sm:$0xff]
    %v2036 = vld [vmem:[#allocation2 + $0x320] sm:$0xff]
    %v2037 = vld [vmem:[#allocation2 + $0x328] sm:$0xff]
    %v2038 = vld [vmem:[#allocation2 + $0x330] sm:$0xff]
    %v2039 = vld [vmem:[#allocation2 + $0x338] sm:$0xff]
    %v2040 = vld [vmem:[#allocation2 + $0x340] sm:$0xff]
    %v2041 = vld [vmem:[#allocation2 + $0x348] sm:$0xff]
    %v2042 = vld [vmem:[#allocation2 + $0x350] sm:$0xff]
    %v2043 = vld [vmem:[#allocation2 + $0x358] sm:$0xff]
    %v2044 = vld [vmem:[#allocation2 + $0x360] sm:$0xff]
    %v2045 = vld [vmem:[#allocation2 + $0x368] sm:$0xff]
    %v2046 = vld [vmem:[#allocation2 + $0x370] sm:$0xff]
    %v2047 = vld [vmem:[#allocation2 + $0x378] sm:$0xff]
    %v2048 = vld [vmem:[#allocation2 + $0x380] sm:$0xff]
    %v2049 = vld [vmem:[#allocation2 + $0x388] sm:$0xff]
    %v2050 = vld [vmem:[#allocation2 + $0x390] sm:$0xff]
    %v2051 = vld [vmem:[#allocation2 + $0x398] sm:$0xff]
    %v2052 = vld [vmem:[#allocation2 + $0x3a0] sm:$0xff]
    %v2053 = vld [vmem:[#allocation2 + $0x3a8] sm:$0xff]
    %v2054 = vld [vmem:[#allocation2 + $0x3b0] sm:$0xff]
    %v2055 = vld [vmem:[#allocation2 + $0x3b8] sm:$0xff]
    %v2056 = vld [vmem:[#allocation2 + $0x3c0] sm:$0xff]
    %v2057 = vld [vmem:[#allocation2 + $0x3c8] sm:$0xff]
    %v2058 = vld [vmem:[#allocation2 + $0x3d0] sm:$0xff]
    %v2059 = vld [vmem:[#allocation2 + $0x3d8] sm:$0xff]
    %v2060 = vld [vmem:[#allocation2 + $0x3e0] sm:$0xff]
    %v2061 = vld [vmem:[#allocation2 + $0x3e8] sm:$0xff]
    %v2062 = vld [vmem:[#allocation2 + $0x3f0] sm:$0xff]
    %v2063 = vld [vmem:[#allocation2 + $0x3f8] sm:$0xff]
    %v2064 = vld [vmem:[#allocation2 + $0x400] sm:$0xff]
    %v2065 = vld [vmem:[#allocation2 + $0x408] sm:$0xff]
    %v2066 = vld [vmem:[#allocation2 + $0x410] sm:$0xff]
    %v2067 = vld [vmem:[#allocation2 + $0x418] sm:$0xff]
    %v2068 = vld [vmem:[#allocation2 + $0x420] sm:$0xff]
    %v2069 = vld [vmem:[#allocation2 + $0x428] sm:$0xff]
    %v2070 = vld [vmem:[#allocation2 + $0x430] sm:$0xff]
    %v2071 = vld [vmem:[#allocation2 + $0x438] sm:$0xff]
    %v2072 = vld [vmem:[#allocation2 + $0x440] sm:$0xff]
    %v2073 = vld [vmem:[#allocation2 + $0x448] sm:$0xff]
    %v2074 = vld [vmem:[#allocation2 + $0x450] sm:$0xff]
    %v2075 = vld [vmem:[#allocation2 + $0x458] sm:$0xff]
    %v2076 = vld [vmem:[#allocation2 + $0x460] sm:$0xff]
    %v2077 = vld [vmem:[#allocation2 + $0x468] sm:$0xff]
    %v2078 = vld [vmem:[#allocation2 + $0x470] sm:$0xff]
    %v2079 = vld [vmem:[#allocation2 + $0x478] sm:$0xff]
    %v2080 = vld [vmem:[#allocation2 + $0x480] sm:$0xff]
    %v2081 = vld [vmem:[#allocation2 + $0x488] sm:$0xff]
    %v2082 = vld [vmem:[#allocation2 + $0x490] sm:$0xff]
    %v2083 = vld [vmem:[#allocation2 + $0x498] sm:$0xff]
    %v2084 = vld [vmem:[#allocation2 + $0x4a0] sm:$0xff]
    %v2085 = vld [vmem:[#allocation2 + $0x4a8] sm:$0xff]
    %v2086 = vld [vmem:[#allocation2 + $0x4b0] sm:$0xff]
    %v2087 = vld [vmem:[#allocation2 + $0x4b8] sm:$0xff]
    %v2088 = vld [vmem:[#allocation2 + $0x4c0] sm:$0xff]
    %v2089 = vld [vmem:[#allocation2 + $0x4c8] sm:$0xff]
    %v2090 = vld [vmem:[#allocation2 + $0x4d0] sm:$0xff]
    %v2091 = vld [vmem:[#allocation2 + $0x4d8] sm:$0xff]
    %v2092 = vld [vmem:[#allocation2 + $0x4e0] sm:$0xff]
    %v2093 = vld [vmem:[#allocation2 + $0x4e8] sm:$0xff]
    %v2094 = vld [vmem:[#allocation2 + $0x4f0] sm:$0xff]
    %v2095 = vld [vmem:[#allocation2 + $0x4f8] sm:$0xff]
    %v2096 = vld [vmem:[#allocation2 + $0x500] sm:$0xff]
    %v2097 = vld [vmem:[#allocation2 + $0x508] sm:$0xff]
    %v2098 = vld [vmem:[#allocation2 + $0x510] sm:$0xff]
    %v2099 = vld [vmem:[#allocation2 + $0x518] sm:$0xff]
    %v2100 = vld [vmem:[#allocation2 + $0x520] sm:$0xff]
    %v2101 = vld [vmem:[#allocation2 + $0x528] sm:$0xff]
    %v2102 = vld [vmem:[#allocation2 + $0x530] sm:$0xff]
    %v2103 = vld [vmem:[#allocation2 + $0x538] sm:$0xff]
    %v2104 = vld [vmem:[#allocation2 + $0x540] sm:$0xff]
    %v2105 = vld [vmem:[#allocation2 + $0x548] sm:$0xff]
    %v2106 = vld [vmem:[#allocation2 + $0x550] sm:$0xff]
    %v2107 = vld [vmem:[#allocation2 + $0x558] sm:$0xff]
    %v2108 = vld [vmem:[#allocation2 + $0x560] sm:$0xff]
    %v2109 = vld [vmem:[#allocation2 + $0x568] sm:$0xff]
    %v2110 = vld [vmem:[#allocation2 + $0x570] sm:$0xff]
    %v2111 = vld [vmem:[#allocation2 + $0x578] sm:$0xff]
    %v2112 = vld [vmem:[#allocation2 + $0x580] sm:$0xff]
    %v2113 = vld [vmem:[#allocation2 + $0x588] sm:$0xff]
    %v2114 = vld [vmem:[#allocation2 + $0x590] sm:$0xff]
    %v2115 = vld [vmem:[#allocation2 + $0x598] sm:$0xff]
    %v2116 = vld [vmem:[#allocation2 + $0x5a0] sm:$0xff]
    %v2117 = vld [vmem:[#allocation2 + $0x5a8] sm:$0xff]
    %v2118 = vld [vmem:[#allocation2 + $0x5b0] sm:$0xff]
    %v2119 = vld [vmem:[#allocation2 + $0x5b8] sm:$0xff]
    %v2120 = vld [vmem:[#allocation2 + $0x5c0] sm:$0xff]
    %v2121 = vld [vmem:[#allocation2 + $0x5c8] sm:$0xff]
    %v2122 = vld [vmem:[#allocation2 + $0x5d0] sm:$0xff]
    %v2123 = vld [vmem:[#allocation2 + $0x5d8] sm:$0xff]
    %v2124 = vld [vmem:[#allocation2 + $0x5e0] sm:$0xff]
    %v2125 = vld [vmem:[#allocation2 + $0x5e8] sm:$0xff]
    %v2126 = vld [vmem:[#allocation2 + $0x5f0] sm:$0xff]
    %v2127 = vld [vmem:[#allocation2 + $0x5f8] sm:$0xff]
    %v2128 = vld [vmem:[#allocation2 + $0x600] sm:$0xff]
    %v2129 = vld [vmem:[#allocation2 + $0x608] sm:$0xff]
    %v2130 = vld [vmem:[#allocation2 + $0x610] sm:$0xff]
    %v2131 = vld [vmem:[#allocation2 + $0x618] sm:$0xff]
    %v2132 = vld [vmem:[#allocation2 + $0x620] sm:$0xff]
    %v2133 = vld [vmem:[#allocation2 + $0x628] sm:$0xff]
    %v2134 = vld [vmem:[#allocation2 + $0x630] sm:$0xff]
    %v2135 = vld [vmem:[#allocation2 + $0x638] sm:$0xff]
    %v2136 = vld [vmem:[#allocation2 + $0x640] sm:$0xff]
    %v2137 = vld [vmem:[#allocation2 + $0x648] sm:$0xff]
    %v2138 = vld [vmem:[#allocation2 + $0x650] sm:$0xff]
    %v2139 = vld [vmem:[#allocation2 + $0x658] sm:$0xff]
    %v2140 = vld [vmem:[#allocation2 + $0x660] sm:$0xff]
    %v2141 = vld [vmem:[#allocation2 + $0x668] sm:$0xff]
    %v2142 = vld [vmem:[#allocation2 + $0x670] sm:$0xff]
    %v2143 = vld [vmem:[#allocation2 + $0x678] sm:$0xff]
    %v2144 = vld [vmem:[#allocation2 + $0x680] sm:$0xff]
    %v2145 = vld [vmem:[#allocation2 + $0x688] sm:$0xff]
    %v2146 = vld [vmem:[#allocation2 + $0x690] sm:$0xff]
    %v2147 = vld [vmem:[#allocation2 + $0x698] sm:$0xff]
    %v2148 = vld [vmem:[#allocation2 + $0x6a0] sm:$0xff]
    %v2149 = vld [vmem:[#allocation2 + $0x6a8] sm:$0xff]
    %v2150 = vld [vmem:[#allocation2 + $0x6b0] sm:$0xff]
    %v2151 = vld [vmem:[#allocation2 + $0x6b8] sm:$0xff]
    %v2152 = vld [vmem:[#allocation2 + $0x6c0] sm:$0xff]
    %v2153 = vld [vmem:[#allocation2 + $0x6c8] sm:$0xff]
    %v2154 = vld [vmem:[#allocation2 + $0x6d0] sm:$0xff]
    %v2155 = vld [vmem:[#allocation2 + $0x6d8] sm:$0xff]
    %v2156 = vld [vmem:[#allocation2 + $0x6e0] sm:$0xff]
    %v2157 = vld [vmem:[#allocation2 + $0x6e8] sm:$0xff]
    %v2158 = vld [vmem:[#allocation2 + $0x6f0] sm:$0xff]
    %v2159 = vld [vmem:[#allocation2 + $0x6f8] sm:$0xff]
    %v2160 = vld [vmem:[#allocation2 + $0x700] sm:$0xff]
    %v2161 = vld [vmem:[#allocation2 + $0x708] sm:$0xff]
    %v2162 = vld [vmem:[#allocation2 + $0x710] sm:$0xff]
    %v2163 = vld [vmem:[#allocation2 + $0x718] sm:$0xff]
    %v2164 = vld [vmem:[#allocation2 + $0x720] sm:$0xff]
    %v2165 = vld [vmem:[#allocation2 + $0x728] sm:$0xff]
    %v2166 = vld [vmem:[#allocation2 + $0x730] sm:$0xff]
    %v2167 = vld [vmem:[#allocation2 + $0x738] sm:$0xff]
    %v2168 = vld [vmem:[#allocation2 + $0x740] sm:$0xff]
    %v2169 = vld [vmem:[#allocation2 + $0x748] sm:$0xff]
    %v2170 = vld [vmem:[#allocation2 + $0x750] sm:$0xff]
    %v2171 = vld [vmem:[#allocation2 + $0x758] sm:$0xff]
    %v2172 = vld [vmem:[#allocation2 + $0x760] sm:$0xff]
    %v2173 = vld [vmem:[#allocation2 + $0x768] sm:$0xff]
    %v2174 = vld [vmem:[#allocation2 + $0x770] sm:$0xff]
    %v2175 = vld [vmem:[#allocation2 + $0x778] sm:$0xff]
    %v2176 = vld [vmem:[#allocation2 + $0x780] sm:$0xff]
    %v2177 = vld [vmem:[#allocation2 + $0x788] sm:$0xff]
    %v2178 = vld [vmem:[#allocation2 + $0x790] sm:$0xff]
    %v2179 = vld [vmem:[#allocation2 + $0x798] sm:$0xff]
    %v2180 = vld [vmem:[#allocation2 + $0x7a0] sm:$0xff]
    %v2181 = vld [vmem:[#allocation2 + $0x7a8] sm:$0xff]
    %v2182 = vld [vmem:[#allocation2 + $0x7b0] sm:$0xff]
    %v2183 = vld [vmem:[#allocation2 + $0x7b8] sm:$0xff]
    %v2184 = vld [vmem:[#allocation2 + $0x7c0] sm:$0xff]
    %v2185 = vld [vmem:[#allocation2 + $0x7c8] sm:$0xff]
    %v2186 = vld [vmem:[#allocation2 + $0x7d0] sm:$0xff]
    %v2187 = vld [vmem:[#allocation2 + $0x7d8] sm:$0xff]
    %v2188 = vld [vmem:[#allocation2 + $0x7e0] sm:$0xff]
    %v2189 = vld [vmem:[#allocation2 + $0x7e8] sm:$0xff]
    %v2190 = vld [vmem:[#allocation2 + $0x7f0] sm:$0xff]
    %v2191 = vld [vmem:[#allocation2 + $0x7f8] sm:$0xff]
    %v2192 = vld [vmem:[#allocation2 + $0x800] sm:$0xff]
    %v2193 = vld [vmem:[#allocation2 + $0x808] sm:$0xff]
    %v2194 = vld [vmem:[#allocation2 + $0x810] sm:$0xff]
    %v2195 = vld [vmem:[#allocation2 + $0x818] sm:$0xff]
    %v2196 = vld [vmem:[#allocation2 + $0x820] sm:$0xff]
    %v2197 = vld [vmem:[#allocation2 + $0x828] sm:$0xff]
    %v2198 = vld [vmem:[#allocation2 + $0x830] sm:$0xff]
    %v2199 = vld [vmem:[#allocation2 + $0x838] sm:$0xff]
    %v2200 = vld [vmem:[#allocation2 + $0x840] sm:$0xff]
    %v2201 = vld [vmem:[#allocation2 + $0x848] sm:$0xff]
    %v2202 = vld [vmem:[#allocation2 + $0x850] sm:$0xff]
    %v2203 = vld [vmem:[#allocation2 + $0x858] sm:$0xff]
    %v2204 = vld [vmem:[#allocation2 + $0x860] sm:$0xff]
    %v2205 = vld [vmem:[#allocation2 + $0x868] sm:$0xff]
    %v2206 = vld [vmem:[#allocation2 + $0x870] sm:$0xff]
    %v2207 = vld [vmem:[#allocation2 + $0x878] sm:$0xff]
    %v2208 = vld [vmem:[#allocation2 + $0x880] sm:$0xff]
    %v2209 = vld [vmem:[#allocation2 + $0x888] sm:$0xff]
    %v2210 = vld [vmem:[#allocation2 + $0x890] sm:$0xff]
    %v2211 = vld [vmem:[#allocation2 + $0x898] sm:$0xff]
    %v2212 = vld [vmem:[#allocation2 + $0x8a0] sm:$0xff]
    %v2213 = vld [vmem:[#allocation2 + $0x8a8] sm:$0xff]
    %v2214 = vld [vmem:[#allocation2 + $0x8b0] sm:$0xff]
    %v2215 = vld [vmem:[#allocation2 + $0x8b8] sm:$0xff]
    %v2216 = vld [vmem:[#allocation2 + $0x8c0] sm:$0xff]
    %v2217 = vld [vmem:[#allocation2 + $0x8c8] sm:$0xff]
    %v2218 = vld [vmem:[#allocation2 + $0x8d0] sm:$0xff]
    %v2219 = vld [vmem:[#allocation2 + $0x8d8] sm:$0xff]
    %v2220 = vld [vmem:[#allocation2 + $0x8e0] sm:$0xff]
    %v2221 = vld [vmem:[#allocation2 + $0x8e8] sm:$0xff]
    %v2222 = vld [vmem:[#allocation2 + $0x8f0] sm:$0xff]
    %v2223 = vld [vmem:[#allocation2 + $0x8f8] sm:$0xff]
    %v2224 = vld [vmem:[#allocation2 + $0x900] sm:$0xff]
    %v2225 = vld [vmem:[#allocation2 + $0x908] sm:$0xff]
    %v2226 = vld [vmem:[#allocation2 + $0x910] sm:$0xff]
    %v2227 = vld [vmem:[#allocation2 + $0x918] sm:$0xff]
    %v2228 = vld [vmem:[#allocation2 + $0x920] sm:$0xff]
    %v2229 = vld [vmem:[#allocation2 + $0x928] sm:$0xff]
    %v2230 = vld [vmem:[#allocation2 + $0x930] sm:$0xff]
    %v2231 = vld [vmem:[#allocation2 + $0x938] sm:$0xff]
    %v2232 = vld [vmem:[#allocation2 + $0x940] sm:$0xff]
    %v2233 = vld [vmem:[#allocation2 + $0x948] sm:$0xff]
    %v2234 = vld [vmem:[#allocation2 + $0x950] sm:$0xff]
    %v2235 = vld [vmem:[#allocation2 + $0x958] sm:$0xff]
    %v2236 = vld [vmem:[#allocation2 + $0x960] sm:$0xff]
    %v2237 = vld [vmem:[#allocation2 + $0x968] sm:$0xff]
    %v2238 = vld [vmem:[#allocation2 + $0x970] sm:$0xff]
    %v2239 = vld [vmem:[#allocation2 + $0x978] sm:$0xff]
    %v2240 = vld [vmem:[#allocation2 + $0x980] sm:$0xff]
    %v2241 = vld [vmem:[#allocation2 + $0x988] sm:$0xff]
    %v2242 = vld [vmem:[#allocation2 + $0x990] sm:$0xff]
    %v2243 = vld [vmem:[#allocation2 + $0x998] sm:$0xff]
    %v2244 = vld [vmem:[#allocation2 + $0x9a0] sm:$0xff]
    %v2245 = vld [vmem:[#allocation2 + $0x9a8] sm:$0xff]
    %v2246 = vld [vmem:[#allocation2 + $0x9b0] sm:$0xff]
    %v2247 = vld [vmem:[#allocation2 + $0x9b8] sm:$0xff]
    %v2248 = vld [vmem:[#allocation2 + $0x9c0] sm:$0xff]
    %v2249 = vld [vmem:[#allocation2 + $0x9c8] sm:$0xff]
    %v2250 = vld [vmem:[#allocation2 + $0x9d0] sm:$0xff]
    %v2251 = vld [vmem:[#allocation2 + $0x9d8] sm:$0xff]
    %v2252 = vld [vmem:[#allocation2 + $0x9e0] sm:$0xff]
    %v2253 = vld [vmem:[#allocation2 + $0x9e8] sm:$0xff]
    %v2254 = vld [vmem:[#allocation2 + $0x9f0] sm:$0xff]
    %v2255 = vld [vmem:[#allocation2 + $0x9f8] sm:$0xff]
    %v2261 = vunpack.c.l.b16 %v1931
    %v2262 = vunpack.c.h.b16 %v1931
    %v2263 = vunpack.c.l.b16 %v1932
    %v2264 = vunpack.c.h.b16 %v1932
    %v2265 = vunpack.c.l.b16 %v1933
    %v2266 = vunpack.c.h.b16 %v1933
    %v2267 = vunpack.c.l.b16 %v1934
    %v2268 = vunpack.c.h.b16 %v1934
    %v2269 = vunpack.c.l.b16 %v1935
    %v2270 = vunpack.c.h.b16 %v1935
    %v2271 = vpack.c.b16 %v2261, %v2261
    %v2272 = vpack.c.b16 %v2262, %v2262
    %v2273 = vpack.c.b16 %v2263, %v2263
    %v2274 = vpack.c.b16 %v2264, %v2264
    %v2275 = vpack.c.b16 %v2265, %v2265
    %v2276 = vpack.c.b16 %v2266, %v2266
    %v2277 = vpack.c.b16 %v2267, %v2267
    %v2278 = vpack.c.b16 %v2268, %v2268
    %v2279 = vpack.c.b16 %v2269, %v2269
    %v2280 = vpack.c.b16 %v2270, %v2270
    %2291 = vmatprep.subr.bf16.mxu0 %v1937
    %2292 = vmatpush1.bf16.msra.mxu0 %v1936
    %2293 = vmatprep.subr.bf16.mxu0 %v1941
    %2294 = vmatpush1.bf16.msra.mxu0 %v1940
    %2295 = vmatprep.subr.bf16.mxu0 %v1945
    %2296 = vmatpush1.bf16.msra.mxu0 %v1944
    %2297 = vmatprep.subr.bf16.mxu0 %v1949
    %2298 = vmatpush1.bf16.msra.mxu0 %v1948
    %2299 = vmatprep.subr.bf16.mxu0 %v1953
    %2300 = vmatpush1.bf16.msra.mxu0 %v1952
    %2301 = vmatprep.subr.bf16.mxu0 %v1957
    %2302 = vmatpush1.bf16.msra.mxu0 %v1956
    %2303 = vmatprep.subr.bf16.mxu0 %v1961
    %2304 = vmatpush1.bf16.msra.mxu0 %v1960
    %2305 = vmatprep.subr.bf16.mxu0 %v1965
    %2306 = vmatpush1.bf16.msra.mxu0 %v1964
    %2307 = vmatprep.subr.bf16.mxu0 %v1969
    %2308 = vmatpush1.bf16.msra.mxu0 %v1968
    %2309 = vmatprep.subr.bf16.mxu0 %v1973
    %2310 = vmatpush1.bf16.msra.mxu0 %v1972
    %2311 = vmatprep.subr.bf16.mxu0 %v1977
    %2312 = vmatpush1.bf16.msra.mxu0 %v1976
    %2313 = vmatprep.subr.bf16.mxu0 %v1981
    %2314 = vmatpush1.bf16.msra.mxu0 %v1980
    %2315 = vmatprep.subr.bf16.mxu0 %v1985
    %2316 = vmatpush1.bf16.msra.mxu0 %v1984
    %2317 = vmatprep.subr.bf16.mxu0 %v1989
    %2318 = vmatpush1.bf16.msra.mxu0 %v1988
    %2319 = vmatprep.subr.bf16.mxu0 %v1993
    %2320 = vmatpush1.bf16.msra.mxu0 %v1992
    %2321 = vmatprep.subr.bf16.mxu0 %v1997
    %2322 = vmatpush1.bf16.msra.mxu0 %v1996
    %2323 = vmatprep.mubr.bf16.mxu0 %v2272
    %2324 = vmatmul.mubr.bf16.gmra.mrb[0].mxu0 %v2271
    %v2325 = vpop.f32.mrb[0].mxu0
    %v2326 = vadd.f32 0.0, %v2325
    %v2327 = vpop.f32.mrb[0].mxu0
    %v2328 = vadd.f32 0.0, %v2327
    %v2329 = vpop.f32.mrb[0].mxu0
    %v2330 = vpop.f32.mrb[0].mxu0
    %2331 = vdwg.mxu0
    %2332 = vmatprep.subr.bf16.mxu0 %v2001
    %2333 = vmatpush1.bf16.msra.mxu0 %v2000
    %2334 = vmatprep.subr.bf16.mxu0 %v2005
    %2335 = vmatpush1.bf16.msra.mxu0 %v2004
    %2336 = vmatprep.subr.bf16.mxu0 %v2009
    %2337 = vmatpush1.bf16.msra.mxu0 %v2008
    %2338 = vmatprep.subr.bf16.mxu0 %v2013
    %2339 = vmatpush1.bf16.msra.mxu0 %v2012
    %2340 = vmatprep.subr.bf16.mxu0 %v2017
    %2341 = vmatpush1.bf16.msra.mxu0 %v2016
    %2342 = vmatprep.subr.bf16.mxu0 %v2021
    %2343 = vmatpush1.bf16.msra.mxu0 %v2020
    %2344 = vmatprep.subr.bf16.mxu0 %v2025
    %2345 = vmatpush1.bf16.msra.mxu0 %v2024
    %2346 = vmatprep.subr.bf16.mxu0 %v2029
    %2347 = vmatpush1.bf16.msra.mxu0 %v2028
    %2348 = vmatprep.subr.bf16.mxu0 %v2033
    %2349 = vmatpush1.bf16.msra.mxu0 %v2032
    %2350 = vmatprep.subr.bf16.mxu0 %v2037
    %2351 = vmatpush1.bf16.msra.mxu0 %v2036
    %2352 = vmatprep.subr.bf16.mxu0 %v2041
    %2353 = vmatpush1.bf16.msra.mxu0 %v2040
    %2354 = vmatprep.subr.bf16.mxu0 %v2045
    %2355 = vmatpush1.bf16.msra.mxu0 %v2044
    %2356 = vmatprep.subr.bf16.mxu0 %v2049
    %2357 = vmatpush1.bf16.msra.mxu0 %v2048
    %2358 = vmatprep.subr.bf16.mxu0 %v2053
    %2359 = vmatpush1.bf16.msra.mxu0 %v2052
    %2360 = vmatprep.subr.bf16.mxu0 %v2057
    %2361 = vmatpush1.bf16.msra.mxu0 %v2056
    %2362 = vmatprep.subr.bf16.mxu0 %v2061
    %2363 = vmatpush1.bf16.msra.mxu0 %v2060
    %2364 = vmatprep.mubr.bf16.mxu0 %v2274
    %2365 = vmatmul.mubr.bf16.gmra.mrb[0].mxu0 %v2273
    %v2366 = vpop.f32.mrb[0].mxu0
    %v2367 = vadd.f32 %v2326, %v2366
    %v2368 = vpop.f32.mrb[0].mxu0
    %v2369 = vadd.f32 %v2328, %v2368
    %v2370 = vpop.f32.mrb[0].mxu0
    %v2371 = vpop.f32.mrb[0].mxu0
    %2372 = vdwg.mxu0
    %2373 = vmatprep.subr.bf16.mxu0 %v2065
    %2374 = vmatpush1.bf16.msra.mxu0 %v2064
    %2375 = vmatprep.subr.bf16.mxu0 %v2069
    %2376 = vmatpush1.bf16.msra.mxu0 %v2068
    %2377 = vmatprep.subr.bf16.mxu0 %v2073
    %2378 = vmatpush1.bf16.msra.mxu0 %v2072
    %2379 = vmatprep.subr.bf16.mxu0 %v2077
    %2380 = vmatpush1.bf16.msra.mxu0 %v2076
    %2381 = vmatprep.subr.bf16.mxu0 %v2081
    %2382 = vmatpush1.bf16.msra.mxu0 %v2080
    %2383 = vmatprep.subr.bf16.mxu0 %v2085
    %2384 = vmatpush1.bf16.msra.mxu0 %v2084
    %2385 = vmatprep.subr.bf16.mxu0 %v2089
    %2386 = vmatpush1.bf16.msra.mxu0 %v2088
    %2387 = vmatprep.subr.bf16.mxu0 %v2093
    %2388 = vmatpush1.bf16.msra.mxu0 %v2092
    %2389 = vmatprep.subr.bf16.mxu0 %v2097
    %2390 = vmatpush1.bf16.msra.mxu0 %v2096
    %2391 = vmatprep.subr.bf16.mxu0 %v2101
    %2392 = vmatpush1.bf16.msra.mxu0 %v2100
    %2393 = vmatprep.subr.bf16.mxu0 %v2105
    %2394 = vmatpush1.bf16.msra.mxu0 %v2104
    %2395 = vmatprep.subr.bf16.mxu0 %v2109
    %2396 = vmatpush1.bf16.msra.mxu0 %v2108
    %2397 = vmatprep.subr.bf16.mxu0 %v2113
    %2398 = vmatpush1.bf16.msra.mxu0 %v2112
    %2399 = vmatprep.subr.bf16.mxu0 %v2117
    %2400 = vmatpush1.bf16.msra.mxu0 %v2116
    %2401 = vmatprep.subr.bf16.mxu0 %v2121
    %2402 = vmatpush1.bf16.msra.mxu0 %v2120
    %2403 = vmatprep.subr.bf16.mxu0 %v2125
    %2404 = vmatpush1.bf16.msra.mxu0 %v2124
    %2405 = vmatprep.mubr.bf16.mxu0 %v2276
    %2406 = vmatmul.mubr.bf16.gmra.mrb[0].mxu0 %v2275
    %v2407 = vpop.f32.mrb[0].mxu0
    %v2408 = vadd.f32 %v2367, %v2407
    %v2409 = vpop.f32.mrb[0].mxu0
    %v2410 = vadd.f32 %v2369, %v2409
    %v2411 = vpop.f32.mrb[0].mxu0
    %v2412 = vpop.f32.mrb[0].mxu0
    %2413 = vdwg.mxu0
    %2414 = vmatprep.subr.bf16.mxu0 %v2129
    %2415 = vmatpush1.bf16.msra.mxu0 %v2128
    %2416 = vmatprep.subr.bf16.mxu0 %v2133
    %2417 = vmatpush1.bf16.msra.mxu0 %v2132
    %2418 = vmatprep.subr.bf16.mxu0 %v2137
    %2419 = vmatpush1.bf16.msra.mxu0 %v2136
    %2420 = vmatprep.subr.bf16.mxu0 %v2141
    %2421 = vmatpush1.bf16.msra.mxu0 %v2140
    %2422 = vmatprep.subr.bf16.mxu0 %v2145
    %2423 = vmatpush1.bf16.msra.mxu0 %v2144
    %2424 = vmatprep.subr.bf16.mxu0 %v2149
    %2425 = vmatpush1.bf16.msra.mxu0 %v2148
    %2426 = vmatprep.subr.bf16.mxu0 %v2153
    %2427 = vmatpush1.bf16.msra.mxu0 %v2152
    %2428 = vmatprep.subr.bf16.mxu0 %v2157
    %2429 = vmatpush1.bf16.msra.mxu0 %v2156
    %2430 = vmatprep.subr.bf16.mxu0 %v2161
    %2431 = vmatpush1.bf16.msra.mxu0 %v2160
    %2432 = vmatprep.subr.bf16.mxu0 %v2165
    %2433 = vmatpush1.bf16.msra.mxu0 %v2164
    %2434 = vmatprep.subr.bf16.mxu0 %v2169
    %2435 = vmatpush1.bf16.msra.mxu0 %v2168
    %2436 = vmatprep.subr.bf16.mxu0 %v2173
    %2437 = vmatpush1.bf16.msra.mxu0 %v2172
    %2438 = vmatprep.subr.bf16.mxu0 %v2177
    %2439 = vmatpush1.bf16.msra.mxu0 %v2176
    %2440 = vmatprep.subr.bf16.mxu0 %v2181
    %2441 = vmatpush1.bf16.msra.mxu0 %v2180
    %2442 = vmatprep.subr.bf16.mxu0 %v2185
    %2443 = vmatpush1.bf16.msra.mxu0 %v2184
    %2444 = vmatprep.subr.bf16.mxu0 %v2189
    %2445 = vmatpush1.bf16.msra.mxu0 %v2188
    %2446 = vmatprep.mubr.bf16.mxu0 %v2278
    %2447 = vmatmul.mubr.bf16.gmra.mrb[0].mxu0 %v2277
    %v2448 = vpop.f32.mrb[0].mxu0
    %v2449 = vadd.f32 %v2408, %v2448
    %v2450 = vpop.f32.mrb[0].mxu0
    %v2451 = vadd.f32 %v2410, %v2450
    %v2452 = vpop.f32.mrb[0].mxu0
    %v2453 = vpop.f32.mrb[0].mxu0
    %2454 = vdwg.mxu0
    %2455 = vmatprep.subr.bf16.mxu0 %v2193
    %2456 = vmatpush1.bf16.msra.mxu0 %v2192
    %2457 = vmatprep.subr.bf16.mxu0 %v2197
    %2458 = vmatpush1.bf16.msra.mxu0 %v2196
    %2459 = vmatprep.subr.bf16.mxu0 %v2201
    %2460 = vmatpush1.bf16.msra.mxu0 %v2200
    %2461 = vmatprep.subr.bf16.mxu0 %v2205
    %2462 = vmatpush1.bf16.msra.mxu0 %v2204
    %2463 = vmatprep.subr.bf16.mxu0 %v2209
    %2464 = vmatpush1.bf16.msra.mxu0 %v2208
    %2465 = vmatprep.subr.bf16.mxu0 %v2213
    %2466 = vmatpush1.bf16.msra.mxu0 %v2212
    %2467 = vmatprep.subr.bf16.mxu0 %v2217
    %2468 = vmatpush1.bf16.msra.mxu0 %v2216
    %2469 = vmatprep.subr.bf16.mxu0 %v2221
    %2470 = vmatpush1.bf16.msra.mxu0 %v2220
    %2471 = vmatprep.subr.bf16.mxu0 %v2225
    %2472 = vmatpush1.bf16.msra.mxu0 %v2224
    %2473 = vmatprep.subr.bf16.mxu0 %v2229
    %2474 = vmatpush1.bf16.msra.mxu0 %v2228
    %2475 = vmatprep.subr.bf16.mxu0 %v2233
    %2476 = vmatpush1.bf16.msra.mxu0 %v2232
    %2477 = vmatprep.subr.bf16.mxu0 %v2237
    %2478 = vmatpush1.bf16.msra.mxu0 %v2236
    %2479 = vmatprep.subr.bf16.mxu0 %v2241
    %2480 = vmatpush1.bf16.msra.mxu0 %v2240
    %2481 = vmatprep.subr.bf16.mxu0 %v2245
    %2482 = vmatpush1.bf16.msra.mxu0 %v2244
    %2483 = vmatprep.subr.bf16.mxu0 %v2249
    %2484 = vmatpush1.bf16.msra.mxu0 %v2248
    %2485 = vmatprep.subr.bf16.mxu0 %v2253
    %2486 = vmatpush1.bf16.msra.mxu0 %v2252
    %2487 = vmatprep.mubr.bf16.mxu0 %v2280
    %2488 = vmatmul.mubr.bf16.gmra.mrb[0].mxu0 %v2279
    %v2489 = vpop.f32.mrb[0].mxu0
    %v2490 = vadd.f32 %v2449, %v2489
    %v2491 = vpop.f32.mrb[0].mxu0
    %v2492 = vadd.f32 %v2451, %v2491
    %v2493 = vpop.f32.mrb[0].mxu0
    %v2494 = vpop.f32.mrb[0].mxu0
    %2495 = vdwg.mxu0
    %2496 = vmatprep.subr.bf16.mxu0 %v1939
    %2497 = vmatpush1.bf16.msra.mxu0 %v1938
    %2498 = vmatprep.subr.bf16.mxu0 %v1943
    %2499 = vmatpush1.bf16.msra.mxu0 %v1942
    %2500 = vmatprep.subr.bf16.mxu0 %v1947
    %2501 = vmatpush1.bf16.msra.mxu0 %v1946
    %2502 = vmatprep.subr.bf16.mxu0 %v1951
    %2503 = vmatpush1.bf16.msra.mxu0 %v1950
    %2504 = vmatprep.subr.bf16.mxu0 %v1955
    %2505 = vmatpush1.bf16.msra.mxu0 %v1954
    %2506 = vmatprep.subr.bf16.mxu0 %v1959
    %2507 = vmatpush1.bf16.msra.mxu0 %v1958
    %2508 = vmatprep.subr.bf16.mxu0 %v1963
    %2509 = vmatpush1.bf16.msra.mxu0 %v1962
    %2510 = vmatprep.subr.bf16.mxu0 %v1967
    %2511 = vmatpush1.bf16.msra.mxu0 %v1966
    %2512 = vmatprep.subr.bf16.mxu0 %v1971
    %2513 = vmatpush1.bf16.msra.mxu0 %v1970
    %2514 = vmatprep.subr.bf16.mxu0 %v1975
    %2515 = vmatpush1.bf16.msra.mxu0 %v1974
    %2516 = vmatprep.subr.bf16.mxu0 %v1979
    %2517 = vmatpush1.bf16.msra.mxu0 %v1978
    %2518 = vmatprep.subr.bf16.mxu0 %v1983
    %2519 = vmatpush1.bf16.msra.mxu0 %v1982
    %2520 = vmatprep.subr.bf16.mxu0 %v1987
    %2521 = vmatpush1.bf16.msra.mxu0 %v1986
    %2522 = vmatprep.subr.bf16.mxu0 %v1991
    %2523 = vmatpush1.bf16.msra.mxu0 %v1990
    %2524 = vmatprep.subr.bf16.mxu0 %v1995
    %2525 = vmatpush1.bf16.msra.mxu0 %v1994
    %2526 = vmatprep.subr.bf16.mxu0 %v1999
    %2527 = vmatpush1.bf16.msra.mxu0 %v1998
    %2528 = vmatprep.mubr.bf16.mxu0 %v2272
    %2529 = vmatmul.mubr.bf16.gmra.mrb[0].mxu0 %v2271
    %v2530 = vpop.f32.mrb[0].mxu0
    %v2531 = vadd.f32 0.0, %v2530
    %v2532 = vpop.f32.mrb[0].mxu0
    %v2533 = vadd.f32 0.0, %v2532
    %v2534 = vpop.f32.mrb[0].mxu0
    %v2535 = vpop.f32.mrb[0].mxu0
    %2536 = vdwg.mxu0
    %2537 = vmatprep.subr.bf16.mxu0 %v2003
    %2538 = vmatpush1.bf16.msra.mxu0 %v2002
    %2539 = vmatprep.subr.bf16.mxu0 %v2007
    %2540 = vmatpush1.bf16.msra.mxu0 %v2006
    %2541 = vmatprep.subr.bf16.mxu0 %v2011
    %2542 = vmatpush1.bf16.msra.mxu0 %v2010
    %2543 = vmatprep.subr.bf16.mxu0 %v2015
    %2544 = vmatpush1.bf16.msra.mxu0 %v2014
    %2545 = vmatprep.subr.bf16.mxu0 %v2019
    %2546 = vmatpush1.bf16.msra.mxu0 %v2018
    %2547 = vmatprep.subr.bf16.mxu0 %v2023
    %2548 = vmatpush1.bf16.msra.mxu0 %v2022
    %2549 = vmatprep.subr.bf16.mxu0 %v2027
    %2550 = vmatpush1.bf16.msra.mxu0 %v2026
    %2551 = vmatprep.subr.bf16.mxu0 %v2031
    %2552 = vmatpush1.bf16.msra.mxu0 %v2030
    %2553 = vmatprep.subr.bf16.mxu0 %v2035
    %2554 = vmatpush1.bf16.msra.mxu0 %v2034
    %2555 = vmatprep.subr.bf16.mxu0 %v2039
    %2556 = vmatpush1.bf16.msra.mxu0 %v2038
    %2557 = vmatprep.subr.bf16.mxu0 %v2043
    %2558 = vmatpush1.bf16.msra.mxu0 %v2042
    %2559 = vmatprep.subr.bf16.mxu0 %v2047
    %2560 = vmatpush1.bf16.msra.mxu0 %v2046
    %2561 = vmatprep.subr.bf16.mxu0 %v2051
    %2562 = vmatpush1.bf16.msra.mxu0 %v2050
    %2563 = vmatprep.subr.bf16.mxu0 %v2055
    %2564 = vmatpush1.bf16.msra.mxu0 %v2054
    %2565 = vmatprep.subr.bf16.mxu0 %v2059
    %2566 = vmatpush1.bf16.msra.mxu0 %v2058
    %2567 = vmatprep.subr.bf16.mxu0 %v2063
    %2568 = vmatpush1.bf16.msra.mxu0 %v2062
    %2569 = vmatprep.mubr.bf16.mxu0 %v2274
    %2570 = vmatmul.mubr.bf16.gmra.mrb[0].mxu0 %v2273
    %v2571 = vpop.f32.mrb[0].mxu0
    %v2572 = vadd.f32 %v2531, %v2571
    %v2573 = vpop.f32.mrb[0].mxu0
    %v2574 = vadd.f32 %v2533, %v2573
    %v2575 = vpop.f32.mrb[0].mxu0
    %v2576 = vpop.f32.mrb[0].mxu0
    %2577 = vdwg.mxu0
    %2578 = vmatprep.subr.bf16.mxu0 %v2067
    %2579 = vmatpush1.bf16.msra.mxu0 %v2066
    %2580 = vmatprep.subr.bf16.mxu0 %v2071
    %2581 = vmatpush1.bf16.msra.mxu0 %v2070
    %2582 = vmatprep.subr.bf16.mxu0 %v2075
    %2583 = vmatpush1.bf16.msra.mxu0 %v2074
    %2584 = vmatprep.subr.bf16.mxu0 %v2079
    %2585 = vmatpush1.bf16.msra.mxu0 %v2078
    %2586 = vmatprep.subr.bf16.mxu0 %v2083
    %2587 = vmatpush1.bf16.msra.mxu0 %v2082
    %2588 = vmatprep.subr.bf16.mxu0 %v2087
    %2589 = vmatpush1.bf16.msra.mxu0 %v2086
    %2590 = vmatprep.subr.bf16.mxu0 %v2091
    %2591 = vmatpush1.bf16.msra.mxu0 %v2090
    %2592 = vmatprep.subr.bf16.mxu0 %v2095
    %2593 = vmatpush1.bf16.msra.mxu0 %v2094
    %2594 = vmatprep.subr.bf16.mxu0 %v2099
    %2595 = vmatpush1.bf16.msra.mxu0 %v2098
    %2596 = vmatprep.subr.bf16.mxu0 %v2103
    %2597 = vmatpush1.bf16.msra.mxu0 %v2102
    %2598 = vmatprep.subr.bf16.mxu0 %v2107
    %2599 = vmatpush1.bf16.msra.mxu0 %v2106
    %2600 = vmatprep.subr.bf16.mxu0 %v2111
    %2601 = vmatpush1.bf16.msra.mxu0 %v2110
    %2602 = vmatprep.subr.bf16.mxu0 %v2115
    %2603 = vmatpush1.bf16.msra.mxu0 %v2114
    %2604 = vmatprep.subr.bf16.mxu0 %v2119
    %2605 = vmatpush1.bf16.msra.mxu0 %v2118
    %2606 = vmatprep.subr.bf16.mxu0 %v2123
    %2607 = vmatpush1.bf16.msra.mxu0 %v2122
    %2608 = vmatprep.subr.bf16.mxu0 %v2127
    %2609 = vmatpush1.bf16.msra.mxu0 %v2126
    %2610 = vmatprep.mubr.bf16.mxu0 %v2276
    %2611 = vmatmul.mubr.bf16.gmra.mrb[0].mxu0 %v2275
    %v2612 = vpop.f32.mrb[0].mxu0
    %v2613 = vadd.f32 %v2572, %v2612
    %v2614 = vpop.f32.mrb[0].mxu0
    %v2615 = vadd.f32 %v2574, %v2614
    %v2616 = vpop.f32.mrb[0].mxu0
    %v2617 = vpop.f32.mrb[0].mxu0
    %2618 = vdwg.mxu0
    %2619 = vmatprep.subr.bf16.mxu0 %v2131
    %2620 = vmatpush1.bf16.msra.mxu0 %v2130
    %2621 = vmatprep.subr.bf16.mxu0 %v2135
    %2622 = vmatpush1.bf16.msra.mxu0 %v2134
    %2623 = vmatprep.subr.bf16.mxu0 %v2139
    %2624 = vmatpush1.bf16.msra.mxu0 %v2138
    %2625 = vmatprep.subr.bf16.mxu0 %v2143
    %2626 = vmatpush1.bf16.msra.mxu0 %v2142
    %2627 = vmatprep.subr.bf16.mxu0 %v2147
    %2628 = vmatpush1.bf16.msra.mxu0 %v2146
    %2629 = vmatprep.subr.bf16.mxu0 %v2151
    %2630 = vmatpush1.bf16.msra.mxu0 %v2150
    %2631 = vmatprep.subr.bf16.mxu0 %v2155
    %2632 = vmatpush1.bf16.msra.mxu0 %v2154
    %2633 = vmatprep.subr.bf16.mxu0 %v2159
    %2634 = vmatpush1.bf16.msra.mxu0 %v2158
    %2635 = vmatprep.subr.bf16.mxu0 %v2163
    %2636 = vmatpush1.bf16.msra.mxu0 %v2162
    %2637 = vmatprep.subr.bf16.mxu0 %v2167
    %2638 = vmatpush1.bf16.msra.mxu0 %v2166
    %2639 = vmatprep.subr.bf16.mxu0 %v2171
    %2640 = vmatpush1.bf16.msra.mxu0 %v2170
    %2641 = vmatprep.subr.bf16.mxu0 %v2175
    %2642 = vmatpush1.bf16.msra.mxu0 %v2174
    %2643 = vmatprep.subr.bf16.mxu0 %v2179
    %2644 = vmatpush1.bf16.msra.mxu0 %v2178
    %2645 = vmatprep.subr.bf16.mxu0 %v2183
    %2646 = vmatpush1.bf16.msra.mxu0 %v2182
    %2647 = vmatprep.subr.bf16.mxu0 %v2187
    %2648 = vmatpush1.bf16.msra.mxu0 %v2186
    %2649 = vmatprep.subr.bf16.mxu0 %v2191
    %2650 = vmatpush1.bf16.msra.mxu0 %v2190
    %2651 = vmatprep.mubr.bf16.mxu0 %v2278
    %2652 = vmatmul.mubr.bf16.gmra.mrb[0].mxu0 %v2277
    %v2653 = vpop.f32.mrb[0].mxu0
    %v2654 = vadd.f32 %v2613, %v2653
    %v2655 = vpop.f32.mrb[0].mxu0
    %v2656 = vadd.f32 %v2615, %v2655
    %v2657 = vpop.f32.mrb[0].mxu0
    %v2658 = vpop.f32.mrb[0].mxu0
    %2659 = vdwg.mxu0
    %2660 = vmatprep.subr.bf16.mxu0 %v2195
    %2661 = vmatpush1.bf16.msra.mxu0 %v2194
    %2662 = vmatprep.subr.bf16.mxu0 %v2199
    %2663 = vmatpush1.bf16.msra.mxu0 %v2198
    %2664 = vmatprep.subr.bf16.mxu0 %v2203
    %2665 = vmatpush1.bf16.msra.mxu0 %v2202
    %2666 = vmatprep.subr.bf16.mxu0 %v2207
    %2667 = vmatpush1.bf16.msra.mxu0 %v2206
    %2668 = vmatprep.subr.bf16.mxu0 %v2211
    %2669 = vmatpush1.bf16.msra.mxu0 %v2210
    %2670 = vmatprep.subr.bf16.mxu0 %v2215
    %2671 = vmatpush1.bf16.msra.mxu0 %v2214
    %2672 = vmatprep.subr.bf16.mxu0 %v2219
    %2673 = vmatpush1.bf16.msra.mxu0 %v2218
    %2674 = vmatprep.subr.bf16.mxu0 %v2223
    %2675 = vmatpush1.bf16.msra.mxu0 %v2222
    %2676 = vmatprep.subr.bf16.mxu0 %v2227
    %2677 = vmatpush1.bf16.msra.mxu0 %v2226
    %2678 = vmatprep.subr.bf16.mxu0 %v2231
    %2679 = vmatpush1.bf16.msra.mxu0 %v2230
    %2680 = vmatprep.subr.bf16.mxu0 %v2235
    %2681 = vmatpush1.bf16.msra.mxu0 %v2234
    %2682 = vmatprep.subr.bf16.mxu0 %v2239
    %2683 = vmatpush1.bf16.msra.mxu0 %v2238
    %2684 = vmatprep.subr.bf16.mxu0 %v2243
    %2685 = vmatpush1.bf16.msra.mxu0 %v2242
    %2686 = vmatprep.subr.bf16.mxu0 %v2247
    %2687 = vmatpush1.bf16.msra.mxu0 %v2246
    %2688 = vmatprep.subr.bf16.mxu0 %v2251
    %2689 = vmatpush1.bf16.msra.mxu0 %v2250
    %2690 = vmatprep.subr.bf16.mxu0 %v2255
    %2691 = vmatpush1.bf16.msra.mxu0 %v2254
    %2692 = vmatprep.mubr.bf16.mxu0 %v2280
    %2693 = vmatmul.mubr.bf16.gmra.mrb[0].mxu0 %v2279
    %v2694 = vpop.f32.mrb[0].mxu0
    %v2695 = vadd.f32 %v2654, %v2694
    %v2696 = vpop.f32.mrb[0].mxu0
    %v2697 = vadd.f32 %v2656, %v2696
    %v2698 = vpop.f32.mrb[0].mxu0
    %v2699 = vpop.f32.mrb[0].mxu0
    %2700 = vdwg.mxu0
    %v2701 = vpack.c.bf16 %v1919, %v1919
    %v2702 = vpack.c.bf16 %v1920, %v1920
    %v2703 = vpack.c.bf16 %v1921, %v1921
    %v2704 = vpack.c.bf16 %v1922, %v1922
    %v2705 = vld [vmem:[%s9] sm:$0xf]
    %v2706 = vld [vmem:[%s9 + $0x4] sm:$0xf]
    %v2707 = vld [vmem:[%s9 + $0x8] sm:$0xf]
    %v2708 = vld [vmem:[%s9 + $0xc] sm:$0xf]
    %v2709 = vld [vmem:[%s9 + $0x10] sm:$0xf]
    %v2710 = vld [vmem:[%s9 + $0x14] sm:$0xf]
    %v2711 = vld [vmem:[%s9 + $0x18] sm:$0xf]
    %v2712 = vld [vmem:[%s9 + $0x1c] sm:$0xf]
    %v2713 = vld [vmem:[%s9 + $0x20] sm:$0xf]
    %v2714 = vld [vmem:[%s9 + $0x24] sm:$0xf]
    %v2715 = vld [vmem:[%s9 + $0x28] sm:$0xf]
    %v2716 = vld [vmem:[%s9 + $0x2c] sm:$0xf]
    %v2717 = vld [vmem:[%s9 + $0x30] sm:$0xf]
    %v2718 = vld [vmem:[%s9 + $0x34] sm:$0xf]
    %v2719 = vld [vmem:[%s9 + $0x38] sm:$0xf]
    %v2720 = vld [vmem:[%s9 + $0x3c] sm:$0xf]
    %v2721 = vld [vmem:[%s9 + $0x40] sm:$0xf]
    %v2722 = vld [vmem:[%s9 + $0x44] sm:$0xf]
    %v2723 = vld [vmem:[%s9 + $0x48] sm:$0xf]
    %v2724 = vld [vmem:[%s9 + $0x4c] sm:$0xf]
    %v2725 = vld [vmem:[%s9 + $0x50] sm:$0xf]
    %v2726 = vld [vmem:[%s9 + $0x54] sm:$0xf]
    %v2727 = vld [vmem:[%s9 + $0x58] sm:$0xf]
    %v2728 = vld [vmem:[%s9 + $0x5c] sm:$0xf]
    %v2729 = vld [vmem:[%s9 + $0x60] sm:$0xf]
    %v2730 = vld [vmem:[%s9 + $0x64] sm:$0xf]
    %v2731 = vld [vmem:[%s9 + $0x68] sm:$0xf]
    %v2732 = vld [vmem:[%s9 + $0x6c] sm:$0xf]
    %v2733 = vld [vmem:[%s9 + $0x70] sm:$0xf]
    %v2734 = vld [vmem:[%s9 + $0x74] sm:$0xf]
    %v2735 = vld [vmem:[%s9 + $0x78] sm:$0xf]
    %v2736 = vld [vmem:[%s9 + $0x7c] sm:$0xf]
    %v2737 = vld [vmem:[%s9 + $0x80] sm:$0xf]
    %v2738 = vld [vmem:[%s9 + $0x84] sm:$0xf]
    %v2739 = vld [vmem:[%s9 + $0x88] sm:$0xf]
    %v2740 = vld [vmem:[%s9 + $0x8c] sm:$0xf]
    %v2741 = vld [vmem:[%s9 + $0x90] sm:$0xf]
    %v2742 = vld [vmem:[%s9 + $0x94] sm:$0xf]
    %v2743 = vld [vmem:[%s9 + $0x98] sm:$0xf]
    %v2744 = vld [vmem:[%s9 + $0x9c] sm:$0xf]
    %v2745 = vld [vmem:[%s9 + $0xa0] sm:$0xf]
    %v2746 = vld [vmem:[%s9 + $0xa4] sm:$0xf]
    %v2747 = vld [vmem:[%s9 + $0xa8] sm:$0xf]
    %v2748 = vld [vmem:[%s9 + $0xac] sm:$0xf]
    %v2749 = vld [vmem:[%s9 + $0xb0] sm:$0xf]
    %v2750 = vld [vmem:[%s9 + $0xb4] sm:$0xf]
    %v2751 = vld [vmem:[%s9 + $0xb8] sm:$0xf]
    %v2752 = vld [vmem:[%s9 + $0xbc] sm:$0xf]
    %v2753 = vld [vmem:[%s9 + $0xc0] sm:$0xf]
    %v2754 = vld [vmem:[%s9 + $0xc4] sm:$0xf]
    %v2755 = vld [vmem:[%s9 + $0xc8] sm:$0xf]
    %v2756 = vld [vmem:[%s9 + $0xcc] sm:$0xf]
    %v2757 = vld [vmem:[%s9 + $0xd0] sm:$0xf]
    %v2758 = vld [vmem:[%s9 + $0xd4] sm:$0xf]
    %v2759 = vld [vmem:[%s9 + $0xd8] sm:$0xf]
    %v2760 = vld [vmem:[%s9 + $0xdc] sm:$0xf]
    %v2761 = vld [vmem:[%s9 + $0xe0] sm:$0xf]
    %v2762 = vld [vmem:[%s9 + $0xe4] sm:$0xf]
    %v2763 = vld [vmem:[%s9 + $0xe8] sm:$0xf]
    %v2764 = vld [vmem:[%s9 + $0xec] sm:$0xf]
    %v2765 = vld [vmem:[%s9 + $0xf0] sm:$0xf]
    %v2766 = vld [vmem:[%s9 + $0xf4] sm:$0xf]
    %v2767 = vld [vmem:[%s9 + $0xf8] sm:$0xf]
    %v2768 = vld [vmem:[%s9 + $0xfc] sm:$0xf]
    %v2769 = vpack.c.bf16 %v2490, %v2490
    %v2770 = vpack.c.bf16 %v2492, %v2492
    %v2771 = vpack.c.bf16 %v2695, %v2695
    %v2772 = vpack.c.bf16 %v2697, %v2697
    %v2773 = vld [vmem:[%s9 + $0x100] sm:$0xf]
    %v2774 = vld [vmem:[%s9 + $0x104] sm:$0xf]
    %v2775 = vld [vmem:[%s9 + $0x108] sm:$0xf]
    %v2776 = vld [vmem:[%s9 + $0x10c] sm:$0xf]
    %v2777 = vld [vmem:[%s9 + $0x110] sm:$0xf]
    %v2778 = vld [vmem:[%s9 + $0x114] sm:$0xf]
    %v2779 = vld [vmem:[%s9 + $0x118] sm:$0xf]
    %v2780 = vld [vmem:[%s9 + $0x11c] sm:$0xf]
    %v2781 = vld [vmem:[%s9 + $0x120] sm:$0xf]
    %v2782 = vld [vmem:[%s9 + $0x124] sm:$0xf]
    %v2783 = vld [vmem:[%s9 + $0x128] sm:$0xf]
    %v2784 = vld [vmem:[%s9 + $0x12c] sm:$0xf]
    %v2785 = vld [vmem:[%s9 + $0x130] sm:$0xf]
    %v2786 = vld [vmem:[%s9 + $0x134] sm:$0xf]
    %v2787 = vld [vmem:[%s9 + $0x138] sm:$0xf]
    %v2788 = vld [vmem:[%s9 + $0x13c] sm:$0xf]
    %v2789 = vld [vmem:[%s9 + $0x140] sm:$0xf]
    %v2790 = vld [vmem:[%s9 + $0x144] sm:$0xf]
    %v2791 = vld [vmem:[%s9 + $0x148] sm:$0xf]
    %v2792 = vld [vmem:[%s9 + $0x14c] sm:$0xf]
    %v2793 = vld [vmem:[%s9 + $0x150] sm:$0xf]
    %v2794 = vld [vmem:[%s9 + $0x154] sm:$0xf]
    %v2795 = vld [vmem:[%s9 + $0x158] sm:$0xf]
    %v2796 = vld [vmem:[%s9 + $0x15c] sm:$0xf]
    %v2797 = vld [vmem:[%s9 + $0x160] sm:$0xf]
    %v2798 = vld [vmem:[%s9 + $0x164] sm:$0xf]
    %v2799 = vld [vmem:[%s9 + $0x168] sm:$0xf]
    %v2800 = vld [vmem:[%s9 + $0x16c] sm:$0xf]
    %v2801 = vld [vmem:[%s9 + $0x170] sm:$0xf]
    %v2802 = vld [vmem:[%s9 + $0x174] sm:$0xf]
    %v2803 = vld [vmem:[%s9 + $0x178] sm:$0xf]
    %v2804 = vld [vmem:[%s9 + $0x17c] sm:$0xf]
    %v2805 = vld [vmem:[%s9 + $0x180] sm:$0xf]
    %v2806 = vld [vmem:[%s9 + $0x184] sm:$0xf]
    %v2807 = vld [vmem:[%s9 + $0x188] sm:$0xf]
    %v2808 = vld [vmem:[%s9 + $0x18c] sm:$0xf]
    %v2809 = vld [vmem:[%s9 + $0x190] sm:$0xf]
    %v2810 = vld [vmem:[%s9 + $0x194] sm:$0xf]
    %v2811 = vld [vmem:[%s9 + $0x198] sm:$0xf]
    %v2812 = vld [vmem:[%s9 + $0x19c] sm:$0xf]
    %v2813 = vld [vmem:[%s9 + $0x1a0] sm:$0xf]
    %v2814 = vld [vmem:[%s9 + $0x1a4] sm:$0xf]
    %v2815 = vld [vmem:[%s9 + $0x1a8] sm:$0xf]
    %v2816 = vld [vmem:[%s9 + $0x1ac] sm:$0xf]
    %v2817 = vld [vmem:[%s9 + $0x1b0] sm:$0xf]
    %v2818 = vld [vmem:[%s9 + $0x1b4] sm:$0xf]
    %v2819 = vld [vmem:[%s9 + $0x1b8] sm:$0xf]
    %v2820 = vld [vmem:[%s9 + $0x1bc] sm:$0xf]
    %v2821 = vld [vmem:[%s9 + $0x1c0] sm:$0xf]
    %v2822 = vld [vmem:[%s9 + $0x1c4] sm:$0xf]
    %v2823 = vld [vmem:[%s9 + $0x1c8] sm:$0xf]
    %v2824 = vld [vmem:[%s9 + $0x1cc] sm:$0xf]
    %v2825 = vld [vmem:[%s9 + $0x1d0] sm:$0xf]
    %v2826 = vld [vmem:[%s9 + $0x1d4] sm:$0xf]
    %v2827 = vld [vmem:[%s9 + $0x1d8] sm:$0xf]
    %v2828 = vld [vmem:[%s9 + $0x1dc] sm:$0xf]
    %v2829 = vld [vmem:[%s9 + $0x1e0] sm:$0xf]
    %v2830 = vld [vmem:[%s9 + $0x1e4] sm:$0xf]
    %v2831 = vld [vmem:[%s9 + $0x1e8] sm:$0xf]
    %v2832 = vld [vmem:[%s9 + $0x1ec] sm:$0xf]
    %v2833 = vld [vmem:[%s9 + $0x1f0] sm:$0xf]
    %v2834 = vld [vmem:[%s9 + $0x1f4] sm:$0xf]
    %v2835 = vld [vmem:[%s9 + $0x1f8] sm:$0xf]
    %v2836 = vld [vmem:[%s9 + $0x1fc] sm:$0xf]
    %v2901 = vunpack.c.l.b16 %v2773
    %v2902 = vunpack.c.l.b16 %v2774
    %v2903 = vunpack.c.l.b16 %v2775
    %v2904 = vunpack.c.l.b16 %v2776
    %v2905 = vunpack.c.l.b16 %v2777
    %v2906 = vunpack.c.l.b16 %v2778
    %v2907 = vunpack.c.l.b16 %v2779
    %v2908 = vunpack.c.l.b16 %v2780
    %v2909 = vunpack.c.l.b16 %v2781
    %v2910 = vunpack.c.l.b16 %v2782
    %v2911 = vunpack.c.l.b16 %v2783
    %v2912 = vunpack.c.l.b16 %v2784
    %v2913 = vunpack.c.l.b16 %v2785
    %v2914 = vunpack.c.l.b16 %v2786
    %v2915 = vunpack.c.l.b16 %v2787
    %v2916 = vunpack.c.l.b16 %v2788
    %v2917 = vunpack.c.l.b16 %v2789
    %v2918 = vunpack.c.l.b16 %v2790
    %v2919 = vunpack.c.l.b16 %v2791
    %v2920 = vunpack.c.l.b16 %v2792
    %v2921 = vunpack.c.l.b16 %v2793
    %v2922 = vunpack.c.l.b16 %v2794
    %v2923 = vunpack.c.l.b16 %v2795
    %v2924 = vunpack.c.l.b16 %v2796
    %v2925 = vunpack.c.l.b16 %v2797
    %v2926 = vunpack.c.l.b16 %v2798
    %v2927 = vunpack.c.l.b16 %v2799
    %v2928 = vunpack.c.l.b16 %v2800
    %v2929 = vunpack.c.l.b16 %v2801
    %v2930 = vunpack.c.l.b16 %v2802
    %v2931 = vunpack.c.l.b16 %v2803
    %v2932 = vunpack.c.l.b16 %v2804
    %v2933 = vunpack.c.l.b16 %v2805
    %v2934 = vunpack.c.l.b16 %v2806
    %v2935 = vunpack.c.l.b16 %v2807
    %v2936 = vunpack.c.l.b16 %v2808
    %v2937 = vunpack.c.l.b16 %v2809
    %v2938 = vunpack.c.l.b16 %v2810
    %v2939 = vunpack.c.l.b16 %v2811
    %v2940 = vunpack.c.l.b16 %v2812
    %v2941 = vunpack.c.l.b16 %v2813
    %v2942 = vunpack.c.l.b16 %v2814
    %v2943 = vunpack.c.l.b16 %v2815
    %v2944 = vunpack.c.l.b16 %v2816
    %v2945 = vunpack.c.l.b16 %v2817
    %v2946 = vunpack.c.l.b16 %v2818
    %v2947 = vunpack.c.l.b16 %v2819
    %v2948 = vunpack.c.l.b16 %v2820
    %v2949 = vunpack.c.l.b16 %v2821
    %v2950 = vunpack.c.l.b16 %v2822
    %v2951 = vunpack.c.l.b16 %v2823
    %v2952 = vunpack.c.l.b16 %v2824
    %v2953 = vunpack.c.l.b16 %v2825
    %v2954 = vunpack.c.l.b16 %v2826
    %v2955 = vunpack.c.l.b16 %v2827
    %v2956 = vunpack.c.l.b16 %v2828
    %v2957 = vunpack.c.l.b16 %v2829
    %v2958 = vunpack.c.l.b16 %v2830
    %v2959 = vunpack.c.l.b16 %v2831
    %v2960 = vunpack.c.l.b16 %v2832
    %v2961 = vunpack.c.l.b16 %v2833
    %v2962 = vunpack.c.l.b16 %v2834
    %v2963 = vunpack.c.l.b16 %v2835
    %v2964 = vunpack.c.l.b16 %v2836
    %v2965 = vpack.c.b16 %v2902, %v2901
    %v2966 = vpack.c.b16 %v2904, %v2903
    %v2967 = vpack.c.b16 %v2906, %v2905
    %v2968 = vpack.c.b16 %v2908, %v2907
    %v2969 = vpack.c.b16 %v2910, %v2909
    %v2970 = vpack.c.b16 %v2912, %v2911
    %v2971 = vpack.c.b16 %v2914, %v2913
    %v2972 = vpack.c.b16 %v2916, %v2915
    %v2973 = vpack.c.b16 %v2918, %v2917
    %v2974 = vpack.c.b16 %v2920, %v2919
    %v2975 = vpack.c.b16 %v2922, %v2921
    %v2976 = vpack.c.b16 %v2924, %v2923
    %v2977 = vpack.c.b16 %v2926, %v2925
    %v2978 = vpack.c.b16 %v2928, %v2927
    %v2979 = vpack.c.b16 %v2930, %v2929
    %v2980 = vpack.c.b16 %v2932, %v2931
    %v2981 = vpack.c.b16 %v2934, %v2933
    %v2982 = vpack.c.b16 %v2936, %v2935
    %v2983 = vpack.c.b16 %v2938, %v2937
    %v2984 = vpack.c.b16 %v2940, %v2939
    %v2985 = vpack.c.b16 %v2942, %v2941
    %v2986 = vpack.c.b16 %v2944, %v2943
    %v2987 = vpack.c.b16 %v2946, %v2945
    %v2988 = vpack.c.b16 %v2948, %v2947
    %v2989 = vpack.c.b16 %v2950, %v2949
    %v2990 = vpack.c.b16 %v2952, %v2951
    %v2991 = vpack.c.b16 %v2954, %v2953
    %v2992 = vpack.c.b16 %v2956, %v2955
    %v2993 = vpack.c.b16 %v2958, %v2957
    %v2994 = vpack.c.b16 %v2960, %v2959
    %v2995 = vpack.c.b16 %v2962, %v2961
    %v2996 = vpack.c.b16 %v2964, %v2963
    %3029 = vmatprep.subr.bf16.mxu0 0
    %3030 = vmatpush1.bf16.msra.mxu0 %v2965
    %3031 = vmatprep.subr.bf16.mxu0 0
    %3032 = vmatpush1.bf16.msra.mxu0 %v2966
    %3033 = vmatprep.subr.bf16.mxu0 0
    %3034 = vmatpush1.bf16.msra.mxu0 %v2967
    %3035 = vmatprep.subr.bf16.mxu0 0
    %3036 = vmatpush1.bf16.msra.mxu0 %v2968
    %3037 = vmatprep.subr.bf16.mxu0 0
    %3038 = vmatpush1.bf16.msra.mxu0 %v2969
    %3039 = vmatprep.subr.bf16.mxu0 0
    %3040 = vmatpush1.bf16.msra.mxu0 %v2970
    %3041 = vmatprep.subr.bf16.mxu0 0
    %3042 = vmatpush1.bf16.msra.mxu0 %v2971
    %3043 = vmatprep.subr.bf16.mxu0 0
    %3044 = vmatpush1.bf16.msra.mxu0 %v2972
    %3045 = vmatprep.subr.bf16.mxu0 0
    %3046 = vmatpush1.bf16.msra.mxu0 %v2973
    %3047 = vmatprep.subr.bf16.mxu0 0
    %3048 = vmatpush1.bf16.msra.mxu0 %v2974
    %3049 = vmatprep.subr.bf16.mxu0 0
    %3050 = vmatpush1.bf16.msra.mxu0 %v2975
    %3051 = vmatprep.subr.bf16.mxu0 0
    %3052 = vmatpush1.bf16.msra.mxu0 %v2976
    %3053 = vmatprep.subr.bf16.mxu0 0
    %3054 = vmatpush1.bf16.msra.mxu0 %v2977
    %3055 = vmatprep.subr.bf16.mxu0 0
    %3056 = vmatpush1.bf16.msra.mxu0 %v2978
    %3057 = vmatprep.subr.bf16.mxu0 0
    %3058 = vmatpush1.bf16.msra.mxu0 %v2979
    %3059 = vmatprep.subr.bf16.mxu0 0
    %3060 = vmatpush1.bf16.msra.mxu0 %v2980
    %3061 = vmatprep.mubr.bf16.mxu0 %v2770
    %3062 = vmatmul.mubr.bf16.gmra.mrb[0].mxu0 %v2769
    %v3063 = vpop.f32.mrb[0].mxu0
    %v3064 = vadd.f32 0.0, %v3063
    %v3065 = vpop.f32.mrb[0].mxu0
    %v3066 = vpop.f32.mrb[0].mxu0
    %v3067 = vpop.f32.mrb[0].mxu0
    %3068 = vdwg.mxu0
    %3069 = vmatprep.subr.bf16.mxu0 0
    %3070 = vmatpush1.bf16.msra.mxu0 %v2981
    %3071 = vmatprep.subr.bf16.mxu0 0
    %3072 = vmatpush1.bf16.msra.mxu0 %v2982
    %3073 = vmatprep.subr.bf16.mxu0 0
    %3074 = vmatpush1.bf16.msra.mxu0 %v2983
    %3075 = vmatprep.subr.bf16.mxu0 0
    %3076 = vmatpush1.bf16.msra.mxu0 %v2984
    %3077 = vmatprep.subr.bf16.mxu0 0
    %3078 = vmatpush1.bf16.msra.mxu0 %v2985
    %3079 = vmatprep.subr.bf16.mxu0 0
    %3080 = vmatpush1.bf16.msra.mxu0 %v2986
    %3081 = vmatprep.subr.bf16.mxu0 0
    %3082 = vmatpush1.bf16.msra.mxu0 %v2987
    %3083 = vmatprep.subr.bf16.mxu0 0
    %3084 = vmatpush1.bf16.msra.mxu0 %v2988
    %3085 = vmatprep.subr.bf16.mxu0 0
    %3086 = vmatpush1.bf16.msra.mxu0 %v2989
    %3087 = vmatprep.subr.bf16.mxu0 0
    %3088 = vmatpush1.bf16.msra.mxu0 %v2990
    %3089 = vmatprep.subr.bf16.mxu0 0
    %3090 = vmatpush1.bf16.msra.mxu0 %v2991
    %3091 = vmatprep.subr.bf16.mxu0 0
    %3092 = vmatpush1.bf16.msra.mxu0 %v2992
    %3093 = vmatprep.subr.bf16.mxu0 0
    %3094 = vmatpush1.bf16.msra.mxu0 %v2993
    %3095 = vmatprep.subr.bf16.mxu0 0
    %3096 = vmatpush1.bf16.msra.mxu0 %v2994
    %3097 = vmatprep.subr.bf16.mxu0 0
    %3098 = vmatpush1.bf16.msra.mxu0 %v2995
    %3099 = vmatprep.subr.bf16.mxu0 0
    %3100 = vmatpush1.bf16.msra.mxu0 %v2996
    %3101 = vmatprep.mubr.bf16.mxu0 %v2772
    %3102 = vmatmul.mubr.bf16.gmra.mrb[0].mxu0 %v2771
    %v3103 = vpop.f32.mrb[0].mxu0
    %v3104 = vadd.f32 %v3064, %v3103
    %v3105 = vpop.f32.mrb[0].mxu0
    %v3106 = vpop.f32.mrb[0].mxu0
    %v3107 = vpop.f32.mrb[0].mxu0
    %3108 = vdwg.mxu0
    %v3173 = vunpack.c.l.b16 %v2705
    %v3174 = vunpack.c.l.b16 %v2706
    %v3175 = vunpack.c.l.b16 %v2707
    %v3176 = vunpack.c.l.b16 %v2708
    %v3177 = vunpack.c.l.b16 %v2709
    %v3178 = vunpack.c.l.b16 %v2710
    %v3179 = vunpack.c.l.b16 %v2711
    %v3180 = vunpack.c.l.b16 %v2712
    %v3181 = vunpack.c.l.b16 %v2713
    %v3182 = vunpack.c.l.b16 %v2714
    %v3183 = vunpack.c.l.b16 %v2715
    %v3184 = vunpack.c.l.b16 %v2716
    %v3185 = vunpack.c.l.b16 %v2717
    %v3186 = vunpack.c.l.b16 %v2718
    %v3187 = vunpack.c.l.b16 %v2719
    %v3188 = vunpack.c.l.b16 %v2720
    %v3189 = vunpack.c.l.b16 %v2721
    %v3190 = vunpack.c.l.b16 %v2722
    %v3191 = vunpack.c.l.b16 %v2723
    %v3192 = vunpack.c.l.b16 %v2724
    %v3193 = vunpack.c.l.b16 %v2725
    %v3194 = vunpack.c.l.b16 %v2726
    %v3195 = vunpack.c.l.b16 %v2727
    %v3196 = vunpack.c.l.b16 %v2728
    %v3197 = vunpack.c.l.b16 %v2729
    %v3198 = vunpack.c.l.b16 %v2730
    %v3199 = vunpack.c.l.b16 %v2731
    %v3200 = vunpack.c.l.b16 %v2732
    %v3201 = vunpack.c.l.b16 %v2733
    %v3202 = vunpack.c.l.b16 %v2734
    %v3203 = vunpack.c.l.b16 %v2735
    %v3204 = vunpack.c.l.b16 %v2736
    %v3205 = vunpack.c.l.b16 %v2737
    %v3206 = vunpack.c.l.b16 %v2738
    %v3207 = vunpack.c.l.b16 %v2739
    %v3208 = vunpack.c.l.b16 %v2740
    %v3209 = vunpack.c.l.b16 %v2741
    %v3210 = vunpack.c.l.b16 %v2742
    %v3211 = vunpack.c.l.b16 %v2743
    %v3212 = vunpack.c.l.b16 %v2744
    %v3213 = vunpack.c.l.b16 %v2745
    %v3214 = vunpack.c.l.b16 %v2746
    %v3215 = vunpack.c.l.b16 %v2747
    %v3216 = vunpack.c.l.b16 %v2748
    %v3217 = vunpack.c.l.b16 %v2749
    %v3218 = vunpack.c.l.b16 %v2750
    %v3219 = vunpack.c.l.b16 %v2751
    %v3220 = vunpack.c.l.b16 %v2752
    %v3221 = vunpack.c.l.b16 %v2753
    %v3222 = vunpack.c.l.b16 %v2754
    %v3223 = vunpack.c.l.b16 %v2755
    %v3224 = vunpack.c.l.b16 %v2756
    %v3225 = vunpack.c.l.b16 %v2757
    %v3226 = vunpack.c.l.b16 %v2758
    %v3227 = vunpack.c.l.b16 %v2759
    %v3228 = vunpack.c.l.b16 %v2760
    %v3229 = vunpack.c.l.b16 %v2761
    %v3230 = vunpack.c.l.b16 %v2762
    %v3231 = vunpack.c.l.b16 %v2763
    %v3232 = vunpack.c.l.b16 %v2764
    %v3233 = vunpack.c.l.b16 %v2765
    %v3234 = vunpack.c.l.b16 %v2766
    %v3235 = vunpack.c.l.b16 %v2767
    %v3236 = vunpack.c.l.b16 %v2768
    %v3237 = vpack.c.b16 %v3174, %v3173
    %v3238 = vpack.c.b16 %v3176, %v3175
    %v3239 = vpack.c.b16 %v3178, %v3177
    %v3240 = vpack.c.b16 %v3180, %v3179
    %v3241 = vpack.c.b16 %v3182, %v3181
    %v3242 = vpack.c.b16 %v3184, %v3183
    %v3243 = vpack.c.b16 %v3186, %v3185
    %v3244 = vpack.c.b16 %v3188, %v3187
    %v3245 = vpack.c.b16 %v3190, %v3189
    %v3246 = vpack.c.b16 %v3192, %v3191
    %v3247 = vpack.c.b16 %v3194, %v3193
    %v3248 = vpack.c.b16 %v3196, %v3195
    %v3249 = vpack.c.b16 %v3198, %v3197
    %v3250 = vpack.c.b16 %v3200, %v3199
    %v3251 = vpack.c.b16 %v3202, %v3201
    %v3252 = vpack.c.b16 %v3204, %v3203
    %v3253 = vpack.c.b16 %v3206, %v3205
    %v3254 = vpack.c.b16 %v3208, %v3207
    %v3255 = vpack.c.b16 %v3210, %v3209
    %v3256 = vpack.c.b16 %v3212, %v3211
    %v3257 = vpack.c.b16 %v3214, %v3213
    %v3258 = vpack.c.b16 %v3216, %v3215
    %v3259 = vpack.c.b16 %v3218, %v3217
    %v3260 = vpack.c.b16 %v3220, %v3219
    %v3261 = vpack.c.b16 %v3222, %v3221
    %v3262 = vpack.c.b16 %v3224, %v3223
    %v3263 = vpack.c.b16 %v3226, %v3225
    %v3264 = vpack.c.b16 %v3228, %v3227
    %v3265 = vpack.c.b16 %v3230, %v3229
    %v3266 = vpack.c.b16 %v3232, %v3231
    %v3267 = vpack.c.b16 %v3234, %v3233
    %v3268 = vpack.c.b16 %v3236, %v3235
    %3301 = vmatprep.subr.bf16.mxu0 0
    %3302 = vmatpush1.bf16.msra.mxu0 %v3237
    %3303 = vmatprep.subr.bf16.mxu0 0
    %3304 = vmatpush1.bf16.msra.mxu0 %v3238
    %3305 = vmatprep.subr.bf16.mxu0 0
    %3306 = vmatpush1.bf16.msra.mxu0 %v3239
    %3307 = vmatprep.subr.bf16.mxu0 0
    %3308 = vmatpush1.bf16.msra.mxu0 %v3240
    %3309 = vmatprep.subr.bf16.mxu0 0
    %3310 = vmatpush1.bf16.msra.mxu0 %v3241
    %3311 = vmatprep.subr.bf16.mxu0 0
    %3312 = vmatpush1.bf16.msra.mxu0 %v3242
    %3313 = vmatprep.subr.bf16.mxu0 0
    %3314 = vmatpush1.bf16.msra.mxu0 %v3243
    %3315 = vmatprep.subr.bf16.mxu0 0
    %3316 = vmatpush1.bf16.msra.mxu0 %v3244
    %3317 = vmatprep.subr.bf16.mxu0 0
    %3318 = vmatpush1.bf16.msra.mxu0 %v3245
    %3319 = vmatprep.subr.bf16.mxu0 0
    %3320 = vmatpush1.bf16.msra.mxu0 %v3246
    %3321 = vmatprep.subr.bf16.mxu0 0
    %3322 = vmatpush1.bf16.msra.mxu0 %v3247
    %3323 = vmatprep.subr.bf16.mxu0 0
    %3324 = vmatpush1.bf16.msra.mxu0 %v3248
    %3325 = vmatprep.subr.bf16.mxu0 0
    %3326 = vmatpush1.bf16.msra.mxu0 %v3249
    %3327 = vmatprep.subr.bf16.mxu0 0
    %3328 = vmatpush1.bf16.msra.mxu0 %v3250
    %3329 = vmatprep.subr.bf16.mxu0 0
    %3330 = vmatpush1.bf16.msra.mxu0 %v3251
    %3331 = vmatprep.subr.bf16.mxu0 0
    %3332 = vmatpush1.bf16.msra.mxu0 %v3252
    %3333 = vmatprep.mubr.bf16.mxu0 %v2702
    %3334 = vmatmul.mubr.bf16.gmra.mrb[0].mxu0 %v2701
    %v3335 = vpop.f32.mrb[0].mxu0
    %v3336 = vadd.f32 %v3104, %v3335
    %v3337 = vpop.f32.mrb[0].mxu0
    %v3338 = vpop.f32.mrb[0].mxu0
    %v3339 = vpop.f32.mrb[0].mxu0
    %3340 = vdwg.mxu0
    %3341 = vmatprep.subr.bf16.mxu0 0
    %3342 = vmatpush1.bf16.msra.mxu0 %v3253
    %3343 = vmatprep.subr.bf16.mxu0 0
    %3344 = vmatpush1.bf16.msra.mxu0 %v3254
    %3345 = vmatprep.subr.bf16.mxu0 0
    %3346 = vmatpush1.bf16.msra.mxu0 %v3255
    %3347 = vmatprep.subr.bf16.mxu0 0
    %3348 = vmatpush1.bf16.msra.mxu0 %v3256
    %3349 = vmatprep.subr.bf16.mxu0 0
    %3350 = vmatpush1.bf16.msra.mxu0 %v3257
    %3351 = vmatprep.subr.bf16.mxu0 0
    %3352 = vmatpush1.bf16.msra.mxu0 %v3258
    %3353 = vmatprep.subr.bf16.mxu0 0
    %3354 = vmatpush1.bf16.msra.mxu0 %v3259
    %3355 = vmatprep.subr.bf16.mxu0 0
    %3356 = vmatpush1.bf16.msra.mxu0 %v3260
    %3357 = vmatprep.subr.bf16.mxu0 0
    %3358 = vmatpush1.bf16.msra.mxu0 %v3261
    %3359 = vmatprep.subr.bf16.mxu0 0
    %3360 = vmatpush1.bf16.msra.mxu0 %v3262
    %3361 = vmatprep.subr.bf16.mxu0 0
    %3362 = vmatpush1.bf16.msra.mxu0 %v3263
    %3363 = vmatprep.subr.bf16.mxu0 0
    %3364 = vmatpush1.bf16.msra.mxu0 %v3264
    %3365 = vmatprep.subr.bf16.mxu0 0
    %3366 = vmatpush1.bf16.msra.mxu0 %v3265
    %3367 = vmatprep.subr.bf16.mxu0 0
    %3368 = vmatpush1.bf16.msra.mxu0 %v3266
    %3369 = vmatprep.subr.bf16.mxu0 0
    %3370 = vmatpush1.bf16.msra.mxu0 %v3267
    %3371 = vmatprep.subr.bf16.mxu0 0
    %3372 = vmatpush1.bf16.msra.mxu0 %v3268
    %3373 = vmatprep.mubr.bf16.mxu0 %v2704
    %3374 = vmatmul.mubr.bf16.gmra.mrb[0].mxu0 %v2703
    %v3375 = vpop.f32.mrb[0].mxu0
    %v3376 = vadd.f32 %v3336, %v3375
    %v3377 = vpop.f32.mrb[0].mxu0
    %v3378 = vpop.f32.mrb[0].mxu0
    %v3379 = vpop.f32.mrb[0].mxu0
    %3380 = vdwg.mxu0
    %v3381 = vld [vmem:[#allocation17] sm:$0x1]
    %v3383 = vlaneseq
    %v3384 = vshrl.u32 %v3383, 7
    %v3385 = vsub.s32 0, %v3384
    %v3386 = vrot.slane %v3381, %v3385
    %v3388 = vadd.f32 %v3376, %v3386
    %v3389 = vmax.f32 %v3388, 0.0
    %v3390 = vld [vmem:[#allocation19] sm:$0x1]
    %v3392 = vlaneseq
    %v3393 = vshrl.u32 %v3392, 7
    %v3394 = vsub.s32 0, %v3393
    %v3395 = vrot.slane %v3390, %v3394
    %v3397 = vmul.f32 %v3389, %v3395
    %vm3398 = vcmask 523264
    %v3399 = vsel %vm3398, %v3397, 0.0
    %3400 = vadd.xlane.f32.xlu0 %v3399
    %v3401 = vpop.xlane.xlu0 %3400
    %s3402 = sld [smem:[#allocation4]]
    %v3403 = vstv %s3402
    %v3404 = vadd.f32 %v3401, %v3403
    %v3405 = vxor.u32 %v3404, 2147483648
    %v3406 = vmul.f32 %v3405, 1.442695
    %v3407 = vpow.pop %v3406
    %v3408 = vadd.f32 %v3407, 1.0
    %v3409 = vrcp.pop %v3408
    %v3410 = vmul.f32 1.0, %v3409
    %vm3411 = vcmask 7168
    %3412 = vst.msk [vmem:[%s13] sm:$0xff] %vm3411, %v3410
    // Predicated region
    $region86: #{soundlenet5_forward_mode7.1} parent=1 // pred_check
      _
    $region87: #{soundlenet5_forward_mode7.1} parent=1 // pred_check_branch
      %3414 = sbr.rel (0) target = $region89
    $region88: #{soundlenet5_forward_mode7.1} parent=1 // pred_region
      _
    $region89: #{soundlenet5_forward_mode7.1} parent=1 // pred_fallthru
      _
    // Predicated region
    $region90: #{soundlenet5_forward_mode7.1} parent=1 // pred_check
      _
    $region91: #{soundlenet5_forward_mode7.1} parent=1 // pred_check_branch
      %3416 = sbr.rel (0) target = $region93
    $region92: #{soundlenet5_forward_mode7.1} parent=1 // pred_region
      _
    $region93: #{soundlenet5_forward_mode7.1} parent=1 // pred_fallthru
      _
    // Predicated region
    $region94: #{soundlenet5_forward_mode7.1} parent=1 // pred_check
      _
    $region95: #{soundlenet5_forward_mode7.1} parent=1 // pred_check_branch
      %3418 = sbr.rel (0) target = $region97
    $region96: #{soundlenet5_forward_mode7.1} parent=1 // pred_region
      %s3420 = ssub.s32 512, 512
      %3421 = vsyncadd [#allocation7], %s3420
      %s3423 = sshll.u32 [#allocation20], 4
      %s3424 = int_to_ptr.vmem [resolvable:$true] %s3423
      %3426 = dma.vmem_to_hbm [thread:$0]  %s3424, 512, %s15, [#allocation7]
    $region97: #{soundlenet5_forward_mode7.1} parent=1 // pred_fallthru
      _
    // Predicated region
    $region98: #{soundlenet5_forward_mode7.1} parent=1 // pred_check
      _
    $region99: #{soundlenet5_forward_mode7.1} parent=1 // pred_check_branch
      %3428 = sbr.rel (0) target = $region101
    $region100: #{soundlenet5_forward_mode7.1} parent=1 // pred_region
      _
    $region101: #{soundlenet5_forward_mode7.1} parent=1 // pred_fallthru
      _
    // Predicated region
    $region102: #{soundlenet5_forward_mode7.1} parent=1 // pred_check
      _
    $region103: #{soundlenet5_forward_mode7.1} parent=1 // pred_check_branch
      %3430 = sbr.rel (0) target = $region105
    $region104: #{soundlenet5_forward_mode7.1} parent=1 // pred_region
      _
    $region105: #{soundlenet5_forward_mode7.1} parent=1 // pred_fallthru
      _
    // Predicated region
    $region106: #{soundlenet5_forward_mode7.1} parent=1 // pred_check
      _
    $region107: #{soundlenet5_forward_mode7.1} parent=1 // pred_check_branch
      %3432 = sbr.rel (0) target = $region109
    $region108: #{soundlenet5_forward_mode7.1} parent=1 // pred_region
      %3433 = dma.done [#allocation7], 512
    $region109: #{soundlenet5_forward_mode7.1} parent=1 // pred_fallthru
      _
    %3434 = vsyncpa [#allocation6], 1
    %3435 = vsyncpa [#allocation9], 1
    %3436 = vsyncpa [#allocation12], 1
    %3437 = vsyncpa [#allocation15], 1
    %3438 = vsyncpa [#allocation18], 1
    %3439 = vsyncpa [#allocation7], 1
  %3440 = vsyncmov [#allocation3]
  %s3441 = vpop.sfrf %3440
  %p3442 = scmp.eq.s32.totalorder %s3441, 0
  %p3443 = pneg %p3442
  %3445 = shalt.err (%p3443)

</llo_original>
